<compile_context>
chip_gen: v7x
topology: tpu7x:2x2x1
jax: 0.10.0
libtpu: 0.0.40
codegen_flags: <defaults>
</compile_context>

<pallas_src>
import functools

import numpy as np
import jax
import jax.numpy as jnp
from jax.experimental import pallas as pl
from jax.experimental.pallas import tpu as pltpu

NEG_INF = np.float32(-1e30)


# ----------------------------------------------------------------------------
# Pallas kernels
# ----------------------------------------------------------------------------
def _matmul_kernel(a_ref, b_ref, o_ref):
    o_ref[...] = jnp.dot(a_ref[...], b_ref[...],
                         preferred_element_type=jnp.float32)


def pallas_matmul(a, b):
    """(M, K) @ (K, N) -> (M, N); small shapes, whole arrays in VMEM."""
    M, _ = a.shape
    _, N = b.shape
    return pl.pallas_call(
        _matmul_kernel,
        out_shape=jax.ShapeDtypeStruct((M, N), jnp.float32),
    )(a, b)


def _gat_heads(x, att_src_mat, att_dst_mat, bias, heads):
    """Fused multi-head GAT attention on node-major (S, H*C) features.

    x           : (S, HC)  projected features (x_src == x_dst)
    att_src_mat : (H, HC)  block-diagonal att_l (source term)
    att_dst_mat : (HC, H)  block-diagonal att_r (destination term)
    bias        : (S, S)   additive mask: 0 on edges (row=dst, col=src), -1e30 off

    Returns the per-head (S, C) aggregation results (static list, H entries).
    """
    S, HC = x.shape
    C = HC // heads
    # Both logit terms via MXU matmuls -- column layout for the destination
    # term, row layout for the source term -- so no in-kernel transposes and
    # no XLU cross-lane reductions are needed.
    a_dst = jnp.dot(x, att_dst_mat, preferred_element_type=jnp.float32)   # (S, H)
    a_src_t = jax.lax.dot_general(att_src_mat, x, (((1,), (1,)), ((), ())),
                                  preferred_element_type=jnp.float32)     # (H, S)
    outs = []
    for h in range(heads):                       # static unroll: all heads, one launch
        logit = a_dst[:, h:h + 1] + a_src_t[h:h + 1, :]       # (S_dst, S_src)
        logit = jnp.maximum(logit, 0.2 * logit)               # LeakyReLU(0.2)
        logit = logit + bias                                  # additive edge mask
        m = jnp.max(logit, axis=1, keepdims=True)
        p = jnp.exp(logit - m)
        denom = jnp.sum(p, axis=1, keepdims=True)
        probs = p * pl.reciprocal(denom, approx=True)         # divide on the EUP
        outs.append(jnp.dot(probs, x[:, h * C:(h + 1) * C],
                            preferred_element_type=jnp.float32))          # (S, C)
    return outs
    # Note: destination rows with no edges get uniform (finite) attention; those
    # rows are always discarded by the subsequent target-row gather / [:N] slice,
    # so the final output matches the reference semantics.


def _word_gat_kernel(x_ref, w_ref, asrc_ref, adst_ref, bias_ref, bvec_ref,
                     o_ref, *, heads):
    """One relation: fused lin_l projection + multi-head GAT attention."""
    x = jnp.dot(x_ref[0], w_ref[0], preferred_element_type=jnp.float32)   # (S, HC)
    outs = _gat_heads(x, asrc_ref[0], adst_ref[0], bias_ref[0], heads)
    HC = x.shape[1]
    C = HC // heads
    bvec = bvec_ref[0]                                                    # (1, HC)
    for h in range(heads):
        o_ref[0, :, h * C:(h + 1) * C] = outs[h] + bvec[:, h * C:(h + 1) * C]


def _lang_gat_kernel(x_ref, asrc_ref, adst_ref, bias_ref, bvec_ref, o_ref,
                     *, heads):
    """Language-level GATConv (lin_l == Bypass): attention only."""
    x = x_ref[...]                                                        # (M, HC)
    outs = _gat_heads(x, asrc_ref[...], adst_ref[...], bias_ref[...], heads)
    HC = x.shape[1]
    C = HC // heads
    bvec = bvec_ref[...]                                                  # (1, HC)
    for h in range(heads):
        o_ref[:, h * C:(h + 1) * C] = outs[h] + bvec[:, h * C:(h + 1) * C]


def pallas_word_gat(x_sub, w_stack, asrc_stack, adst_stack, bias_stack,
                    bvec_stack, heads):
    """All relations in one call: grid=(R,), padded to a common S_max."""
    R, S, in_dim = x_sub.shape
    HC = w_stack.shape[-1]
    return pl.pallas_call(
        functools.partial(_word_gat_kernel, heads=heads),
        grid=(R,),
        in_specs=[
            pl.BlockSpec((1, S, in_dim), lambda r: (r, 0, 0)),
            pl.BlockSpec((1, in_dim, HC), lambda r: (r, 0, 0)),
            pl.BlockSpec((1, heads, HC), lambda r: (r, 0, 0)),
            pl.BlockSpec((1, HC, heads), lambda r: (r, 0, 0)),
            pl.BlockSpec((1, S, S), lambda r: (r, 0, 0)),
            pl.BlockSpec((1, 1, HC), lambda r: (r, 0, 0)),
        ],
        out_specs=pl.BlockSpec((1, S, HC), lambda r: (r, 0, 0)),
        out_shape=jax.ShapeDtypeStruct((R, S, HC), jnp.float32),
        compiler_params=pltpu.CompilerParams(
            dimension_semantics=("parallel",)),   # v7x: split relations over 2 TCs
    )(x_sub, w_stack, asrc_stack, adst_stack, bias_stack, bvec_stack)


def pallas_gat(x, asrc, adst, bias, bvec, heads):
    """Single GATConv (used for lang_conv); whole arrays in VMEM."""
    M, HC = x.shape
    return pl.pallas_call(
        functools.partial(_lang_gat_kernel, heads=heads),
        out_shape=jax.ShapeDtypeStruct((M, HC), jnp.float32),
    )(x, asrc, adst, bias, bvec)


# ----------------------------------------------------------------------------
# Parameter helpers
# ----------------------------------------------------------------------------
def att_block_mats(att_src, att_dst):
    """(H,1,C) att params -> block-diagonal (H,HC) source / (HC,H) dest matrices."""
    H, _, C = att_src.shape
    HC = H * C
    eye = jnp.eye(H, dtype=jnp.float32)
    src_mat = (eye[:, :, None] * att_src[None, :, 0, :]).reshape(H, HC)       # (H, HC)
    dst_mat = (eye[:, :, None] * att_dst[None, :, 0, :]).reshape(H, HC).T     # (HC, H)
    return src_mat, dst_mat


def init_params(key, in_dim, out_dim, num_relations, heads):
    C = out_dim // heads
    keys = jax.random.split(key, 5 + 4 * num_relations)

    def nrm(k, shape, scale=0.1):
        return jax.random.normal(k, shape, jnp.float32) * scale

    params = {
        'lin_self_w': nrm(keys[0], (in_dim, out_dim)),     # lin_self (no bias)
        'lin_cross_w': nrm(keys[1], (out_dim, out_dim)),   # lin_cross (no bias)
        'lang_att_src': nrm(keys[2], (heads, 1, C)),       # lang_conv.att_l
        'lang_att_dst': nrm(keys[3], (heads, 1, C)),       # lang_conv.att_r
        'lang_bias': nrm(keys[4], (out_dim,)),             # lang_conv.bias
        'word': [],
    }
    k = 5
    for _ in range(num_relations):
        params['word'].append({
            'lin_w': nrm(keys[k], (in_dim, out_dim)),      # GATConv.lin_l (no bias)
            'att_src': nrm(keys[k + 1], (heads, 1, C)),    # GATConv.att_l
            'att_dst': nrm(keys[k + 2], (heads, 1, C)),    # GATConv.att_r
            'bias': nrm(keys[k + 3], (out_dim,)),          # GATConv.bias
        })
        k += 4
    return params


# ----------------------------------------------------------------------------
# Single-dispatch device path (all Pallas calls under one jit)
# ----------------------------------------------------------------------------
@functools.partial(jax.jit, static_argnames=("heads",))
def _device_forward_rel(node_inp, lin_self_w, lin_cross_w,
                        subset_pad, w_stack, asrc_stack, adst_stack,
                        bias_stack, bvec_stack, gather_idx,
                        lang_asrc, lang_adst, lang_bvec, lang_bias, *, heads):
    n = node_inp.shape[0]
    self_out = pallas_matmul(node_inp, lin_self_w)                       # (N, HC)
    x_sub = jnp.take(node_inp, subset_pad, axis=0)                       # (R, S_max, in)
    gat_out = pallas_word_gat(x_sub, w_stack, asrc_stack, adst_stack,
                              bias_stack, bvec_stack, heads)             # (R, S_max, HC)
    R, S_max, HC = gat_out.shape
    gathered = jnp.take(gat_out.reshape(R * S_max, HC), gather_idx, axis=0)
    act = jax.nn.gelu(gathered, approximate=False)                       # exact GELU
    crossed = pallas_matmul(act, lin_cross_w)                            # (T, HC)
    rel_inputs = jnp.concatenate([self_out, crossed], axis=0)            # (M, HC)
    out = pallas_gat(rel_inputs, lang_asrc, lang_adst, lang_bias,
                     lang_bvec, heads)
    return out[:n]


@functools.partial(jax.jit, static_argnames=("heads",))
def _device_forward_norel(node_inp, lin_self_w, lang_asrc, lang_adst,
                          lang_bvec, lang_bias, *, heads):
    n = node_inp.shape[0]
    self_out = pallas_matmul(node_inp, lin_self_w)
    out = pallas_gat(self_out, lang_asrc, lang_adst, lang_bias,
                     lang_bvec, heads)
    return out[:n]


# ----------------------------------------------------------------------------
# HGNNConv forward
# ----------------------------------------------------------------------------
def hgnn_conv_forward(params, node_inp, edge_index, edge_type,
                      num_relations, heads):
    N, _ = node_inp.shape
    node_inp = jnp.asarray(node_inp, jnp.float32)
    ei = np.asarray(edge_index)
    et = np.asarray(edge_type).reshape(-1)

    # ---- host-side graph bookkeeping (pure numpy, before any device work) ----
    rel_entries = []
    for rel in range(num_relations):
        sub_ei = ei[:, et == rel]
        if sub_ei.shape[1] == 0:
            continue
        target_nodes = np.unique(sub_ei[1, :])
        # k_hop_subgraph(target_nodes, 1, sub_ei, relabel_nodes=True):
        # subset = targets + 1-hop sources = all nodes touching these edges.
        subset = np.unique(np.concatenate([target_nodes, sub_ei.reshape(-1)]))
        mapping = np.searchsorted(subset, target_nodes)
        relabeled = np.searchsorted(subset, sub_ei)
        rel_entries.append((rel, subset, mapping, relabeled, target_nodes))

    rel_tgt_list = [np.arange(N, dtype=np.int64)]
    lang_asrc, lang_adst = att_block_mats(params['lang_att_src'],
                                          params['lang_att_dst'])
    lang_bvec = params['lang_bias'][None, :]

    if rel_entries:
        R = len(rel_entries)
        S_max = max(int(e[1].shape[0]) for e in rel_entries)
        subset_pad = np.zeros((R, S_max), np.int32)
        bias_pad = np.full((R, S_max, S_max), NEG_INF, np.float32)
        gather_rows = []
        w_l, as_l, ad_l, bv_l = [], [], [], []
        for ra, (rel, subset, mapping, relabeled, tgt) in enumerate(rel_entries):
            s = int(subset.shape[0])
            subset_pad[ra, :s] = subset
            # NOTE: duplicate edges collapse to one mask entry (dense mask).
            bias_pad[ra, relabeled[1], relabeled[0]] = 0.0    # row = dst, col = src
            gather_rows.append(ra * S_max + mapping)
            wp = params['word'][rel]
            w_l.append(wp['lin_w'])
            a_s, a_d = att_block_mats(wp['att_src'], wp['att_dst'])
            as_l.append(a_s)
            ad_l.append(a_d)
            bv_l.append(wp['bias'][None, :])
            rel_tgt_list.append(tgt)
        gather_idx = np.concatenate(gather_rows).astype(np.int32)

        rel_tgt = np.concatenate(rel_tgt_list)
        M = int(rel_tgt.shape[0])
        lang_bias = np.full((M, M), NEG_INF, np.float32)
        lang_bias[rel_tgt, np.arange(M)] = 0.0                # row = dst, col = src

        return _device_forward_rel(
            node_inp, params['lin_self_w'], params['lin_cross_w'],
            jnp.asarray(subset_pad), jnp.stack(w_l), jnp.stack(as_l),
            jnp.stack(ad_l), jnp.asarray(bias_pad), jnp.stack(bv_l),
            jnp.asarray(gather_idx), lang_asrc, lang_adst, lang_bvec,
            jnp.asarray(lang_bias), heads=heads)

    rel_tgt = np.concatenate(rel_tgt_list)
    M = int(rel_tgt.shape[0])
    lang_bias = np.full((M, M), NEG_INF, np.float32)
    lang_bias[rel_tgt, np.arange(M)] = 0.0
    return _device_forward_norel(node_inp, params['lin_self_w'],
                                 lang_asrc, lang_adst, lang_bvec,
                                 jnp.asarray(lang_bias), heads=heads)


# ----------------------------------------------------------------------------
# main
# ----------------------------------------------------------------------------
if __name__ == "__main__":
    N, in_dim, out_dim = 12, 32, 32
    heads, num_relations = 8, 3
    edges_per_rel = 8

    key = jax.random.PRNGKey(0)
    k_x, k_p, k_e = jax.random.split(key, 3)

    node_inp = jax.random.normal(k_x, (N, in_dim), jnp.float32)
    params = init_params(k_p, in_dim, out_dim, num_relations, heads)

    # deterministic synthetic graph: unique (src, dst) pairs per relation
    edges, types = [], []
    ekeys = jax.random.split(k_e, num_relations)
    for r in range(num_relations):
        pair_ids = np.asarray(
            jax.random.choice(ekeys[r], N * N, (edges_per_rel,), replace=False))
        edges.append(np.stack([pair_ids // N, pair_ids % N]))
        types.append(np.full(edges_per_rel, r, dtype=np.int64))
    edge_index = np.concatenate(edges, axis=1).astype(np.int64)   # (2, 24)
    edge_type = np.concatenate(types)                             # (24,)

    out = hgnn_conv_forward(params, node_inp, edge_index, edge_type,
                            num_relations, heads)
    out = jax.block_until_ready(out)

    assert out.shape == (N, out_dim), out.shape
    assert np.isfinite(np.asarray(out)).all()
    print("KERNEL_OK")
</pallas_src>

<mosaic_0001>
module attributes {stable_mosaic.version = 11 : i64} {
  func.func @_word_gat_kernel(%arg0: i32, %arg1: memref<1x11x32xf32, #tpu.memory_space<vmem>>, %arg2: memref<1x32x32xf32, #tpu.memory_space<vmem>>, %arg3: memref<1x8x32xf32, #tpu.memory_space<vmem>>, %arg4: memref<1x32x8xf32, #tpu.memory_space<vmem>>, %arg5: memref<1x11x11xf32, #tpu.memory_space<vmem>>, %arg6: memref<1x1x32xf32, #tpu.memory_space<vmem>>, %arg7: memref<1x11x32xf32, #tpu.memory_space<vmem>>) attributes {dimension_semantics = [#tpu.dimension_semantics<parallel>], iteration_bounds = array<i64: 3>, scalar_prefetch = 0 : i64, scratch_operands = 0 : i64, tpu.core_type = #tpu.core_type<tc>, window_params = [{transform_indices = @transform_0, window_bounds = array<i64: 1, 11, 32>}, {transform_indices = @transform_1, window_bounds = array<i64: 1, 32, 32>}, {transform_indices = @transform_2, window_bounds = array<i64: 1, 8, 32>}, {transform_indices = @transform_3, window_bounds = array<i64: 1, 32, 8>}, {transform_indices = @transform_4, window_bounds = array<i64: 1, 11, 11>}, {transform_indices = @transform_5, window_bounds = array<i64: 1, 1, 32>}, {transform_indices = @transform_6, window_bounds = array<i64: 1, 11, 32>}]} {
    %c0 = arith.constant 0 : index
    %c0_0 = arith.constant 0 : index
    %c0_1 = arith.constant 0 : index
    %0 = vector.load %arg1[%c0, %c0_0, %c0_1] : memref<1x11x32xf32, #tpu.memory_space<vmem>>, vector<1x11x32xf32>
    %1 = vector.shape_cast %0 : vector<1x11x32xf32> to vector<11x32xf32>
    %c0_2 = arith.constant 0 : index
    %c0_3 = arith.constant 0 : index
    %c0_4 = arith.constant 0 : index
    %2 = vector.load %arg2[%c0_2, %c0_3, %c0_4] : memref<1x32x32xf32, #tpu.memory_space<vmem>>, vector<1x32x32xf32>
    %3 = vector.shape_cast %2 : vector<1x32x32xf32> to vector<32x32xf32>
    %cst = arith.constant dense<0.000000e+00> : vector<11x32xf32>
    %4 = tpu.matmul %1, %3, %cst {dimension_numbers = #tpu.dot_dimension_numbers<[1], [0], [0], [1], [0, 0, 1, 1], [], []>} : vector<11x32xf32>, vector<32x32xf32>, vector<11x32xf32> -> vector<11x32xf32>
    %c0_5 = arith.constant 0 : index
    %c0_6 = arith.constant 0 : index
    %c0_7 = arith.constant 0 : index
    %5 = vector.load %arg3[%c0_5, %c0_6, %c0_7] : memref<1x8x32xf32, #tpu.memory_space<vmem>>, vector<1x8x32xf32>
    %6 = vector.shape_cast %5 : vector<1x8x32xf32> to vector<8x32xf32>
    %c0_8 = arith.constant 0 : index
    %c0_9 = arith.constant 0 : index
    %c0_10 = arith.constant 0 : index
    %7 = vector.load %arg4[%c0_8, %c0_9, %c0_10] : memref<1x32x8xf32, #tpu.memory_space<vmem>>, vector<1x32x8xf32>
    %8 = vector.shape_cast %7 : vector<1x32x8xf32> to vector<32x8xf32>
    %c0_11 = arith.constant 0 : index
    %c0_12 = arith.constant 0 : index
    %c0_13 = arith.constant 0 : index
    %9 = vector.load %arg5[%c0_11, %c0_12, %c0_13] : memref<1x11x11xf32, #tpu.memory_space<vmem>>, vector<1x11x11xf32>
    %10 = vector.shape_cast %9 : vector<1x11x11xf32> to vector<11x11xf32>
    %cst_14 = arith.constant dense<0.000000e+00> : vector<11x8xf32>
    %11 = tpu.matmul %4, %8, %cst_14 {dimension_numbers = #tpu.dot_dimension_numbers<[1], [0], [0], [1], [0, 0, 1, 1], [], []>} : vector<11x32xf32>, vector<32x8xf32>, vector<11x8xf32> -> vector<11x8xf32>
    %cst_15 = arith.constant dense<0.000000e+00> : vector<8x11xf32>
    %12 = tpu.matmul %6, %4, %cst_15 {dimension_numbers = #tpu.dot_dimension_numbers<[1], [1], [0], [0], [0, 0, 1, 0], [], []>} : vector<8x32xf32>, vector<11x32xf32>, vector<8x11xf32> -> vector<8x11xf32>
    %13 = vector.extract_strided_slice %11 {offsets = [0, 0], sizes = [11, 1], strides = [1, 1]} : vector<11x8xf32> to vector<11x1xf32>
    %14 = vector.extract_strided_slice %12 {offsets = [0, 0], sizes = [1, 11], strides = [1, 1]} : vector<8x11xf32> to vector<1x11xf32>
    %15 = vector.broadcast %13 : vector<11x1xf32> to vector<11x11xf32>
    %16 = vector.broadcast %14 : vector<1x11xf32> to vector<11x11xf32>
    %17 = arith.addf %15, %16 : vector<11x11xf32>
    %cst_16 = arith.constant 2.000000e-01 : f32
    %18 = vector.broadcast %cst_16 : f32 to vector<11x11xf32>
    %19 = arith.mulf %18, %17 : vector<11x11xf32>
    %20 = arith.maximumf %17, %19 : vector<11x11xf32>
    %21 = arith.addf %20, %10 : vector<11x11xf32>
    %cst_17 = arith.constant dense<0xFF800000> : vector<11xf32>
    %22 = vector.multi_reduction <maximumf>, %21, %cst_17 [1] : vector<11x11xf32> to vector<11xf32>
    %23 = vector.shape_cast %22 : vector<11xf32> to vector<11x1xf32>
    %24 = vector.broadcast %23 : vector<11x1xf32> to vector<11x11xf32>
    %25 = arith.subf %21, %24 : vector<11x11xf32>
    %26 = math.exp %25 : vector<11x11xf32>
    %cst_18 = arith.constant dense<0.000000e+00> : vector<11xf32>
    %27 = vector.multi_reduction <add>, %26, %cst_18 [1] : vector<11x11xf32> to vector<11xf32>
    %28 = vector.shape_cast %27 : vector<11xf32> to vector<11x1xf32>
    %29 = tpu.reciprocal %28 {approx = true} : vector<11x1xf32> -> vector<11x1xf32>
    %30 = vector.broadcast %29 : vector<11x1xf32> to vector<11x11xf32>
    %31 = arith.mulf %26, %30 : vector<11x11xf32>
    %32 = vector.extract_strided_slice %4 {offsets = [0, 0], sizes = [11, 4], strides = [1, 1]} : vector<11x32xf32> to vector<11x4xf32>
    %cst_19 = arith.constant dense<0.000000e+00> : vector<11x4xf32>
    %33 = tpu.matmul %31, %32, %cst_19 {dimension_numbers = #tpu.dot_dimension_numbers<[1], [0], [0], [1], [0, 0, 1, 1], [], []>} : vector<11x11xf32>, vector<11x4xf32>, vector<11x4xf32> -> vector<11x4xf32>
    %34 = vector.extract_strided_slice %11 {offsets = [0, 1], sizes = [11, 1], strides = [1, 1]} : vector<11x8xf32> to vector<11x1xf32>
    %35 = vector.extract_strided_slice %12 {offsets = [1, 0], sizes = [1, 11], strides = [1, 1]} : vector<8x11xf32> to vector<1x11xf32>
    %36 = vector.broadcast %34 : vector<11x1xf32> to vector<11x11xf32>
    %37 = vector.broadcast %35 : vector<1x11xf32> to vector<11x11xf32>
    %38 = arith.addf %36, %37 : vector<11x11xf32>
    %cst_20 = arith.constant 2.000000e-01 : f32
    %39 = vector.broadcast %cst_20 : f32 to vector<11x11xf32>
    %40 = arith.mulf %39, %38 : vector<11x11xf32>
    %41 = arith.maximumf %38, %40 : vector<11x11xf32>
    %42 = arith.addf %41, %10 : vector<11x11xf32>
    %cst_21 = arith.constant dense<0xFF800000> : vector<11xf32>
    %43 = vector.multi_reduction <maximumf>, %42, %cst_21 [1] : vector<11x11xf32> to vector<11xf32>
    %44 = vector.shape_cast %43 : vector<11xf32> to vector<11x1xf32>
    %45 = vector.broadcast %44 : vector<11x1xf32> to vector<11x11xf32>
    %46 = arith.subf %42, %45 : vector<11x11xf32>
    %47 = math.exp %46 : vector<11x11xf32>
    %cst_22 = arith.constant dense<0.000000e+00> : vector<11xf32>
    %48 = vector.multi_reduction <add>, %47, %cst_22 [1] : vector<11x11xf32> to vector<11xf32>
    %49 = vector.shape_cast %48 : vector<11xf32> to vector<11x1xf32>
    %50 = tpu.reciprocal %49 {approx = true} : vector<11x1xf32> -> vector<11x1xf32>
    %51 = vector.broadcast %50 : vector<11x1xf32> to vector<11x11xf32>
    %52 = arith.mulf %47, %51 : vector<11x11xf32>
    %53 = vector.extract_strided_slice %4 {offsets = [0, 4], sizes = [11, 4], strides = [1, 1]} : vector<11x32xf32> to vector<11x4xf32>
    %cst_23 = arith.constant dense<0.000000e+00> : vector<11x4xf32>
    %54 = tpu.matmul %52, %53, %cst_23 {dimension_numbers = #tpu.dot_dimension_numbers<[1], [0], [0], [1], [0, 0, 1, 1], [], []>} : vector<11x11xf32>, vector<11x4xf32>, vector<11x4xf32> -> vector<11x4xf32>
    %55 = vector.extract_strided_slice %11 {offsets = [0, 2], sizes = [11, 1], strides = [1, 1]} : vector<11x8xf32> to vector<11x1xf32>
    %56 = vector.extract_strided_slice %12 {offsets = [2, 0], sizes = [1, 11], strides = [1, 1]} : vector<8x11xf32> to vector<1x11xf32>
    %57 = vector.broadcast %55 : vector<11x1xf32> to vector<11x11xf32>
    %58 = vector.broadcast %56 : vector<1x11xf32> to vector<11x11xf32>
    %59 = arith.addf %57, %58 : vector<11x11xf32>
    %cst_24 = arith.constant 2.000000e-01 : f32
    %60 = vector.broadcast %cst_24 : f32 to vector<11x11xf32>
    %61 = arith.mulf %60, %59 : vector<11x11xf32>
    %62 = arith.maximumf %59, %61 : vector<11x11xf32>
    %63 = arith.addf %62, %10 : vector<11x11xf32>
    %cst_25 = arith.constant dense<0xFF800000> : vector<11xf32>
    %64 = vector.multi_reduction <maximumf>, %63, %cst_25 [1] : vector<11x11xf32> to vector<11xf32>
    %65 = vector.shape_cast %64 : vector<11xf32> to vector<11x1xf32>
    %66 = vector.broadcast %65 : vector<11x1xf32> to vector<11x11xf32>
    %67 = arith.subf %63, %66 : vector<11x11xf32>
    %68 = math.exp %67 : vector<11x11xf32>
    %cst_26 = arith.constant dense<0.000000e+00> : vector<11xf32>
    %69 = vector.multi_reduction <add>, %68, %cst_26 [1] : vector<11x11xf32> to vector<11xf32>
    %70 = vector.shape_cast %69 : vector<11xf32> to vector<11x1xf32>
    %71 = tpu.reciprocal %70 {approx = true} : vector<11x1xf32> -> vector<11x1xf32>
    %72 = vector.broadcast %71 : vector<11x1xf32> to vector<11x11xf32>
    %73 = arith.mulf %68, %72 : vector<11x11xf32>
    %74 = vector.extract_strided_slice %4 {offsets = [0, 8], sizes = [11, 4], strides = [1, 1]} : vector<11x32xf32> to vector<11x4xf32>
    %cst_27 = arith.constant dense<0.000000e+00> : vector<11x4xf32>
    %75 = tpu.matmul %73, %74, %cst_27 {dimension_numbers = #tpu.dot_dimension_numbers<[1], [0], [0], [1], [0, 0, 1, 1], [], []>} : vector<11x11xf32>, vector<11x4xf32>, vector<11x4xf32> -> vector<11x4xf32>
    %76 = vector.extract_strided_slice %11 {offsets = [0, 3], sizes = [11, 1], strides = [1, 1]} : vector<11x8xf32> to vector<11x1xf32>
    %77 = vector.extract_strided_slice %12 {offsets = [3, 0], sizes = [1, 11], strides = [1, 1]} : vector<8x11xf32> to vector<1x11xf32>
    %78 = vector.broadcast %76 : vector<11x1xf32> to vector<11x11xf32>
    %79 = vector.broadcast %77 : vector<1x11xf32> to vector<11x11xf32>
    %80 = arith.addf %78, %79 : vector<11x11xf32>
    %cst_28 = arith.constant 2.000000e-01 : f32
    %81 = vector.broadcast %cst_28 : f32 to vector<11x11xf32>
    %82 = arith.mulf %81, %80 : vector<11x11xf32>
    %83 = arith.maximumf %80, %82 : vector<11x11xf32>
    %84 = arith.addf %83, %10 : vector<11x11xf32>
    %cst_29 = arith.constant dense<0xFF800000> : vector<11xf32>
    %85 = vector.multi_reduction <maximumf>, %84, %cst_29 [1] : vector<11x11xf32> to vector<11xf32>
    %86 = vector.shape_cast %85 : vector<11xf32> to vector<11x1xf32>
    %87 = vector.broadcast %86 : vector<11x1xf32> to vector<11x11xf32>
    %88 = arith.subf %84, %87 : vector<11x11xf32>
    %89 = math.exp %88 : vector<11x11xf32>
    %cst_30 = arith.constant dense<0.000000e+00> : vector<11xf32>
    %90 = vector.multi_reduction <add>, %89, %cst_30 [1] : vector<11x11xf32> to vector<11xf32>
    %91 = vector.shape_cast %90 : vector<11xf32> to vector<11x1xf32>
    %92 = tpu.reciprocal %91 {approx = true} : vector<11x1xf32> -> vector<11x1xf32>
    %93 = vector.broadcast %92 : vector<11x1xf32> to vector<11x11xf32>
    %94 = arith.mulf %89, %93 : vector<11x11xf32>
    %95 = vector.extract_strided_slice %4 {offsets = [0, 12], sizes = [11, 4], strides = [1, 1]} : vector<11x32xf32> to vector<11x4xf32>
    %cst_31 = arith.constant dense<0.000000e+00> : vector<11x4xf32>
    %96 = tpu.matmul %94, %95, %cst_31 {dimension_numbers = #tpu.dot_dimension_numbers<[1], [0], [0], [1], [0, 0, 1, 1], [], []>} : vector<11x11xf32>, vector<11x4xf32>, vector<11x4xf32> -> vector<11x4xf32>
    %97 = vector.extract_strided_slice %11 {offsets = [0, 4], sizes = [11, 1], strides = [1, 1]} : vector<11x8xf32> to vector<11x1xf32>
    %98 = vector.extract_strided_slice %12 {offsets = [4, 0], sizes = [1, 11], strides = [1, 1]} : vector<8x11xf32> to vector<1x11xf32>
    %99 = vector.broadcast %97 : vector<11x1xf32> to vector<11x11xf32>
    %100 = vector.broadcast %98 : vector<1x11xf32> to vector<11x11xf32>
    %101 = arith.addf %99, %100 : vector<11x11xf32>
    %cst_32 = arith.constant 2.000000e-01 : f32
    %102 = vector.broadcast %cst_32 : f32 to vector<11x11xf32>
    %103 = arith.mulf %102, %101 : vector<11x11xf32>
    %104 = arith.maximumf %101, %103 : vector<11x11xf32>
    %105 = arith.addf %104, %10 : vector<11x11xf32>
    %cst_33 = arith.constant dense<0xFF800000> : vector<11xf32>
    %106 = vector.multi_reduction <maximumf>, %105, %cst_33 [1] : vector<11x11xf32> to vector<11xf32>
    %107 = vector.shape_cast %106 : vector<11xf32> to vector<11x1xf32>
    %108 = vector.broadcast %107 : vector<11x1xf32> to vector<11x11xf32>
    %109 = arith.subf %105, %108 : vector<11x11xf32>
    %110 = math.exp %109 : vector<11x11xf32>
    %cst_34 = arith.constant dense<0.000000e+00> : vector<11xf32>
    %111 = vector.multi_reduction <add>, %110, %cst_34 [1] : vector<11x11xf32> to vector<11xf32>
    %112 = vector.shape_cast %111 : vector<11xf32> to vector<11x1xf32>
    %113 = tpu.reciprocal %112 {approx = true} : vector<11x1xf32> -> vector<11x1xf32>
    %114 = vector.broadcast %113 : vector<11x1xf32> to vector<11x11xf32>
    %115 = arith.mulf %110, %114 : vector<11x11xf32>
    %116 = vector.extract_strided_slice %4 {offsets = [0, 16], sizes = [11, 4], strides = [1, 1]} : vector<11x32xf32> to vector<11x4xf32>
    %cst_35 = arith.constant dense<0.000000e+00> : vector<11x4xf32>
    %117 = tpu.matmul %115, %116, %cst_35 {dimension_numbers = #tpu.dot_dimension_numbers<[1], [0], [0], [1], [0, 0, 1, 1], [], []>} : vector<11x11xf32>, vector<11x4xf32>, vector<11x4xf32> -> vector<11x4xf32>
    %118 = vector.extract_strided_slice %11 {offsets = [0, 5], sizes = [11, 1], strides = [1, 1]} : vector<11x8xf32> to vector<11x1xf32>
    %119 = vector.extract_strided_slice %12 {offsets = [5, 0], sizes = [1, 11], strides = [1, 1]} : vector<8x11xf32> to vector<1x11xf32>
    %120 = vector.broadcast %118 : vector<11x1xf32> to vector<11x11xf32>
    %121 = vector.broadcast %119 : vector<1x11xf32> to vector<11x11xf32>
    %122 = arith.addf %120, %121 : vector<11x11xf32>
    %cst_36 = arith.constant 2.000000e-01 : f32
    %123 = vector.broadcast %cst_36 : f32 to vector<11x11xf32>
    %124 = arith.mulf %123, %122 : vector<11x11xf32>
    %125 = arith.maximumf %122, %124 : vector<11x11xf32>
    %126 = arith.addf %125, %10 : vector<11x11xf32>
    %cst_37 = arith.constant dense<0xFF800000> : vector<11xf32>
    %127 = vector.multi_reduction <maximumf>, %126, %cst_37 [1] : vector<11x11xf32> to vector<11xf32>
    %128 = vector.shape_cast %127 : vector<11xf32> to vector<11x1xf32>
    %129 = vector.broadcast %128 : vector<11x1xf32> to vector<11x11xf32>
    %130 = arith.subf %126, %129 : vector<11x11xf32>
    %131 = math.exp %130 : vector<11x11xf32>
    %cst_38 = arith.constant dense<0.000000e+00> : vector<11xf32>
    %132 = vector.multi_reduction <add>, %131, %cst_38 [1] : vector<11x11xf32> to vector<11xf32>
    %133 = vector.shape_cast %132 : vector<11xf32> to vector<11x1xf32>
    %134 = tpu.reciprocal %133 {approx = true} : vector<11x1xf32> -> vector<11x1xf32>
    %135 = vector.broadcast %134 : vector<11x1xf32> to vector<11x11xf32>
    %136 = arith.mulf %131, %135 : vector<11x11xf32>
    %137 = vector.extract_strided_slice %4 {offsets = [0, 20], sizes = [11, 4], strides = [1, 1]} : vector<11x32xf32> to vector<11x4xf32>
    %cst_39 = arith.constant dense<0.000000e+00> : vector<11x4xf32>
    %138 = tpu.matmul %136, %137, %cst_39 {dimension_numbers = #tpu.dot_dimension_numbers<[1], [0], [0], [1], [0, 0, 1, 1], [], []>} : vector<11x11xf32>, vector<11x4xf32>, vector<11x4xf32> -> vector<11x4xf32>
    %139 = vector.extract_strided_slice %11 {offsets = [0, 6], sizes = [11, 1], strides = [1, 1]} : vector<11x8xf32> to vector<11x1xf32>
    %140 = vector.extract_strided_slice %12 {offsets = [6, 0], sizes = [1, 11], strides = [1, 1]} : vector<8x11xf32> to vector<1x11xf32>
    %141 = vector.broadcast %139 : vector<11x1xf32> to vector<11x11xf32>
    %142 = vector.broadcast %140 : vector<1x11xf32> to vector<11x11xf32>
    %143 = arith.addf %141, %142 : vector<11x11xf32>
    %cst_40 = arith.constant 2.000000e-01 : f32
    %144 = vector.broadcast %cst_40 : f32 to vector<11x11xf32>
    %145 = arith.mulf %144, %143 : vector<11x11xf32>
    %146 = arith.maximumf %143, %145 : vector<11x11xf32>
    %147 = arith.addf %146, %10 : vector<11x11xf32>
    %cst_41 = arith.constant dense<0xFF800000> : vector<11xf32>
    %148 = vector.multi_reduction <maximumf>, %147, %cst_41 [1] : vector<11x11xf32> to vector<11xf32>
    %149 = vector.shape_cast %148 : vector<11xf32> to vector<11x1xf32>
    %150 = vector.broadcast %149 : vector<11x1xf32> to vector<11x11xf32>
    %151 = arith.subf %147, %150 : vector<11x11xf32>
    %152 = math.exp %151 : vector<11x11xf32>
    %cst_42 = arith.constant dense<0.000000e+00> : vector<11xf32>
    %153 = vector.multi_reduction <add>, %152, %cst_42 [1] : vector<11x11xf32> to vector<11xf32>
    %154 = vector.shape_cast %153 : vector<11xf32> to vector<11x1xf32>
    %155 = tpu.reciprocal %154 {approx = true} : vector<11x1xf32> -> vector<11x1xf32>
    %156 = vector.broadcast %155 : vector<11x1xf32> to vector<11x11xf32>
    %157 = arith.mulf %152, %156 : vector<11x11xf32>
    %158 = vector.extract_strided_slice %4 {offsets = [0, 24], sizes = [11, 4], strides = [1, 1]} : vector<11x32xf32> to vector<11x4xf32>
    %cst_43 = arith.constant dense<0.000000e+00> : vector<11x4xf32>
    %159 = tpu.matmul %157, %158, %cst_43 {dimension_numbers = #tpu.dot_dimension_numbers<[1], [0], [0], [1], [0, 0, 1, 1], [], []>} : vector<11x11xf32>, vector<11x4xf32>, vector<11x4xf32> -> vector<11x4xf32>
    %160 = vector.extract_strided_slice %11 {offsets = [0, 7], sizes = [11, 1], strides = [1, 1]} : vector<11x8xf32> to vector<11x1xf32>
    %161 = vector.extract_strided_slice %12 {offsets = [7, 0], sizes = [1, 11], strides = [1, 1]} : vector<8x11xf32> to vector<1x11xf32>
    %162 = vector.broadcast %160 : vector<11x1xf32> to vector<11x11xf32>
    %163 = vector.broadcast %161 : vector<1x11xf32> to vector<11x11xf32>
    %164 = arith.addf %162, %163 : vector<11x11xf32>
    %cst_44 = arith.constant 2.000000e-01 : f32
    %165 = vector.broadcast %cst_44 : f32 to vector<11x11xf32>
    %166 = arith.mulf %165, %164 : vector<11x11xf32>
    %167 = arith.maximumf %164, %166 : vector<11x11xf32>
    %168 = arith.addf %167, %10 : vector<11x11xf32>
    %cst_45 = arith.constant dense<0xFF800000> : vector<11xf32>
    %169 = vector.multi_reduction <maximumf>, %168, %cst_45 [1] : vector<11x11xf32> to vector<11xf32>
    %170 = vector.shape_cast %169 : vector<11xf32> to vector<11x1xf32>
    %171 = vector.broadcast %170 : vector<11x1xf32> to vector<11x11xf32>
    %172 = arith.subf %168, %171 : vector<11x11xf32>
    %173 = math.exp %172 : vector<11x11xf32>
    %cst_46 = arith.constant dense<0.000000e+00> : vector<11xf32>
    %174 = vector.multi_reduction <add>, %173, %cst_46 [1] : vector<11x11xf32> to vector<11xf32>
    %175 = vector.shape_cast %174 : vector<11xf32> to vector<11x1xf32>
    %176 = tpu.reciprocal %175 {approx = true} : vector<11x1xf32> -> vector<11x1xf32>
    %177 = vector.broadcast %176 : vector<11x1xf32> to vector<11x11xf32>
    %178 = arith.mulf %173, %177 : vector<11x11xf32>
    %179 = vector.extract_strided_slice %4 {offsets = [0, 28], sizes = [11, 4], strides = [1, 1]} : vector<11x32xf32> to vector<11x4xf32>
    %cst_47 = arith.constant dense<0.000000e+00> : vector<11x4xf32>
    %180 = tpu.matmul %178, %179, %cst_47 {dimension_numbers = #tpu.dot_dimension_numbers<[1], [0], [0], [1], [0, 0, 1, 1], [], []>} : vector<11x11xf32>, vector<11x4xf32>, vector<11x4xf32> -> vector<11x4xf32>
    %c0_48 = arith.constant 0 : index
    %c0_49 = arith.constant 0 : index
    %c0_50 = arith.constant 0 : index
    %181 = vector.load %arg6[%c0_48, %c0_49, %c0_50] : memref<1x1x32xf32, #tpu.memory_space<vmem>>, vector<1x1x32xf32>
    %182 = vector.shape_cast %181 : vector<1x1x32xf32> to vector<1x32xf32>
    %183 = vector.extract_strided_slice %182 {offsets = [0, 0], sizes = [1, 4], strides = [1, 1]} : vector<1x32xf32> to vector<1x4xf32>
    %184 = vector.broadcast %183 : vector<1x4xf32> to vector<11x4xf32>
    %185 = arith.addf %33, %184 : vector<11x4xf32>
    %c0_51 = arith.constant 0 : index
    %c0_52 = arith.constant 0 : index
    %c0_53 = arith.constant 0 : index
    %186 = vector.load %arg7[%c0_51, %c0_52, %c0_53] : memref<1x11x32xf32, #tpu.memory_space<vmem>>, vector<1x11x4xf32>
    %187 = vector.shape_cast %186 : vector<1x11x4xf32> to vector<11x4xf32>
    %188 = vector.shape_cast %185 : vector<11x4xf32> to vector<1x11x4xf32>
    tpu.vector_store %arg7[%c0_51, %c0_52, %c0_53], %188 {strides = array<i32>} : memref<1x11x32xf32, #tpu.memory_space<vmem>>, vector<1x11x4xf32>,
    %189 = vector.extract_strided_slice %182 {offsets = [0, 4], sizes = [1, 4], strides = [1, 1]} : vector<1x32xf32> to vector<1x4xf32>
    %190 = vector.broadcast %189 : vector<1x4xf32> to vector<11x4xf32>
    %191 = arith.addf %54, %190 : vector<11x4xf32>
    %c0_54 = arith.constant 0 : index
    %c0_55 = arith.constant 0 : index
    %c4 = arith.constant 4 : index
    %192 = vector.load %arg7[%c0_54, %c0_55, %c4] : memref<1x11x32xf32, #tpu.memory_space<vmem>>, vector<1x11x4xf32>
    %193 = vector.shape_cast %192 : vector<1x11x4xf32> to vector<11x4xf32>
    %194 = vector.shape_cast %191 : vector<11x4xf32> to vector<1x11x4xf32>
    tpu.vector_store %arg7[%c0_54, %c0_55, %c4], %194 {strides = array<i32>} : memref<1x11x32xf32, #tpu.memory_space<vmem>>, vector<1x11x4xf32>,
    %195 = vector.extract_strided_slice %182 {offsets = [0, 8], sizes = [1, 4], strides = [1, 1]} : vector<1x32xf32> to vector<1x4xf32>
    %196 = vector.broadcast %195 : vector<1x4xf32> to vector<11x4xf32>
    %197 = arith.addf %75, %196 : vector<11x4xf32>
    %c0_56 = arith.constant 0 : index
    %c0_57 = arith.constant 0 : index
    %c8 = arith.constant 8 : index
    %198 = vector.load %arg7[%c0_56, %c0_57, %c8] : memref<1x11x32xf32, #tpu.memory_space<vmem>>, vector<1x11x4xf32>
    %199 = vector.shape_cast %198 : vector<1x11x4xf32> to vector<11x4xf32>
    %200 = vector.shape_cast %197 : vector<11x4xf32> to vector<1x11x4xf32>
    tpu.vector_store %arg7[%c0_56, %c0_57, %c8], %200 {strides = array<i32>} : memref<1x11x32xf32, #tpu.memory_space<vmem>>, vector<1x11x4xf32>,
    %201 = vector.extract_strided_slice %182 {offsets = [0, 12], sizes = [1, 4], strides = [1, 1]} : vector<1x32xf32> to vector<1x4xf32>
    %202 = vector.broadcast %201 : vector<1x4xf32> to vector<11x4xf32>
    %203 = arith.addf %96, %202 : vector<11x4xf32>
    %c0_58 = arith.constant 0 : index
    %c0_59 = arith.constant 0 : index
    %c12 = arith.constant 12 : index
    %204 = vector.load %arg7[%c0_58, %c0_59, %c12] : memref<1x11x32xf32, #tpu.memory_space<vmem>>, vector<1x11x4xf32>
    %205 = vector.shape_cast %204 : vector<1x11x4xf32> to vector<11x4xf32>
    %206 = vector.shape_cast %203 : vector<11x4xf32> to vector<1x11x4xf32>
    tpu.vector_store %arg7[%c0_58, %c0_59, %c12], %206 {strides = array<i32>} : memref<1x11x32xf32, #tpu.memory_space<vmem>>, vector<1x11x4xf32>,
    %207 = vector.extract_strided_slice %182 {offsets = [0, 16], sizes = [1, 4], strides = [1, 1]} : vector<1x32xf32> to vector<1x4xf32>
    %208 = vector.broadcast %207 : vector<1x4xf32> to vector<11x4xf32>
    %209 = arith.addf %117, %208 : vector<11x4xf32>
    %c0_60 = arith.constant 0 : index
    %c0_61 = arith.constant 0 : index
    %c16 = arith.constant 16 : index
    %210 = vector.load %arg7[%c0_60, %c0_61, %c16] : memref<1x11x32xf32, #tpu.memory_space<vmem>>, vector<1x11x4xf32>
    %211 = vector.shape_cast %210 : vector<1x11x4xf32> to vector<11x4xf32>
    %212 = vector.shape_cast %209 : vector<11x4xf32> to vector<1x11x4xf32>
    tpu.vector_store %arg7[%c0_60, %c0_61, %c16], %212 {strides = array<i32>} : memref<1x11x32xf32, #tpu.memory_space<vmem>>, vector<1x11x4xf32>,
    %213 = vector.extract_strided_slice %182 {offsets = [0, 20], sizes = [1, 4], strides = [1, 1]} : vector<1x32xf32> to vector<1x4xf32>
    %214 = vector.broadcast %213 : vector<1x4xf32> to vector<11x4xf32>
    %215 = arith.addf %138, %214 : vector<11x4xf32>
    %c0_62 = arith.constant 0 : index
    %c0_63 = arith.constant 0 : index
    %c20 = arith.constant 20 : index
    %216 = vector.load %arg7[%c0_62, %c0_63, %c20] : memref<1x11x32xf32, #tpu.memory_space<vmem>>, vector<1x11x4xf32>
    %217 = vector.shape_cast %216 : vector<1x11x4xf32> to vector<11x4xf32>
    %218 = vector.shape_cast %215 : vector<11x4xf32> to vector<1x11x4xf32>
    tpu.vector_store %arg7[%c0_62, %c0_63, %c20], %218 {strides = array<i32>} : memref<1x11x32xf32, #tpu.memory_space<vmem>>, vector<1x11x4xf32>,
    %219 = vector.extract_strided_slice %182 {offsets = [0, 24], sizes = [1, 4], strides = [1, 1]} : vector<1x32xf32> to vector<1x4xf32>
    %220 = vector.broadcast %219 : vector<1x4xf32> to vector<11x4xf32>
    %221 = arith.addf %159, %220 : vector<11x4xf32>
    %c0_64 = arith.constant 0 : index
    %c0_65 = arith.constant 0 : index
    %c24 = arith.constant 24 : index
    %222 = vector.load %arg7[%c0_64, %c0_65, %c24] : memref<1x11x32xf32, #tpu.memory_space<vmem>>, vector<1x11x4xf32>
    %223 = vector.shape_cast %222 : vector<1x11x4xf32> to vector<11x4xf32>
    %224 = vector.shape_cast %221 : vector<11x4xf32> to vector<1x11x4xf32>
    tpu.vector_store %arg7[%c0_64, %c0_65, %c24], %224 {strides = array<i32>} : memref<1x11x32xf32, #tpu.memory_space<vmem>>, vector<1x11x4xf32>,
    %225 = vector.extract_strided_slice %182 {offsets = [0, 28], sizes = [1, 4], strides = [1, 1]} : vector<1x32xf32> to vector<1x4xf32>
    %226 = vector.broadcast %225 : vector<1x4xf32> to vector<11x4xf32>
    %227 = arith.addf %180, %226 : vector<11x4xf32>
    %c0_66 = arith.constant 0 : index
    %c0_67 = arith.constant 0 : index
    %c28 = arith.constant 28 : index
    %228 = vector.load %arg7[%c0_66, %c0_67, %c28] : memref<1x11x32xf32, #tpu.memory_space<vmem>>, vector<1x11x4xf32>
    %229 = vector.shape_cast %228 : vector<1x11x4xf32> to vector<11x4xf32>
    %230 = vector.shape_cast %227 : vector<11x4xf32> to vector<1x11x4xf32>
    tpu.vector_store %arg7[%c0_66, %c0_67, %c28], %230 {strides = array<i32>} : memref<1x11x32xf32, #tpu.memory_space<vmem>>, vector<1x11x4xf32>,
    return
  }
  func.func @transform_0(%arg0: i32) -> (i32, i32, i32) {
    %c0_i32 = arith.constant 0 : i32
    %c0_i32_0 = arith.constant 0 : i32
    %c0_i32_1 = arith.constant 0 : i32
    return %arg0, %c0_i32, %c0_i32_0 : i32, i32, i32
  }
  func.func @transform_1(%arg0: i32) -> (i32, i32, i32) {
    %c0_i32 = arith.constant 0 : i32
    %c0_i32_0 = arith.constant 0 : i32
    %c0_i32_1 = arith.constant 0 : i32
    return %arg0, %c0_i32, %c0_i32_0 : i32, i32, i32
  }
  func.func @transform_2(%arg0: i32) -> (i32, i32, i32) {
    %c0_i32 = arith.constant 0 : i32
    %c0_i32_0 = arith.constant 0 : i32
    %c0_i32_1 = arith.constant 0 : i32
    return %arg0, %c0_i32, %c0_i32_0 : i32, i32, i32
  }
  func.func @transform_3(%arg0: i32) -> (i32, i32, i32) {
    %c0_i32 = arith.constant 0 : i32
    %c0_i32_0 = arith.constant 0 : i32
    %c0_i32_1 = arith.constant 0 : i32
    return %arg0, %c0_i32, %c0_i32_0 : i32, i32, i32
  }
  func.func @transform_4(%arg0: i32) -> (i32, i32, i32) {
    %c0_i32 = arith.constant 0 : i32
    %c0_i32_0 = arith.constant 0 : i32
    %c0_i32_1 = arith.constant 0 : i32
    return %arg0, %c0_i32, %c0_i32_0 : i32, i32, i32
  }
  func.func @transform_5(%arg0: i32) -> (i32, i32, i32) {
    %c0_i32 = arith.constant 0 : i32
    %c0_i32_0 = arith.constant 0 : i32
    %c0_i32_1 = arith.constant 0 : i32
    return %arg0, %c0_i32, %c0_i32_0 : i32, i32, i32
  }
  func.func @transform_6(%arg0: i32) -> (i32, i32, i32) {
    %c0_i32 = arith.constant 0 : i32
    %c0_i32_0 = arith.constant 0 : i32
    %c0_i32_1 = arith.constant 0 : i32
    return %arg0, %c0_i32, %c0_i32_0 : i32, i32, i32
  }
}

module attributes {stable_mosaic.version = 11 : i64} {
  func.func @_matmul_kernel(%arg0: memref<18x32xf32, #tpu.memory_space<vmem>>, %arg1: memref<32x32xf32, #tpu.memory_space<vmem>>, %arg2: memref<18x32xf32, #tpu.memory_space<vmem>>) attributes {dimension_semantics = [], scalar_prefetch = 0 : i64, scratch_operands = 0 : i64, tpu.core_type = #tpu.core_type<tc>} {
    %c0 = arith.constant 0 : index
    %c0_0 = arith.constant 0 : index
    %0 = vector.load %arg0[%c0, %c0_0] : memref<18x32xf32, #tpu.memory_space<vmem>>, vector<18x32xf32>
    %c0_1 = arith.constant 0 : index
    %c0_2 = arith.constant 0 : index
    %1 = vector.load %arg1[%c0_1, %c0_2] : memref<32x32xf32, #tpu.memory_space<vmem>>, vector<32x32xf32>
    %cst = arith.constant dense<0.000000e+00> : vector<18x32xf32>
    %2 = tpu.matmul %0, %1, %cst {dimension_numbers = #tpu.dot_dimension_numbers<[1], [0], [0], [1], [0, 0, 1, 1], [], []>} : vector<18x32xf32>, vector<32x32xf32>, vector<18x32xf32> -> vector<18x32xf32>
    %c0_3 = arith.constant 0 : index
    %c0_4 = arith.constant 0 : index
    %3 = vector.load %arg2[%c0_3, %c0_4] : memref<18x32xf32, #tpu.memory_space<vmem>>, vector<18x32xf32>
    tpu.vector_store %arg2[%c0_3, %c0_4], %2 {strides = array<i32>} : memref<18x32xf32, #tpu.memory_space<vmem>>, vector<18x32xf32>,
    return
  }
}

module attributes {stable_mosaic.version = 11 : i64} {
  func.func @_matmul_kernel(%arg0: memref<12x32xf32, #tpu.memory_space<vmem>>, %arg1: memref<32x32xf32, #tpu.memory_space<vmem>>, %arg2: memref<12x32xf32, #tpu.memory_space<vmem>>) attributes {dimension_semantics = [], scalar_prefetch = 0 : i64, scratch_operands = 0 : i64, tpu.core_type = #tpu.core_type<tc>} {
    %c0 = arith.constant 0 : index
    %c0_0 = arith.constant 0 : index
    %0 = vector.load %arg0[%c0, %c0_0] : memref<12x32xf32, #tpu.memory_space<vmem>>, vector<12x32xf32>
    %c0_1 = arith.constant 0 : index
    %c0_2 = arith.constant 0 : index
    %1 = vector.load %arg1[%c0_1, %c0_2] : memref<32x32xf32, #tpu.memory_space<vmem>>, vector<32x32xf32>
    %cst = arith.constant dense<0.000000e+00> : vector<12x32xf32>
    %2 = tpu.matmul %0, %1, %cst {dimension_numbers = #tpu.dot_dimension_numbers<[1], [0], [0], [1], [0, 0, 1, 1], [], []>} : vector<12x32xf32>, vector<32x32xf32>, vector<12x32xf32> -> vector<12x32xf32>
    %c0_3 = arith.constant 0 : index
    %c0_4 = arith.constant 0 : index
    %3 = vector.load %arg2[%c0_3, %c0_4] : memref<12x32xf32, #tpu.memory_space<vmem>>, vector<12x32xf32>
    tpu.vector_store %arg2[%c0_3, %c0_4], %2 {strides = array<i32>} : memref<12x32xf32, #tpu.memory_space<vmem>>, vector<12x32xf32>,
    return
  }
}

module attributes {stable_mosaic.version = 11 : i64} {
  func.func @_lang_gat_kernel(%arg0: memref<30x32xf32, #tpu.memory_space<vmem>>, %arg1: memref<8x32xf32, #tpu.memory_space<vmem>>, %arg2: memref<32x8xf32, #tpu.memory_space<vmem>>, %arg3: memref<30x30xf32, #tpu.memory_space<vmem>>, %arg4: memref<1x32xf32, #tpu.memory_space<vmem>>, %arg5: memref<30x32xf32, #tpu.memory_space<vmem>>) attributes {dimension_semantics = [], scalar_prefetch = 0 : i64, scratch_operands = 0 : i64, tpu.core_type = #tpu.core_type<tc>} {
    %c0 = arith.constant 0 : index
    %c0_0 = arith.constant 0 : index
    %0 = vector.load %arg0[%c0, %c0_0] : memref<30x32xf32, #tpu.memory_space<vmem>>, vector<30x32xf32>
    %c0_1 = arith.constant 0 : index
    %c0_2 = arith.constant 0 : index
    %1 = vector.load %arg1[%c0_1, %c0_2] : memref<8x32xf32, #tpu.memory_space<vmem>>, vector<8x32xf32>
    %c0_3 = arith.constant 0 : index
    %c0_4 = arith.constant 0 : index
    %2 = vector.load %arg2[%c0_3, %c0_4] : memref<32x8xf32, #tpu.memory_space<vmem>>, vector<32x8xf32>
    %c0_5 = arith.constant 0 : index
    %c0_6 = arith.constant 0 : index
    %3 = vector.load %arg3[%c0_5, %c0_6] : memref<30x30xf32, #tpu.memory_space<vmem>>, vector<30x30xf32>
    %cst = arith.constant dense<0.000000e+00> : vector<30x8xf32>
    %4 = tpu.matmul %0, %2, %cst {dimension_numbers = #tpu.dot_dimension_numbers<[1], [0], [0], [1], [0, 0, 1, 1], [], []>} : vector<30x32xf32>, vector<32x8xf32>, vector<30x8xf32> -> vector<30x8xf32>
    %cst_7 = arith.constant dense<0.000000e+00> : vector<8x30xf32>
    %5 = tpu.matmul %1, %0, %cst_7 {dimension_numbers = #tpu.dot_dimension_numbers<[1], [1], [0], [0], [0, 0, 1, 0], [], []>} : vector<8x32xf32>, vector<30x32xf32>, vector<8x30xf32> -> vector<8x30xf32>
    %6 = vector.extract_strided_slice %4 {offsets = [0, 0], sizes = [30, 1], strides = [1, 1]} : vector<30x8xf32> to vector<30x1xf32>
    %7 = vector.extract_strided_slice %5 {offsets = [0, 0], sizes = [1, 30], strides = [1, 1]} : vector<8x30xf32> to vector<1x30xf32>
    %8 = vector.broadcast %6 : vector<30x1xf32> to vector<30x30xf32>
    %9 = vector.broadcast %7 : vector<1x30xf32> to vector<30x30xf32>
    %10 = arith.addf %8, %9 : vector<30x30xf32>
    %cst_8 = arith.constant 2.000000e-01 : f32
    %11 = vector.broadcast %cst_8 : f32 to vector<30x30xf32>
    %12 = arith.mulf %11, %10 : vector<30x30xf32>
    %13 = arith.maximumf %10, %12 : vector<30x30xf32>
    %14 = arith.addf %13, %3 : vector<30x30xf32>
    %cst_9 = arith.constant dense<0xFF800000> : vector<30xf32>
    %15 = vector.multi_reduction <maximumf>, %14, %cst_9 [1] : vector<30x30xf32> to vector<30xf32>
    %16 = vector.shape_cast %15 : vector<30xf32> to vector<30x1xf32>
    %17 = vector.broadcast %16 : vector<30x1xf32> to vector<30x30xf32>
    %18 = arith.subf %14, %17 : vector<30x30xf32>
    %19 = math.exp %18 : vector<30x30xf32>
    %cst_10 = arith.constant dense<0.000000e+00> : vector<30xf32>
    %20 = vector.multi_reduction <add>, %19, %cst_10 [1] : vector<30x30xf32> to vector<30xf32>
    %21 = vector.shape_cast %20 : vector<30xf32> to vector<30x1xf32>
    %22 = tpu.reciprocal %21 {approx = true} : vector<30x1xf32> -> vector<30x1xf32>
    %23 = vector.broadcast %22 : vector<30x1xf32> to vector<30x30xf32>
    %24 = arith.mulf %19, %23 : vector<30x30xf32>
    %25 = vector.extract_strided_slice %0 {offsets = [0, 0], sizes = [30, 4], strides = [1, 1]} : vector<30x32xf32> to vector<30x4xf32>
    %cst_11 = arith.constant dense<0.000000e+00> : vector<30x4xf32>
    %26 = tpu.matmul %24, %25, %cst_11 {dimension_numbers = #tpu.dot_dimension_numbers<[1], [0], [0], [1], [0, 0, 1, 1], [], []>} : vector<30x30xf32>, vector<30x4xf32>, vector<30x4xf32> -> vector<30x4xf32>
    %27 = vector.extract_strided_slice %4 {offsets = [0, 1], sizes = [30, 1], strides = [1, 1]} : vector<30x8xf32> to vector<30x1xf32>
    %28 = vector.extract_strided_slice %5 {offsets = [1, 0], sizes = [1, 30], strides = [1, 1]} : vector<8x30xf32> to vector<1x30xf32>
    %29 = vector.broadcast %27 : vector<30x1xf32> to vector<30x30xf32>
    %30 = vector.broadcast %28 : vector<1x30xf32> to vector<30x30xf32>
    %31 = arith.addf %29, %30 : vector<30x30xf32>
    %cst_12 = arith.constant 2.000000e-01 : f32
    %32 = vector.broadcast %cst_12 : f32 to vector<30x30xf32>
    %33 = arith.mulf %32, %31 : vector<30x30xf32>
    %34 = arith.maximumf %31, %33 : vector<30x30xf32>
    %35 = arith.addf %34, %3 : vector<30x30xf32>
    %cst_13 = arith.constant dense<0xFF800000> : vector<30xf32>
    %36 = vector.multi_reduction <maximumf>, %35, %cst_13 [1] : vector<30x30xf32> to vector<30xf32>
    %37 = vector.shape_cast %36 : vector<30xf32> to vector<30x1xf32>
    %38 = vector.broadcast %37 : vector<30x1xf32> to vector<30x30xf32>
    %39 = arith.subf %35, %38 : vector<30x30xf32>
    %40 = math.exp %39 : vector<30x30xf32>
    %cst_14 = arith.constant dense<0.000000e+00> : vector<30xf32>
    %41 = vector.multi_reduction <add>, %40, %cst_14 [1] : vector<30x30xf32> to vector<30xf32>
    %42 = vector.shape_cast %41 : vector<30xf32> to vector<30x1xf32>
    %43 = tpu.reciprocal %42 {approx = true} : vector<30x1xf32> -> vector<30x1xf32>
    %44 = vector.broadcast %43 : vector<30x1xf32> to vector<30x30xf32>
    %45 = arith.mulf %40, %44 : vector<30x30xf32>
    %46 = vector.extract_strided_slice %0 {offsets = [0, 4], sizes = [30, 4], strides = [1, 1]} : vector<30x32xf32> to vector<30x4xf32>
    %cst_15 = arith.constant dense<0.000000e+00> : vector<30x4xf32>
    %47 = tpu.matmul %45, %46, %cst_15 {dimension_numbers = #tpu.dot_dimension_numbers<[1], [0], [0], [1], [0, 0, 1, 1], [], []>} : vector<30x30xf32>, vector<30x4xf32>, vector<30x4xf32> -> vector<30x4xf32>
    %48 = vector.extract_strided_slice %4 {offsets = [0, 2], sizes = [30, 1], strides = [1, 1]} : vector<30x8xf32> to vector<30x1xf32>
    %49 = vector.extract_strided_slice %5 {offsets = [2, 0], sizes = [1, 30], strides = [1, 1]} : vector<8x30xf32> to vector<1x30xf32>
    %50 = vector.broadcast %48 : vector<30x1xf32> to vector<30x30xf32>
    %51 = vector.broadcast %49 : vector<1x30xf32> to vector<30x30xf32>
    %52 = arith.addf %50, %51 : vector<30x30xf32>
    %cst_16 = arith.constant 2.000000e-01 : f32
    %53 = vector.broadcast %cst_16 : f32 to vector<30x30xf32>
    %54 = arith.mulf %53, %52 : vector<30x30xf32>
    %55 = arith.maximumf %52, %54 : vector<30x30xf32>
    %56 = arith.addf %55, %3 : vector<30x30xf32>
    %cst_17 = arith.constant dense<0xFF800000> : vector<30xf32>
    %57 = vector.multi_reduction <maximumf>, %56, %cst_17 [1] : vector<30x30xf32> to vector<30xf32>
    %58 = vector.shape_cast %57 : vector<30xf32> to vector<30x1xf32>
    %59 = vector.broadcast %58 : vector<30x1xf32> to vector<30x30xf32>
    %60 = arith.subf %56, %59 : vector<30x30xf32>
    %61 = math.exp %60 : vector<30x30xf32>
    %cst_18 = arith.constant dense<0.000000e+00> : vector<30xf32>
    %62 = vector.multi_reduction <add>, %61, %cst_18 [1] : vector<30x30xf32> to vector<30xf32>
    %63 = vector.shape_cast %62 : vector<30xf32> to vector<30x1xf32>
    %64 = tpu.reciprocal %63 {approx = true} : vector<30x1xf32> -> vector<30x1xf32>
    %65 = vector.broadcast %64 : vector<30x1xf32> to vector<30x30xf32>
    %66 = arith.mulf %61, %65 : vector<30x30xf32>
    %67 = vector.extract_strided_slice %0 {offsets = [0, 8], sizes = [30, 4], strides = [1, 1]} : vector<30x32xf32> to vector<30x4xf32>
    %cst_19 = arith.constant dense<0.000000e+00> : vector<30x4xf32>
    %68 = tpu.matmul %66, %67, %cst_19 {dimension_numbers = #tpu.dot_dimension_numbers<[1], [0], [0], [1], [0, 0, 1, 1], [], []>} : vector<30x30xf32>, vector<30x4xf32>, vector<30x4xf32> -> vector<30x4xf32>
    %69 = vector.extract_strided_slice %4 {offsets = [0, 3], sizes = [30, 1], strides = [1, 1]} : vector<30x8xf32> to vector<30x1xf32>
    %70 = vector.extract_strided_slice %5 {offsets = [3, 0], sizes = [1, 30], strides = [1, 1]} : vector<8x30xf32> to vector<1x30xf32>
    %71 = vector.broadcast %69 : vector<30x1xf32> to vector<30x30xf32>
    %72 = vector.broadcast %70 : vector<1x30xf32> to vector<30x30xf32>
    %73 = arith.addf %71, %72 : vector<30x30xf32>
    %cst_20 = arith.constant 2.000000e-01 : f32
    %74 = vector.broadcast %cst_20 : f32 to vector<30x30xf32>
    %75 = arith.mulf %74, %73 : vector<30x30xf32>
    %76 = arith.maximumf %73, %75 : vector<30x30xf32>
    %77 = arith.addf %76, %3 : vector<30x30xf32>
    %cst_21 = arith.constant dense<0xFF800000> : vector<30xf32>
    %78 = vector.multi_reduction <maximumf>, %77, %cst_21 [1] : vector<30x30xf32> to vector<30xf32>
    %79 = vector.shape_cast %78 : vector<30xf32> to vector<30x1xf32>
    %80 = vector.broadcast %79 : vector<30x1xf32> to vector<30x30xf32>
    %81 = arith.subf %77, %80 : vector<30x30xf32>
    %82 = math.exp %81 : vector<30x30xf32>
    %cst_22 = arith.constant dense<0.000000e+00> : vector<30xf32>
    %83 = vector.multi_reduction <add>, %82, %cst_22 [1] : vector<30x30xf32> to vector<30xf32>
    %84 = vector.shape_cast %83 : vector<30xf32> to vector<30x1xf32>
    %85 = tpu.reciprocal %84 {approx = true} : vector<30x1xf32> -> vector<30x1xf32>
    %86 = vector.broadcast %85 : vector<30x1xf32> to vector<30x30xf32>
    %87 = arith.mulf %82, %86 : vector<30x30xf32>
    %88 = vector.extract_strided_slice %0 {offsets = [0, 12], sizes = [30, 4], strides = [1, 1]} : vector<30x32xf32> to vector<30x4xf32>
    %cst_23 = arith.constant dense<0.000000e+00> : vector<30x4xf32>
    %89 = tpu.matmul %87, %88, %cst_23 {dimension_numbers = #tpu.dot_dimension_numbers<[1], [0], [0], [1], [0, 0, 1, 1], [], []>} : vector<30x30xf32>, vector<30x4xf32>, vector<30x4xf32> -> vector<30x4xf32>
    %90 = vector.extract_strided_slice %4 {offsets = [0, 4], sizes = [30, 1], strides = [1, 1]} : vector<30x8xf32> to vector<30x1xf32>
    %91 = vector.extract_strided_slice %5 {offsets = [4, 0], sizes = [1, 30], strides = [1, 1]} : vector<8x30xf32> to vector<1x30xf32>
    %92 = vector.broadcast %90 : vector<30x1xf32> to vector<30x30xf32>
    %93 = vector.broadcast %91 : vector<1x30xf32> to vector<30x30xf32>
    %94 = arith.addf %92, %93 : vector<30x30xf32>
    %cst_24 = arith.constant 2.000000e-01 : f32
    %95 = vector.broadcast %cst_24 : f32 to vector<30x30xf32>
    %96 = arith.mulf %95, %94 : vector<30x30xf32>
    %97 = arith.maximumf %94, %96 : vector<30x30xf32>
    %98 = arith.addf %97, %3 : vector<30x30xf32>
    %cst_25 = arith.constant dense<0xFF800000> : vector<30xf32>
    %99 = vector.multi_reduction <maximumf>, %98, %cst_25 [1] : vector<30x30xf32> to vector<30xf32>
    %100 = vector.shape_cast %99 : vector<30xf32> to vector<30x1xf32>
    %101 = vector.broadcast %100 : vector<30x1xf32> to vector<30x30xf32>
    %102 = arith.subf %98, %101 : vector<30x30xf32>
    %103 = math.exp %102 : vector<30x30xf32>
    %cst_26 = arith.constant dense<0.000000e+00> : vector<30xf32>
    %104 = vector.multi_reduction <add>, %103, %cst_26 [1] : vector<30x30xf32> to vector<30xf32>
    %105 = vector.shape_cast %104 : vector<30xf32> to vector<30x1xf32>
    %106 = tpu.reciprocal %105 {approx = true} : vector<30x1xf32> -> vector<30x1xf32>
    %107 = vector.broadcast %106 : vector<30x1xf32> to vector<30x30xf32>
    %108 = arith.mulf %103, %107 : vector<30x30xf32>
    %109 = vector.extract_strided_slice %0 {offsets = [0, 16], sizes = [30, 4], strides = [1, 1]} : vector<30x32xf32> to vector<30x4xf32>
    %cst_27 = arith.constant dense<0.000000e+00> : vector<30x4xf32>
    %110 = tpu.matmul %108, %109, %cst_27 {dimension_numbers = #tpu.dot_dimension_numbers<[1], [0], [0], [1], [0, 0, 1, 1], [], []>} : vector<30x30xf32>, vector<30x4xf32>, vector<30x4xf32> -> vector<30x4xf32>
    %111 = vector.extract_strided_slice %4 {offsets = [0, 5], sizes = [30, 1], strides = [1, 1]} : vector<30x8xf32> to vector<30x1xf32>
    %112 = vector.extract_strided_slice %5 {offsets = [5, 0], sizes = [1, 30], strides = [1, 1]} : vector<8x30xf32> to vector<1x30xf32>
    %113 = vector.broadcast %111 : vector<30x1xf32> to vector<30x30xf32>
    %114 = vector.broadcast %112 : vector<1x30xf32> to vector<30x30xf32>
    %115 = arith.addf %113, %114 : vector<30x30xf32>
    %cst_28 = arith.constant 2.000000e-01 : f32
    %116 = vector.broadcast %cst_28 : f32 to vector<30x30xf32>
    %117 = arith.mulf %116, %115 : vector<30x30xf32>
    %118 = arith.maximumf %115, %117 : vector<30x30xf32>
    %119 = arith.addf %118, %3 : vector<30x30xf32>
    %cst_29 = arith.constant dense<0xFF800000> : vector<30xf32>
    %120 = vector.multi_reduction <maximumf>, %119, %cst_29 [1] : vector<30x30xf32> to vector<30xf32>
    %121 = vector.shape_cast %120 : vector<30xf32> to vector<30x1xf32>
    %122 = vector.broadcast %121 : vector<30x1xf32> to vector<30x30xf32>
    %123 = arith.subf %119, %122 : vector<30x30xf32>
    %124 = math.exp %123 : vector<30x30xf32>
    %cst_30 = arith.constant dense<0.000000e+00> : vector<30xf32>
    %125 = vector.multi_reduction <add>, %124, %cst_30 [1] : vector<30x30xf32> to vector<30xf32>
    %126 = vector.shape_cast %125 : vector<30xf32> to vector<30x1xf32>
    %127 = tpu.reciprocal %126 {approx = true} : vector<30x1xf32> -> vector<30x1xf32>
    %128 = vector.broadcast %127 : vector<30x1xf32> to vector<30x30xf32>
    %129 = arith.mulf %124, %128 : vector<30x30xf32>
    %130 = vector.extract_strided_slice %0 {offsets = [0, 20], sizes = [30, 4], strides = [1, 1]} : vector<30x32xf32> to vector<30x4xf32>
    %cst_31 = arith.constant dense<0.000000e+00> : vector<30x4xf32>
    %131 = tpu.matmul %129, %130, %cst_31 {dimension_numbers = #tpu.dot_dimension_numbers<[1], [0], [0], [1], [0, 0, 1, 1], [], []>} : vector<30x30xf32>, vector<30x4xf32>, vector<30x4xf32> -> vector<30x4xf32>
    %132 = vector.extract_strided_slice %4 {offsets = [0, 6], sizes = [30, 1], strides = [1, 1]} : vector<30x8xf32> to vector<30x1xf32>
    %133 = vector.extract_strided_slice %5 {offsets = [6, 0], sizes = [1, 30], strides = [1, 1]} : vector<8x30xf32> to vector<1x30xf32>
    %134 = vector.broadcast %132 : vector<30x1xf32> to vector<30x30xf32>
    %135 = vector.broadcast %133 : vector<1x30xf32> to vector<30x30xf32>
    %136 = arith.addf %134, %135 : vector<30x30xf32>
    %cst_32 = arith.constant 2.000000e-01 : f32
    %137 = vector.broadcast %cst_32 : f32 to vector<30x30xf32>
    %138 = arith.mulf %137, %136 : vector<30x30xf32>
    %139 = arith.maximumf %136, %138 : vector<30x30xf32>
    %140 = arith.addf %139, %3 : vector<30x30xf32>
    %cst_33 = arith.constant dense<0xFF800000> : vector<30xf32>
    %141 = vector.multi_reduction <maximumf>, %140, %cst_33 [1] : vector<30x30xf32> to vector<30xf32>
    %142 = vector.shape_cast %141 : vector<30xf32> to vector<30x1xf32>
    %143 = vector.broadcast %142 : vector<30x1xf32> to vector<30x30xf32>
    %144 = arith.subf %140, %143 : vector<30x30xf32>
    %145 = math.exp %144 : vector<30x30xf32>
    %cst_34 = arith.constant dense<0.000000e+00> : vector<30xf32>
    %146 = vector.multi_reduction <add>, %145, %cst_34 [1] : vector<30x30xf32> to vector<30xf32>
    %147 = vector.shape_cast %146 : vector<30xf32> to vector<30x1xf32>
    %148 = tpu.reciprocal %147 {approx = true} : vector<30x1xf32> -> vector<30x1xf32>
    %149 = vector.broadcast %148 : vector<30x1xf32> to vector<30x30xf32>
    %150 = arith.mulf %145, %149 : vector<30x30xf32>
    %151 = vector.extract_strided_slice %0 {offsets = [0, 24], sizes = [30, 4], strides = [1, 1]} : vector<30x32xf32> to vector<30x4xf32>
    %cst_35 = arith.constant dense<0.000000e+00> : vector<30x4xf32>
    %152 = tpu.matmul %150, %151, %cst_35 {dimension_numbers = #tpu.dot_dimension_numbers<[1], [0], [0], [1], [0, 0, 1, 1], [], []>} : vector<30x30xf32>, vector<30x4xf32>, vector<30x4xf32> -> vector<30x4xf32>
    %153 = vector.extract_strided_slice %4 {offsets = [0, 7], sizes = [30, 1], strides = [1, 1]} : vector<30x8xf32> to vector<30x1xf32>
    %154 = vector.extract_strided_slice %5 {offsets = [7, 0], sizes = [1, 30], strides = [1, 1]} : vector<8x30xf32> to vector<1x30xf32>
    %155 = vector.broadcast %153 : vector<30x1xf32> to vector<30x30xf32>
    %156 = vector.broadcast %154 : vector<1x30xf32> to vector<30x30xf32>
    %157 = arith.addf %155, %156 : vector<30x30xf32>
    %cst_36 = arith.constant 2.000000e-01 : f32
    %158 = vector.broadcast %cst_36 : f32 to vector<30x30xf32>
    %159 = arith.mulf %158, %157 : vector<30x30xf32>
    %160 = arith.maximumf %157, %159 : vector<30x30xf32>
    %161 = arith.addf %160, %3 : vector<30x30xf32>
    %cst_37 = arith.constant dense<0xFF800000> : vector<30xf32>
    %162 = vector.multi_reduction <maximumf>, %161, %cst_37 [1] : vector<30x30xf32> to vector<30xf32>
    %163 = vector.shape_cast %162 : vector<30xf32> to vector<30x1xf32>
    %164 = vector.broadcast %163 : vector<30x1xf32> to vector<30x30xf32>
    %165 = arith.subf %161, %164 : vector<30x30xf32>
    %166 = math.exp %165 : vector<30x30xf32>
    %cst_38 = arith.constant dense<0.000000e+00> : vector<30xf32>
    %167 = vector.multi_reduction <add>, %166, %cst_38 [1] : vector<30x30xf32> to vector<30xf32>
    %168 = vector.shape_cast %167 : vector<30xf32> to vector<30x1xf32>
    %169 = tpu.reciprocal %168 {approx = true} : vector<30x1xf32> -> vector<30x1xf32>
    %170 = vector.broadcast %169 : vector<30x1xf32> to vector<30x30xf32>
    %171 = arith.mulf %166, %170 : vector<30x30xf32>
    %172 = vector.extract_strided_slice %0 {offsets = [0, 28], sizes = [30, 4], strides = [1, 1]} : vector<30x32xf32> to vector<30x4xf32>
    %cst_39 = arith.constant dense<0.000000e+00> : vector<30x4xf32>
    %173 = tpu.matmul %171, %172, %cst_39 {dimension_numbers = #tpu.dot_dimension_numbers<[1], [0], [0], [1], [0, 0, 1, 1], [], []>} : vector<30x30xf32>, vector<30x4xf32>, vector<30x4xf32> -> vector<30x4xf32>
    %c0_40 = arith.constant 0 : index
    %c0_41 = arith.constant 0 : index
    %174 = vector.load %arg4[%c0_40, %c0_41] : memref<1x32xf32, #tpu.memory_space<vmem>>, vector<1x32xf32>
    %175 = vector.extract_strided_slice %174 {offsets = [0, 0], sizes = [1, 4], strides = [1, 1]} : vector<1x32xf32> to vector<1x4xf32>
    %176 = vector.broadcast %175 : vector<1x4xf32> to vector<30x4xf32>
    %177 = arith.addf %26, %176 : vector<30x4xf32>
    %c0_42 = arith.constant 0 : index
    %c0_43 = arith.constant 0 : index
    %178 = vector.load %arg5[%c0_42, %c0_43] : memref<30x32xf32, #tpu.memory_space<vmem>>, vector<30x4xf32>
    tpu.vector_store %arg5[%c0_42, %c0_43], %177 {strides = array<i32>} : memref<30x32xf32, #tpu.memory_space<vmem>>, vector<30x4xf32>,
    %179 = vector.extract_strided_slice %174 {offsets = [0, 4], sizes = [1, 4], strides = [1, 1]} : vector<1x32xf32> to vector<1x4xf32>
    %180 = vector.broadcast %179 : vector<1x4xf32> to vector<30x4xf32>
    %181 = arith.addf %47, %180 : vector<30x4xf32>
    %c0_44 = arith.constant 0 : index
    %c4 = arith.constant 4 : index
    %182 = vector.load %arg5[%c0_44, %c4] : memref<30x32xf32, #tpu.memory_space<vmem>>, vector<30x4xf32>
    tpu.vector_store %arg5[%c0_44, %c4], %181 {strides = array<i32>} : memref<30x32xf32, #tpu.memory_space<vmem>>, vector<30x4xf32>,
    %183 = vector.extract_strided_slice %174 {offsets = [0, 8], sizes = [1, 4], strides = [1, 1]} : vector<1x32xf32> to vector<1x4xf32>
    %184 = vector.broadcast %183 : vector<1x4xf32> to vector<30x4xf32>
    %185 = arith.addf %68, %184 : vector<30x4xf32>
    %c0_45 = arith.constant 0 : index
    %c8 = arith.constant 8 : index
    %186 = vector.load %arg5[%c0_45, %c8] : memref<30x32xf32, #tpu.memory_space<vmem>>, vector<30x4xf32>
    tpu.vector_store %arg5[%c0_45, %c8], %185 {strides = array<i32>} : memref<30x32xf32, #tpu.memory_space<vmem>>, vector<30x4xf32>,
    %187 = vector.extract_strided_slice %174 {offsets = [0, 12], sizes = [1, 4], strides = [1, 1]} : vector<1x32xf32> to vector<1x4xf32>
    %188 = vector.broadcast %187 : vector<1x4xf32> to vector<30x4xf32>
    %189 = arith.addf %89, %188 : vector<30x4xf32>
    %c0_46 = arith.constant 0 : index
    %c12 = arith.constant 12 : index
    %190 = vector.load %arg5[%c0_46, %c12] : memref<30x32xf32, #tpu.memory_space<vmem>>, vector<30x4xf32>
    tpu.vector_store %arg5[%c0_46, %c12], %189 {strides = array<i32>} : memref<30x32xf32, #tpu.memory_space<vmem>>, vector<30x4xf32>,
    %191 = vector.extract_strided_slice %174 {offsets = [0, 16], sizes = [1, 4], strides = [1, 1]} : vector<1x32xf32> to vector<1x4xf32>
    %192 = vector.broadcast %191 : vector<1x4xf32> to vector<30x4xf32>
    %193 = arith.addf %110, %192 : vector<30x4xf32>
    %c0_47 = arith.constant 0 : index
    %c16 = arith.constant 16 : index
    %194 = vector.load %arg5[%c0_47, %c16] : memref<30x32xf32, #tpu.memory_space<vmem>>, vector<30x4xf32>
    tpu.vector_store %arg5[%c0_47, %c16], %193 {strides = array<i32>} : memref<30x32xf32, #tpu.memory_space<vmem>>, vector<30x4xf32>,
    %195 = vector.extract_strided_slice %174 {offsets = [0, 20], sizes = [1, 4], strides = [1, 1]} : vector<1x32xf32> to vector<1x4xf32>
    %196 = vector.broadcast %195 : vector<1x4xf32> to vector<30x4xf32>
    %197 = arith.addf %131, %196 : vector<30x4xf32>
    %c0_48 = arith.constant 0 : index
    %c20 = arith.constant 20 : index
    %198 = vector.load %arg5[%c0_48, %c20] : memref<30x32xf32, #tpu.memory_space<vmem>>, vector<30x4xf32>
    tpu.vector_store %arg5[%c0_48, %c20], %197 {strides = array<i32>} : memref<30x32xf32, #tpu.memory_space<vmem>>, vector<30x4xf32>,
    %199 = vector.extract_strided_slice %174 {offsets = [0, 24], sizes = [1, 4], strides = [1, 1]} : vector<1x32xf32> to vector<1x4xf32>
    %200 = vector.broadcast %199 : vector<1x4xf32> to vector<30x4xf32>
    %201 = arith.addf %152, %200 : vector<30x4xf32>
    %c0_49 = arith.constant 0 : index
    %c24 = arith.constant 24 : index
    %202 = vector.load %arg5[%c0_49, %c24] : memref<30x32xf32, #tpu.memory_space<vmem>>, vector<30x4xf32>
    tpu.vector_store %arg5[%c0_49, %c24], %201 {strides = array<i32>} : memref<30x32xf32, #tpu.memory_space<vmem>>, vector<30x4xf32>,
    %203 = vector.extract_strided_slice %174 {offsets = [0, 28], sizes = [1, 4], strides = [1, 1]} : vector<1x32xf32> to vector<1x4xf32>
    %204 = vector.broadcast %203 : vector<1x4xf32> to vector<30x4xf32>
    %205 = arith.addf %173, %204 : vector<30x4xf32>
    %c0_50 = arith.constant 0 : index
    %c28 = arith.constant 28 : index
    %206 = vector.load %arg5[%c0_50, %c28] : memref<30x32xf32, #tpu.memory_space<vmem>>, vector<30x4xf32>
    tpu.vector_store %arg5[%c0_50, %c28], %205 {strides = array<i32>} : memref<30x32xf32, #tpu.memory_space<vmem>>, vector<30x4xf32>,
    return
  }
}

</mosaic_0001>

<llo_original>
// kernel: _device_forward_rel.6
$region0: #{_device_forward_rel.6}
  #allocation0 [shape = 'u32[]', space=smem, size = 0x4, offset = 0x4, fixed_abs, tag = 'smem constant byte address 0x4 - core index']
  #allocation1 [shape = 'u32[144,128]{1,0:T(1,128)}', space=vmem, size = 0x12000, scoped, tag = 'internal scratch']
  %s0 = inlined_call_operand.vmem [shape: f32[18,32], index: 0, kind: input, shape index: {}]
  %s1 = inlined_call_operand.vmem [shape: f32[32,32], index: 1, kind: input, shape index: {}]
  %s2 = inlined_call_operand.vmem [shape: f32[18,32], index: 2, kind: output, shape index: {}]
  %s3 = sld [smem:[#allocation0]]
  $region18: #{_device_forward_rel.6} parent=0
    _
  %s5 = ssub.s32 1, %s3
  %s6 = scalar_select 0, %s5, %s3
  // Predicated region
  $region2: #{_device_forward_rel.6} parent=0 // pred_check
    _
  $region3: #{_device_forward_rel.6} parent=0 // pred_check_branch
    %8 = sbr.rel (0) target = $region5
  $region4: #{_device_forward_rel.6} parent=0 // pred_region
    _
  $region5: #{_device_forward_rel.6} parent=0 // pred_fallthru
    _
  // Predicated region
  $region6: #{_device_forward_rel.6} parent=0 // pred_check
    _
  $region7: #{_device_forward_rel.6} parent=0 // pred_check_branch
    %10 = sbr.rel (0) target = $region9
  $region8: #{_device_forward_rel.6} parent=0 // pred_region
    _
  $region9: #{_device_forward_rel.6} parent=0 // pred_fallthru
    _
  %v11 = vld [vmem:[%s0] sm:$0xff]
  %v12 = vld [vmem:[%s0 + $0x8] sm:$0xff]
  %v13 = vld [vmem:[%s0 + $0x10] sm:$0x3]
  %v14 = vld [vmem:[%s1] sm:$0xff]
  %v15 = vld [vmem:[%s1 + $0x8] sm:$0xff]
  %v16 = vld [vmem:[%s1 + $0x10] sm:$0xff]
  %v17 = vld [vmem:[%s1 + $0x18] sm:$0xff]
  %vm18 = vcmask 261120
  %v20 = vsel %vm18, %v11, 0
  %v23 = vsel %vm18, %v12, 0
  %v26 = vsel %vm18, %v13, 0
  %28 = vmatprep.subr.mxu0 0.0
  %29 = vmatpush1.msra.mxu0 %v14
  %30 = vmatprep.subr.mxu0 0.0
  %31 = vmatpush1.msra.mxu0 %v15
  %32 = vmatprep.subr.mxu0 0.0
  %33 = vmatpush1.msra.mxu0 %v16
  %34 = vmatprep.subr.mxu0 0.0
  %35 = vmatpush1.msra.mxu0 %v17
  %36 = vmatprep.subr.mxu0 0.0
  %37 = vmatpush1.msra.mxu0 0.0
  %38 = vmatprep.subr.mxu0 0.0
  %39 = vmatpush1.msra.mxu0 0.0
  %40 = vmatprep.subr.mxu0 0.0
  %41 = vmatpush1.msra.mxu0 0.0
  %42 = vmatprep.subr.mxu0 0.0
  %43 = vmatpush1.msra.mxu0 0.0
  %44 = vmatprep.subr.mxu0 0.0
  %45 = vmatpush1.msra.mxu0 0.0
  %46 = vmatprep.subr.mxu0 0.0
  %47 = vmatpush1.msra.mxu0 0.0
  %48 = vmatprep.subr.mxu0 0.0
  %49 = vmatpush1.msra.mxu0 0.0
  %50 = vmatprep.subr.mxu0 0.0
  %51 = vmatpush1.msra.mxu0 0.0
  %52 = vmatprep.subr.mxu0 0.0
  %53 = vmatpush1.msra.mxu0 0.0
  %54 = vmatprep.subr.mxu0 0.0
  %55 = vmatpush1.msra.mxu0 0.0
  %56 = vmatprep.subr.mxu0 0.0
  %57 = vmatpush1.msra.mxu0 0.0
  %58 = vmatprep.subr.mxu0 0.0
  %59 = vmatpush1.msra.mxu0 0.0
  %60 = vmatprep.subr.mxu0 0.0
  %61 = vmatpush1.msra.mxu0 0.0
  %62 = vmatprep.subr.mxu0 0.0
  %63 = vmatpush1.msra.mxu0 0.0
  %64 = vmatprep.subr.mxu0 0.0
  %65 = vmatpush1.msra.mxu0 0.0
  %66 = vmatprep.subr.mxu0 0.0
  %67 = vmatpush1.msra.mxu0 0.0
  %68 = vmatprep.subr.mxu0 0.0
  %69 = vmatpush1.msra.mxu0 0.0
  %70 = vmatprep.subr.mxu0 0.0
  %71 = vmatpush1.msra.mxu0 0.0
  %72 = vmatprep.subr.mxu0 0.0
  %73 = vmatpush1.msra.mxu0 0.0
  %74 = vmatprep.subr.mxu0 0.0
  %75 = vmatpush1.msra.mxu0 0.0
  %76 = vmatprep.subr.mxu0 0.0
  %77 = vmatpush1.msra.mxu0 0.0
  %78 = vmatprep.subr.mxu0 0.0
  %79 = vmatpush1.msra.mxu0 0.0
  %80 = vmatprep.subr.mxu0 0.0
  %81 = vmatpush1.msra.mxu0 0.0
  %82 = vmatprep.subr.mxu0 0.0
  %83 = vmatpush1.msra.mxu0 0.0
  %84 = vmatprep.subr.mxu0 0.0
  %85 = vmatpush1.msra.mxu0 0.0
  %86 = vmatprep.subr.mxu0 0.0
  %87 = vmatpush1.msra.mxu0 0.0
  %88 = vmatprep.subr.mxu0 0.0
  %89 = vmatpush1.msra.mxu0 0.0
  %90 = vmatprep.subr.mxu0 0.0
  %91 = vmatpush1.msra.mxu0 0.0
  %92 = vmatprep.mubr.f32.mxu0 0.0
  %93 = vmatmul.mubr.f32.gmra.mrb[0].mxu0 %v20
  %v94 = vpop.f32.mrb[0].mxu0
  %v95 = vadd.f32 0.0, %v94
  %v96 = vpop.f32.mrb[0].mxu0
  %97 = vmatprep.mubr.f32.mxu0 0.0
  %98 = vmatmul.mubr.f32.gmra.mrb[0].mxu0 %v23
  %v99 = vpop.f32.mrb[0].mxu0
  %v100 = vadd.f32 0.0, %v99
  %v101 = vpop.f32.mrb[0].mxu0
  %102 = vmatprep.mubr.f32.mxu0 0.0
  %103 = vmatmul.mubr.f32.gmra.mrb[0].mxu0 %v26
  %v104 = vpop.f32.mrb[0].mxu0
  %v105 = vadd.f32 0.0, %v104
  %v106 = vpop.f32.mrb[0].mxu0
  %107 = vdwg.mxu0
  %108 = vst.msk [vmem:[%s2] sm:$0xff] %vm18, %v95
  %109 = vst.msk [vmem:[%s2 + $0x8] sm:$0xff] %vm18, %v100
  %vm110 = vcmask 254976
  %111 = vst.msk [vmem:[%s2 + $0x10] sm:$0x3] %vm110, %v105
  // Predicated region
  $region10: #{_device_forward_rel.6} parent=0 // pred_check
    _
  $region11: #{_device_forward_rel.6} parent=0 // pred_check_branch
    %113 = sbr.rel (0) target = $region13
  $region12: #{_device_forward_rel.6} parent=0 // pred_region
    _
  $region13: #{_device_forward_rel.6} parent=0 // pred_fallthru
    _
  // Predicated region
  $region14: #{_device_forward_rel.6} parent=0 // pred_check
    _
  $region15: #{_device_forward_rel.6} parent=0 // pred_check_branch
    %115 = sbr.rel (0) target = $region17
  $region16: #{_device_forward_rel.6} parent=0 // pred_region
    _
  $region17: #{_device_forward_rel.6} parent=0 // pred_fallthru
    _

// kernel: _device_forward_rel.4
$region0: #{_device_forward_rel.4}
  #allocation0 [shape = 'u32[]', space=smem, size = 0x4, offset = 0x4, fixed_abs, tag = 'smem constant byte address 0x4 - core index']
  #allocation1 [shape = 'u32[144,128]{1,0:T(1,128)}', space=vmem, size = 0x12000, scoped, tag = 'internal scratch']
  %s0 = inlined_call_operand.vmem [shape: f32[12,32], index: 0, kind: input, shape index: {}]
  %s1 = inlined_call_operand.vmem [shape: f32[32,32], index: 1, kind: input, shape index: {}]
  %s2 = inlined_call_operand.vmem [shape: f32[12,32], index: 2, kind: output, shape index: {}]
  %s3 = sld [smem:[#allocation0]]
  $region18: #{_device_forward_rel.4} parent=0
    _
  %s5 = ssub.s32 1, %s3
  %s6 = scalar_select 0, %s5, %s3
  // Predicated region
  $region2: #{_device_forward_rel.4} parent=0 // pred_check
    _
  $region3: #{_device_forward_rel.4} parent=0 // pred_check_branch
    %8 = sbr.rel (0) target = $region5
  $region4: #{_device_forward_rel.4} parent=0 // pred_region
    _
  $region5: #{_device_forward_rel.4} parent=0 // pred_fallthru
    _
  // Predicated region
  $region6: #{_device_forward_rel.4} parent=0 // pred_check
    _
  $region7: #{_device_forward_rel.4} parent=0 // pred_check_branch
    %10 = sbr.rel (0) target = $region9
  $region8: #{_device_forward_rel.4} parent=0 // pred_region
    _
  $region9: #{_device_forward_rel.4} parent=0 // pred_fallthru
    _
  %v11 = vld [vmem:[%s0] sm:$0xff]
  %v12 = vld [vmem:[%s0 + $0x8] sm:$0xf]
  %v13 = vld [vmem:[%s1] sm:$0xff]
  %v14 = vld [vmem:[%s1 + $0x8] sm:$0xff]
  %v15 = vld [vmem:[%s1 + $0x10] sm:$0xff]
  %v16 = vld [vmem:[%s1 + $0x18] sm:$0xff]
  %vm17 = vcmask 261120
  %v19 = vsel %vm17, %v11, 0
  %v22 = vsel %vm17, %v12, 0
  %24 = vmatprep.subr.mxu0 0.0
  %25 = vmatpush1.msra.mxu0 %v13
  %26 = vmatprep.subr.mxu0 0.0
  %27 = vmatpush1.msra.mxu0 %v14
  %28 = vmatprep.subr.mxu0 0.0
  %29 = vmatpush1.msra.mxu0 %v15
  %30 = vmatprep.subr.mxu0 0.0
  %31 = vmatpush1.msra.mxu0 %v16
  %32 = vmatprep.subr.mxu0 0.0
  %33 = vmatpush1.msra.mxu0 0.0
  %34 = vmatprep.subr.mxu0 0.0
  %35 = vmatpush1.msra.mxu0 0.0
  %36 = vmatprep.subr.mxu0 0.0
  %37 = vmatpush1.msra.mxu0 0.0
  %38 = vmatprep.subr.mxu0 0.0
  %39 = vmatpush1.msra.mxu0 0.0
  %40 = vmatprep.subr.mxu0 0.0
  %41 = vmatpush1.msra.mxu0 0.0
  %42 = vmatprep.subr.mxu0 0.0
  %43 = vmatpush1.msra.mxu0 0.0
  %44 = vmatprep.subr.mxu0 0.0
  %45 = vmatpush1.msra.mxu0 0.0
  %46 = vmatprep.subr.mxu0 0.0
  %47 = vmatpush1.msra.mxu0 0.0
  %48 = vmatprep.subr.mxu0 0.0
  %49 = vmatpush1.msra.mxu0 0.0
  %50 = vmatprep.subr.mxu0 0.0
  %51 = vmatpush1.msra.mxu0 0.0
  %52 = vmatprep.subr.mxu0 0.0
  %53 = vmatpush1.msra.mxu0 0.0
  %54 = vmatprep.subr.mxu0 0.0
  %55 = vmatpush1.msra.mxu0 0.0
  %56 = vmatprep.subr.mxu0 0.0
  %57 = vmatpush1.msra.mxu0 0.0
  %58 = vmatprep.subr.mxu0 0.0
  %59 = vmatpush1.msra.mxu0 0.0
  %60 = vmatprep.subr.mxu0 0.0
  %61 = vmatpush1.msra.mxu0 0.0
  %62 = vmatprep.subr.mxu0 0.0
  %63 = vmatpush1.msra.mxu0 0.0
  %64 = vmatprep.subr.mxu0 0.0
  %65 = vmatpush1.msra.mxu0 0.0
  %66 = vmatprep.subr.mxu0 0.0
  %67 = vmatpush1.msra.mxu0 0.0
  %68 = vmatprep.subr.mxu0 0.0
  %69 = vmatpush1.msra.mxu0 0.0
  %70 = vmatprep.subr.mxu0 0.0
  %71 = vmatpush1.msra.mxu0 0.0
  %72 = vmatprep.subr.mxu0 0.0
  %73 = vmatpush1.msra.mxu0 0.0
  %74 = vmatprep.subr.mxu0 0.0
  %75 = vmatpush1.msra.mxu0 0.0
  %76 = vmatprep.subr.mxu0 0.0
  %77 = vmatpush1.msra.mxu0 0.0
  %78 = vmatprep.subr.mxu0 0.0
  %79 = vmatpush1.msra.mxu0 0.0
  %80 = vmatprep.subr.mxu0 0.0
  %81 = vmatpush1.msra.mxu0 0.0
  %82 = vmatprep.subr.mxu0 0.0
  %83 = vmatpush1.msra.mxu0 0.0
  %84 = vmatprep.subr.mxu0 0.0
  %85 = vmatpush1.msra.mxu0 0.0
  %86 = vmatprep.subr.mxu0 0.0
  %87 = vmatpush1.msra.mxu0 0.0
  %88 = vmatprep.mubr.f32.mxu0 0.0
  %89 = vmatmul.mubr.f32.gmra.mrb[0].mxu0 %v19
  %v90 = vpop.f32.mrb[0].mxu0
  %v91 = vadd.f32 0.0, %v90
  %v92 = vpop.f32.mrb[0].mxu0
  %93 = vmatprep.mubr.f32.mxu0 0.0
  %94 = vmatmul.mubr.f32.gmra.mrb[0].mxu0 %v22
  %v95 = vpop.f32.mrb[0].mxu0
  %v96 = vadd.f32 0.0, %v95
  %v97 = vpop.f32.mrb[0].mxu0
  %98 = vdwg.mxu0
  %99 = vst.msk [vmem:[%s2] sm:$0xff] %vm17, %v91
  %vm100 = vcmask 257024
  %101 = vst.msk [vmem:[%s2 + $0x8] sm:$0xf] %vm100, %v96
  // Predicated region
  $region10: #{_device_forward_rel.4} parent=0 // pred_check
    _
  $region11: #{_device_forward_rel.4} parent=0 // pred_check_branch
    %103 = sbr.rel (0) target = $region13
  $region12: #{_device_forward_rel.4} parent=0 // pred_region
    _
  $region13: #{_device_forward_rel.4} parent=0 // pred_fallthru
    _
  // Predicated region
  $region14: #{_device_forward_rel.4} parent=0 // pred_check
    _
  $region15: #{_device_forward_rel.4} parent=0 // pred_check_branch
    %105 = sbr.rel (0) target = $region17
  $region16: #{_device_forward_rel.4} parent=0 // pred_region
    _
  $region17: #{_device_forward_rel.4} parent=0 // pred_fallthru
    _

// kernel: _device_forward_rel.5
$region0: #{_device_forward_rel.5}
  #allocation0 [shape = 'u32[]', space=smem, size = 0x4, offset = 0x4, fixed_abs, tag = 'smem constant byte address 0x4 - core index']
  #allocation1 [shape = 'u32[144,128]{1,0:T(1,128)}', space=vmem, size = 0x12000, scoped, tag = 'internal scratch']
  %s0 = inlined_call_operand.vmem [shape: f32[3,11,32], index: 0, kind: input, shape index: {}]
  %s1 = inlined_call_operand.vmem [shape: f32[3,32,32], index: 1, kind: input, shape index: {}]
  %s2 = inlined_call_operand.vmem [shape: f32[3,8,32], index: 2, kind: input, shape index: {}]
  %s3 = inlined_call_operand.vmem [shape: f32[3,32,8], index: 3, kind: input, shape index: {}]
  %s4 = inlined_call_operand.vmem [shape: f32[3,11,11], index: 4, kind: input, shape index: {}]
  %s5 = inlined_call_operand.vmem [shape: f32[3,1,32], index: 5, kind: input, shape index: {}]
  %s6 = inlined_call_operand.vmem [shape: f32[3,11,32], index: 6, kind: output, shape index: {}]
  %s7 = sld [smem:[#allocation0]]
  $region57: #{_device_forward_rel.5} parent=0
    _
  %s9 = ssub.s32 1, %s7
  %s10 = scalar_select 0, %s9, %s7
  loop: start=0, step=1, limit=5
  $region2: #{_device_forward_rel.5} parent=0 // loop_pre_header
    _
  $region3: #{_device_forward_rel.5} parent=0 // loop_header
    %s12 = sphi 0, %s16
    %p13 = scmp.ge.s32.totalorder %s12, 5
    %s22 = sphi 0, %s24
    %s25 = sphi 0, %s22
    %s26 = sphi 0, %s25
    %s42 = sphi 0, %s26
    %s48 = sphi 0, %s50
    %s51 = sphi 0, %s48
    %s52 = sphi 0, %s51
    %s68 = sphi 0, %s52
    %s74 = sphi 0, %s76
    %s77 = sphi 0, %s74
    %s78 = sphi 0, %s77
    %s94 = sphi 0, %s78
    %s100 = sphi 0, %s102
    %s103 = sphi 0, %s100
    %s104 = sphi 0, %s103
    %s120 = sphi 0, %s104
    %s126 = sphi 0, %s128
    %s129 = sphi 0, %s126
    %s130 = sphi 0, %s129
    %s146 = sphi 0, %s130
    %s152 = sphi 0, %s154
    %s155 = sphi 0, %s152
    %s156 = sphi 0, %s155
    %s172 = sphi 0, %s156
    %s178 = sphi 0, %s180
    %s181 = sphi 0, %s178
    %s182 = sphi 0, %s181
    %s198 = sphi 0, %s182
  $region4: #{_device_forward_rel.5} parent=0 // loop_header_branch
    %15 = sbr.rel (%p13) target = $region8
  $region5: #{_device_forward_rel.5} parent=0 // loop_body
    %s17 = ssub.s32 %s12, 1
    %s18 = ssub.s32 %s12, 2
    %s19 = sadd.s32 %s12, 1
    %s20 = ssub.s32 %s12, %s19
    %p21 = scmp.eq.s32.totalorder %s20, 0
    %s23 = sadd.s32 %s22, 1
    %s24 = scalar_select %p21, %s22, %s23
    %p27 = pneg %p21
    %p28 = scmp.eq.s32.totalorder %s12, 2
    %p29 = por %p27, %p28
    %p30 = scmp.ne.s32.totalorder %s22, %s25
    %p31 = scmp.eq.s32.totalorder %s12, 0
    %p32 = por %p30, %p31
    %p33 = scmp.ne.s32.totalorder %s22, %s25
    %p34 = scmp.eq.s32.totalorder %s17, 2
    %p35 = por %p33, %p34
    %p36 = scmp.ne.s32.totalorder %s25, %s26
    %p37 = scmp.eq.s32.totalorder %s17, 0
    %p38 = por %p36, %p37
    %p39 = scmp.ne.s32.totalorder %s25, %s26
    %p40 = scmp.eq.s32.totalorder %s18, 2
    %p41 = por %p39, %p40
    %p43 = scmp.ne.s32.totalorder %s26, %s42
    %p44 = scmp.eq.s32.totalorder %s18, 0
    %p45 = por %p43, %p44
    %s46 = ssub.s32 %s12, %s19
    %p47 = scmp.eq.s32.totalorder %s46, 0
    %s49 = sadd.s32 %s48, 1
    %s50 = scalar_select %p47, %s48, %s49
    %p53 = pneg %p47
    %p54 = scmp.eq.s32.totalorder %s12, 2
    %p55 = por %p53, %p54
    %p56 = scmp.ne.s32.totalorder %s48, %s51
    %p57 = scmp.eq.s32.totalorder %s12, 0
    %p58 = por %p56, %p57
    %p59 = scmp.ne.s32.totalorder %s48, %s51
    %p60 = scmp.eq.s32.totalorder %s17, 2
    %p61 = por %p59, %p60
    %p62 = scmp.ne.s32.totalorder %s51, %s52
    %p63 = scmp.eq.s32.totalorder %s17, 0
    %p64 = por %p62, %p63
    %p65 = scmp.ne.s32.totalorder %s51, %s52
    %p66 = scmp.eq.s32.totalorder %s18, 2
    %p67 = por %p65, %p66
    %p69 = scmp.ne.s32.totalorder %s52, %s68
    %p70 = scmp.eq.s32.totalorder %s18, 0
    %p71 = por %p69, %p70
    %s72 = ssub.s32 %s12, %s19
    %p73 = scmp.eq.s32.totalorder %s72, 0
    %s75 = sadd.s32 %s74, 1
    %s76 = scalar_select %p73, %s74, %s75
    %p79 = pneg %p73
    %p80 = scmp.eq.s32.totalorder %s12, 2
    %p81 = por %p79, %p80
    %p82 = scmp.ne.s32.totalorder %s74, %s77
    %p83 = scmp.eq.s32.totalorder %s12, 0
    %p84 = por %p82, %p83
    %p85 = scmp.ne.s32.totalorder %s74, %s77
    %p86 = scmp.eq.s32.totalorder %s17, 2
    %p87 = por %p85, %p86
    %p88 = scmp.ne.s32.totalorder %s77, %s78
    %p89 = scmp.eq.s32.totalorder %s17, 0
    %p90 = por %p88, %p89
    %p91 = scmp.ne.s32.totalorder %s77, %s78
    %p92 = scmp.eq.s32.totalorder %s18, 2
    %p93 = por %p91, %p92
    %p95 = scmp.ne.s32.totalorder %s78, %s94
    %p96 = scmp.eq.s32.totalorder %s18, 0
    %p97 = por %p95, %p96
    %s98 = ssub.s32 %s12, %s19
    %p99 = scmp.eq.s32.totalorder %s98, 0
    %s101 = sadd.s32 %s100, 1
    %s102 = scalar_select %p99, %s100, %s101
    %p105 = pneg %p99
    %p106 = scmp.eq.s32.totalorder %s12, 2
    %p107 = por %p105, %p106
    %p108 = scmp.ne.s32.totalorder %s100, %s103
    %p109 = scmp.eq.s32.totalorder %s12, 0
    %p110 = por %p108, %p109
    %p111 = scmp.ne.s32.totalorder %s100, %s103
    %p112 = scmp.eq.s32.totalorder %s17, 2
    %p113 = por %p111, %p112
    %p114 = scmp.ne.s32.totalorder %s103, %s104
    %p115 = scmp.eq.s32.totalorder %s17, 0
    %p116 = por %p114, %p115
    %p117 = scmp.ne.s32.totalorder %s103, %s104
    %p118 = scmp.eq.s32.totalorder %s18, 2
    %p119 = por %p117, %p118
    %p121 = scmp.ne.s32.totalorder %s104, %s120
    %p122 = scmp.eq.s32.totalorder %s18, 0
    %p123 = por %p121, %p122
    %s124 = ssub.s32 %s12, %s19
    %p125 = scmp.eq.s32.totalorder %s124, 0
    %s127 = sadd.s32 %s126, 1
    %s128 = scalar_select %p125, %s126, %s127
    %p131 = pneg %p125
    %p132 = scmp.eq.s32.totalorder %s12, 2
    %p133 = por %p131, %p132
    %p134 = scmp.ne.s32.totalorder %s126, %s129
    %p135 = scmp.eq.s32.totalorder %s12, 0
    %p136 = por %p134, %p135
    %p137 = scmp.ne.s32.totalorder %s126, %s129
    %p138 = scmp.eq.s32.totalorder %s17, 2
    %p139 = por %p137, %p138
    %p140 = scmp.ne.s32.totalorder %s129, %s130
    %p141 = scmp.eq.s32.totalorder %s17, 0
    %p142 = por %p140, %p141
    %p143 = scmp.ne.s32.totalorder %s129, %s130
    %p144 = scmp.eq.s32.totalorder %s18, 2
    %p145 = por %p143, %p144
    %p147 = scmp.ne.s32.totalorder %s130, %s146
    %p148 = scmp.eq.s32.totalorder %s18, 0
    %p149 = por %p147, %p148
    %s150 = ssub.s32 %s12, %s19
    %p151 = scmp.eq.s32.totalorder %s150, 0
    %s153 = sadd.s32 %s152, 1
    %s154 = scalar_select %p151, %s152, %s153
    %p157 = pneg %p151
    %p158 = scmp.eq.s32.totalorder %s12, 2
    %p159 = por %p157, %p158
    %p160 = scmp.ne.s32.totalorder %s152, %s155
    %p161 = scmp.eq.s32.totalorder %s12, 0
    %p162 = por %p160, %p161
    %p163 = scmp.ne.s32.totalorder %s152, %s155
    %p164 = scmp.eq.s32.totalorder %s17, 2
    %p165 = por %p163, %p164
    %p166 = scmp.ne.s32.totalorder %s155, %s156
    %p167 = scmp.eq.s32.totalorder %s17, 0
    %p168 = por %p166, %p167
    %p169 = scmp.ne.s32.totalorder %s155, %s156
    %p170 = scmp.eq.s32.totalorder %s18, 2
    %p171 = por %p169, %p170
    %p173 = scmp.ne.s32.totalorder %s156, %s172
    %p174 = scmp.eq.s32.totalorder %s18, 0
    %p175 = por %p173, %p174
    %s176 = ssub.s32 %s12, %s19
    %p177 = scmp.eq.s32.totalorder %s176, 0
    %s179 = sadd.s32 %s178, 1
    %s180 = scalar_select %p177, %s178, %s179
    %p183 = pneg %p177
    %p184 = scmp.eq.s32.totalorder %s12, 2
    %p185 = por %p183, %p184
    %p186 = scmp.ne.s32.totalorder %s178, %s181
    %p187 = scmp.eq.s32.totalorder %s12, 0
    %p188 = por %p186, %p187
    %p189 = scmp.ne.s32.totalorder %s178, %s181
    %p190 = scmp.eq.s32.totalorder %s17, 2
    %p191 = por %p189, %p190
    %p192 = scmp.ne.s32.totalorder %s181, %s182
    %p193 = scmp.eq.s32.totalorder %s17, 0
    %p194 = por %p192, %p193
    %p195 = scmp.ne.s32.totalorder %s181, %s182
    %p196 = scmp.eq.s32.totalorder %s18, 2
    %p197 = por %p195, %p196
    %p199 = scmp.ne.s32.totalorder %s182, %s198
    %p200 = scmp.eq.s32.totalorder %s18, 0
    %p201 = por %p199, %p200
    %p202 = scmp.le.s32.totalorder 1, %s12
    %p203 = scmp.lt.s32.totalorder %s12, 4
    %p204 = pnand %p202, %p203
    %p205 = pneg %p204
    // Predicated region
    $region9: #{_device_forward_rel.5} parent=5 // pred_check
      _
    $region10: #{_device_forward_rel.5} parent=5 // pred_check_branch
      %207 = sbr.rel (%p204) target = $region12
    $region11: #{_device_forward_rel.5} parent=5 // pred_region
      %s208 = ssub.s32 %s12, 1
    $region12: #{_device_forward_rel.5} parent=5 // pred_fallthru
      _
    %p209 = scmp.lt.s32.totalorder %s12, 3
    // Predicated region
    $region13: #{_device_forward_rel.5} parent=5 // pred_check
      %p210 = pneg %p209
    $region14: #{_device_forward_rel.5} parent=5 // pred_check_branch
      %212 = sbr.rel (%p210) target = $region16
    $region15: #{_device_forward_rel.5} parent=5 // pred_region
      // Predicated region
      $region17: #{_device_forward_rel.5} parent=15 // pred_check
        %p213 = pneg %p32
      $region18: #{_device_forward_rel.5} parent=15 // pred_check_branch
        %215 = sbr.rel (%p213) target = $region20
      $region19: #{_device_forward_rel.5} parent=15 // pred_region
        %p216 = scmp.lt.s32.totalorder %s12, 2
        %s217 = scalar_select %p216, %s12, 2
        %s218 = smul.addr %s217, 2
        %s219 = smul.addr %s218, 8
        %s220 = scalar_lea.vmem %s0, %s219
      $region20: #{_device_forward_rel.5} parent=15 // pred_fallthru
        _
      // Predicated region
      $region21: #{_device_forward_rel.5} parent=15 // pred_check
        %p221 = pneg %p58
      $region22: #{_device_forward_rel.5} parent=15 // pred_check_branch
        %223 = sbr.rel (%p221) target = $region24
      $region23: #{_device_forward_rel.5} parent=15 // pred_region
        %p224 = scmp.lt.s32.totalorder %s12, 2
        %s225 = scalar_select %p224, %s12, 2
        %s226 = smul.addr %s225, 4
        %s227 = smul.addr %s226, 8
        %s228 = scalar_lea.vmem %s1, %s227
      $region24: #{_device_forward_rel.5} parent=15 // pred_fallthru
        _
      // Predicated region
      $region25: #{_device_forward_rel.5} parent=15 // pred_check
        %p229 = pneg %p84
      $region26: #{_device_forward_rel.5} parent=15 // pred_check_branch
        %231 = sbr.rel (%p229) target = $region28
      $region27: #{_device_forward_rel.5} parent=15 // pred_region
        %p232 = scmp.lt.s32.totalorder %s12, 2
        %s233 = scalar_select %p232, %s12, 2
        %s234 = smul.addr %s233, 8
        %s235 = scalar_lea.vmem %s2, %s234
      $region28: #{_device_forward_rel.5} parent=15 // pred_fallthru
        _
      // Predicated region
      $region29: #{_device_forward_rel.5} parent=15 // pred_check
        %p236 = pneg %p110
      $region30: #{_device_forward_rel.5} parent=15 // pred_check_branch
        %238 = sbr.rel (%p236) target = $region32
      $region31: #{_device_forward_rel.5} parent=15 // pred_region
        %p239 = scmp.lt.s32.totalorder %s12, 2
        %s240 = scalar_select %p239, %s12, 2
        %s241 = smul.addr %s240, 4
        %s242 = smul.addr %s241, 8
        %s243 = scalar_lea.vmem %s3, %s242
      $region32: #{_device_forward_rel.5} parent=15 // pred_fallthru
        _
      // Predicated region
      $region33: #{_device_forward_rel.5} parent=15 // pred_check
        %p244 = pneg %p136
      $region34: #{_device_forward_rel.5} parent=15 // pred_check_branch
        %246 = sbr.rel (%p244) target = $region36
      $region35: #{_device_forward_rel.5} parent=15 // pred_region
        %p247 = scmp.lt.s32.totalorder %s12, 2
        %s248 = scalar_select %p247, %s12, 2
        %s249 = smul.addr %s248, 2
        %s250 = smul.addr %s249, 8
        %s251 = scalar_lea.vmem %s4, %s250
      $region36: #{_device_forward_rel.5} parent=15 // pred_fallthru
        _
      // Predicated region
      $region37: #{_device_forward_rel.5} parent=15 // pred_check
        %p252 = pneg %p162
      $region38: #{_device_forward_rel.5} parent=15 // pred_check_branch
        %254 = sbr.rel (%p252) target = $region40
      $region39: #{_device_forward_rel.5} parent=15 // pred_region
        %p255 = scmp.lt.s32.totalorder %s12, 2
        %s256 = scalar_select %p255, %s12, 2
        %s257 = scalar_lea.vmem %s5, %s256
      $region40: #{_device_forward_rel.5} parent=15 // pred_fallthru
        _
    $region16: #{_device_forward_rel.5} parent=5 // pred_fallthru
      _
    %p258 = scmp.le.s32.totalorder 1, %s12
    %p259 = scmp.lt.s32.totalorder %s12, 4
    %p260 = pnand %p258, %p259
    %p261 = pneg %p260
    // Predicated region
    $region41: #{_device_forward_rel.5} parent=5 // pred_check
      _
    $region42: #{_device_forward_rel.5} parent=5 // pred_check_branch
      %263 = sbr.rel (%p260) target = $region44
    $region43: #{_device_forward_rel.5} parent=5 // pred_region
      %s264 = ssub.s32 %s12, 1
      %p265 = scmp.lt.s32.totalorder %s17, 2
      %s266 = scalar_select %p265, %s17, 2
      %s267 = smul.addr %s266, 2
      %s268 = smul.addr %s267, 8
      %s269 = scalar_lea.vmem %s0, %s268
      %p270 = pneg %p38
      %p271 = pneg %p35
      %p272 = scmp.lt.s32.totalorder %s17, 2
      %s273 = scalar_select %p272, %s17, 2
      %s274 = smul.addr %s273, 4
      %s275 = smul.addr %s274, 8
      %s276 = scalar_lea.vmem %s1, %s275
      %p277 = pneg %p64
      %p278 = pneg %p61
      %p279 = scmp.lt.s32.totalorder %s17, 2
      %s280 = scalar_select %p279, %s17, 2
      %s281 = smul.addr %s280, 8
      %s282 = scalar_lea.vmem %s2, %s281
      %p283 = pneg %p90
      %p284 = pneg %p87
      %p285 = scmp.lt.s32.totalorder %s17, 2
      %s286 = scalar_select %p285, %s17, 2
      %s287 = smul.addr %s286, 4
      %s288 = smul.addr %s287, 8
      %s289 = scalar_lea.vmem %s3, %s288
      %p290 = pneg %p116
      %p291 = pneg %p113
      %p292 = scmp.lt.s32.totalorder %s17, 2
      %s293 = scalar_select %p292, %s17, 2
      %s294 = smul.addr %s293, 2
      %s295 = smul.addr %s294, 8
      %s296 = scalar_lea.vmem %s4, %s295
      %p297 = pneg %p142
      %p298 = pneg %p139
      %p299 = scmp.lt.s32.totalorder %s17, 2
      %s300 = scalar_select %p299, %s17, 2
      %s301 = scalar_lea.vmem %s5, %s300
      %p302 = pneg %p168
      %p303 = pneg %p165
      %p304 = pneg %p194
      %p305 = pneg %p191
      %p306 = scmp.lt.s32.totalorder %s17, 2
      %s307 = scalar_select %p306, %s17, 2
      %s308 = smul.addr %s307, 2
      %s309 = smul.addr %s308, 8
      %s310 = scalar_lea.vmem %s6, %s309
      %p311 = scmp.lt.s32.totalorder %s17, 2
      %s312 = scalar_select %p311, %s17, 2
      %s313 = smul.addr %s312, 2
      %s314 = smul.addr %s313, 8
      %s315 = scalar_lea.vmem %s0, %s314
      %p316 = scmp.lt.s32.totalorder %s17, 2
      %s317 = scalar_select %p316, %s17, 2
      %s318 = smul.addr %s317, 4
      %s319 = smul.addr %s318, 8
      %s320 = scalar_lea.vmem %s1, %s319
      %p321 = scmp.lt.s32.totalorder %s17, 2
      %s322 = scalar_select %p321, %s17, 2
      %s323 = smul.addr %s322, 8
      %s324 = scalar_lea.vmem %s2, %s323
      %p325 = scmp.lt.s32.totalorder %s17, 2
      %s326 = scalar_select %p325, %s17, 2
      %s327 = smul.addr %s326, 4
      %s328 = smul.addr %s327, 8
      %s329 = scalar_lea.vmem %s3, %s328
      %p330 = scmp.lt.s32.totalorder %s17, 2
      %s331 = scalar_select %p330, %s17, 2
      %s332 = smul.addr %s331, 2
      %s333 = smul.addr %s332, 8
      %s334 = scalar_lea.vmem %s4, %s333
      %p335 = scmp.lt.s32.totalorder %s17, 2
      %s336 = scalar_select %p335, %s17, 2
      %s337 = scalar_lea.vmem %s5, %s336
      %p338 = scmp.lt.s32.totalorder %s17, 2
      %s339 = scalar_select %p338, %s17, 2
      %s340 = smul.addr %s339, 2
      %s341 = smul.addr %s340, 8
      %s342 = scalar_lea.vmem %s6, %s341
      %v343 = vld [vmem:[%s315] sm:$0xff]
      %v344 = vld [vmem:[%s315 + $0x8] sm:$0x7]
      %v345 = vld [vmem:[%s320] sm:$0xff]
      %v346 = vld [vmem:[%s320 + $0x8] sm:$0xff]
      %v347 = vld [vmem:[%s320 + $0x10] sm:$0xff]
      %v348 = vld [vmem:[%s320 + $0x18] sm:$0xff]
      %vm349 = vcmask 261120
      %v351 = vsel %vm349, %v343, 0
      %v354 = vsel %vm349, %v344, 0
      %356 = vmatprep.subr.mxu0 0.0
      %357 = vmatpush1.msra.mxu0 %v345
      %358 = vmatprep.subr.mxu0 0.0
      %359 = vmatpush1.msra.mxu0 %v346
      %360 = vmatprep.subr.mxu0 0.0
      %361 = vmatpush1.msra.mxu0 %v347
      %362 = vmatprep.subr.mxu0 0.0
      %363 = vmatpush1.msra.mxu0 %v348
      %364 = vmatprep.subr.mxu0 0.0
      %365 = vmatpush1.msra.mxu0 0.0
      %366 = vmatprep.subr.mxu0 0.0
      %367 = vmatpush1.msra.mxu0 0.0
      %368 = vmatprep.subr.mxu0 0.0
      %369 = vmatpush1.msra.mxu0 0.0
      %370 = vmatprep.subr.mxu0 0.0
      %371 = vmatpush1.msra.mxu0 0.0
      %372 = vmatprep.subr.mxu0 0.0
      %373 = vmatpush1.msra.mxu0 0.0
      %374 = vmatprep.subr.mxu0 0.0
      %375 = vmatpush1.msra.mxu0 0.0
      %376 = vmatprep.subr.mxu0 0.0
      %377 = vmatpush1.msra.mxu0 0.0
      %378 = vmatprep.subr.mxu0 0.0
      %379 = vmatpush1.msra.mxu0 0.0
      %380 = vmatprep.subr.mxu0 0.0
      %381 = vmatpush1.msra.mxu0 0.0
      %382 = vmatprep.subr.mxu0 0.0
      %383 = vmatpush1.msra.mxu0 0.0
      %384 = vmatprep.subr.mxu0 0.0
      %385 = vmatpush1.msra.mxu0 0.0
      %386 = vmatprep.subr.mxu0 0.0
      %387 = vmatpush1.msra.mxu0 0.0
      %388 = vmatprep.subr.mxu0 0.0
      %389 = vmatpush1.msra.mxu0 0.0
      %390 = vmatprep.subr.mxu0 0.0
      %391 = vmatpush1.msra.mxu0 0.0
      %392 = vmatprep.subr.mxu0 0.0
      %393 = vmatpush1.msra.mxu0 0.0
      %394 = vmatprep.subr.mxu0 0.0
      %395 = vmatpush1.msra.mxu0 0.0
      %396 = vmatprep.subr.mxu0 0.0
      %397 = vmatpush1.msra.mxu0 0.0
      %398 = vmatprep.subr.mxu0 0.0
      %399 = vmatpush1.msra.mxu0 0.0
      %400 = vmatprep.subr.mxu0 0.0
      %401 = vmatpush1.msra.mxu0 0.0
      %402 = vmatprep.subr.mxu0 0.0
      %403 = vmatpush1.msra.mxu0 0.0
      %404 = vmatprep.subr.mxu0 0.0
      %405 = vmatpush1.msra.mxu0 0.0
      %406 = vmatprep.subr.mxu0 0.0
      %407 = vmatpush1.msra.mxu0 0.0
      %408 = vmatprep.subr.mxu0 0.0
      %409 = vmatpush1.msra.mxu0 0.0
      %410 = vmatprep.subr.mxu0 0.0
      %411 = vmatpush1.msra.mxu0 0.0
      %412 = vmatprep.subr.mxu0 0.0
      %413 = vmatpush1.msra.mxu0 0.0
      %414 = vmatprep.subr.mxu0 0.0
      %415 = vmatpush1.msra.mxu0 0.0
      %416 = vmatprep.subr.mxu0 0.0
      %417 = vmatpush1.msra.mxu0 0.0
      %418 = vmatprep.subr.mxu0 0.0
      %419 = vmatpush1.msra.mxu0 0.0
      %420 = vmatprep.mubr.f32.mxu0 0.0
      %421 = vmatmul.mubr.f32.gmra.mrb[0].mxu0 %v351
      %v422 = vpop.f32.mrb[0].mxu0
      %v423 = vadd.f32 0.0, %v422
      %v424 = vpop.f32.mrb[0].mxu0
      %425 = vmatprep.mubr.f32.mxu0 0.0
      %426 = vmatmul.mubr.f32.gmra.mrb[0].mxu0 %v354
      %v427 = vpop.f32.mrb[0].mxu0
      %v428 = vadd.f32 0.0, %v427
      %v429 = vpop.f32.mrb[0].mxu0
      %430 = vdwg.mxu0
      %v431 = vld [vmem:[%s324] sm:$0xff]
      %v432 = vld [vmem:[%s329] sm:$0xff]
      %v433 = vld [vmem:[%s329 + $0x8] sm:$0xff]
      %v434 = vld [vmem:[%s329 + $0x10] sm:$0xff]
      %v435 = vld [vmem:[%s329 + $0x18] sm:$0xff]
      %v436 = vld [vmem:[%s334] sm:$0xff]
      %v437 = vld [vmem:[%s334 + $0x8] sm:$0x7]
      %v439 = vsel %vm349, %v423, 0
      %v442 = vsel %vm349, %v428, 0
      %444 = vmatprep.subr.mxu0 0.0
      %445 = vmatpush1.msra.mxu0 %v432
      %446 = vmatprep.subr.mxu0 0.0
      %447 = vmatpush1.msra.mxu0 %v433
      %448 = vmatprep.subr.mxu0 0.0
      %449 = vmatpush1.msra.mxu0 %v434
      %450 = vmatprep.subr.mxu0 0.0
      %451 = vmatpush1.msra.mxu0 %v435
      %452 = vmatprep.subr.mxu0 0.0
      %453 = vmatpush1.msra.mxu0 0.0
      %454 = vmatprep.subr.mxu0 0.0
      %455 = vmatpush1.msra.mxu0 0.0
      %456 = vmatprep.subr.mxu0 0.0
      %457 = vmatpush1.msra.mxu0 0.0
      %458 = vmatprep.subr.mxu0 0.0
      %459 = vmatpush1.msra.mxu0 0.0
      %460 = vmatprep.subr.mxu0 0.0
      %461 = vmatpush1.msra.mxu0 0.0
      %462 = vmatprep.subr.mxu0 0.0
      %463 = vmatpush1.msra.mxu0 0.0
      %464 = vmatprep.subr.mxu0 0.0
      %465 = vmatpush1.msra.mxu0 0.0
      %466 = vmatprep.subr.mxu0 0.0
      %467 = vmatpush1.msra.mxu0 0.0
      %468 = vmatprep.subr.mxu0 0.0
      %469 = vmatpush1.msra.mxu0 0.0
      %470 = vmatprep.subr.mxu0 0.0
      %471 = vmatpush1.msra.mxu0 0.0
      %472 = vmatprep.subr.mxu0 0.0
      %473 = vmatpush1.msra.mxu0 0.0
      %474 = vmatprep.subr.mxu0 0.0
      %475 = vmatpush1.msra.mxu0 0.0
      %476 = vmatprep.subr.mxu0 0.0
      %477 = vmatpush1.msra.mxu0 0.0
      %478 = vmatprep.subr.mxu0 0.0
      %479 = vmatpush1.msra.mxu0 0.0
      %480 = vmatprep.subr.mxu0 0.0
      %481 = vmatpush1.msra.mxu0 0.0
      %482 = vmatprep.subr.mxu0 0.0
      %483 = vmatpush1.msra.mxu0 0.0
      %484 = vmatprep.subr.mxu0 0.0
      %485 = vmatpush1.msra.mxu0 0.0
      %486 = vmatprep.subr.mxu0 0.0
      %487 = vmatpush1.msra.mxu0 0.0
      %488 = vmatprep.subr.mxu0 0.0
      %489 = vmatpush1.msra.mxu0 0.0
      %490 = vmatprep.subr.mxu0 0.0
      %491 = vmatpush1.msra.mxu0 0.0
      %492 = vmatprep.subr.mxu0 0.0
      %493 = vmatpush1.msra.mxu0 0.0
      %494 = vmatprep.subr.mxu0 0.0
      %495 = vmatpush1.msra.mxu0 0.0
      %496 = vmatprep.subr.mxu0 0.0
      %497 = vmatpush1.msra.mxu0 0.0
      %498 = vmatprep.subr.mxu0 0.0
      %499 = vmatpush1.msra.mxu0 0.0
      %500 = vmatprep.subr.mxu0 0.0
      %501 = vmatpush1.msra.mxu0 0.0
      %502 = vmatprep.subr.mxu0 0.0
      %503 = vmatpush1.msra.mxu0 0.0
      %504 = vmatprep.subr.mxu0 0.0
      %505 = vmatpush1.msra.mxu0 0.0
      %506 = vmatprep.subr.mxu0 0.0
      %507 = vmatpush1.msra.mxu0 0.0
      %508 = vmatprep.mubr.f32.mxu0 0.0
      %509 = vmatmul.mubr.f32.gmra.mrb[0].mxu0 %v439
      %v510 = vpop.f32.mrb[0].mxu0
      %v511 = vadd.f32 0.0, %v510
      %v512 = vpop.f32.mrb[0].mxu0
      %513 = vmatprep.mubr.f32.mxu0 0.0
      %514 = vmatmul.mubr.f32.gmra.mrb[0].mxu0 %v442
      %v515 = vpop.f32.mrb[0].mxu0
      %v516 = vadd.f32 0.0, %v515
      %v517 = vpop.f32.mrb[0].mxu0
      %518 = vdwg.mxu0
      %v520 = vsel %vm349, %v431, 0
      %522 = vmatprep.subr.mxu0 0.0
      %523 = vmatpush1.xpose.msra.mxu0 %v439
      %524 = vmatprep.subr.mxu0 0.0
      %525 = vmatpush1.xpose.msra.mxu0 %v442
      %526 = vmatprep.subr.mxu0 0.0
      %527 = vmatpush1.xpose.msra.mxu0 0.0
      %528 = vmatprep.subr.mxu0 0.0
      %529 = vmatpush1.xpose.msra.mxu0 0.0
      %530 = vmatprep.subr.mxu0 0.0
      %531 = vmatpush1.xpose.msra.mxu0 0.0
      %532 = vmatprep.subr.mxu0 0.0
      %533 = vmatpush1.xpose.msra.mxu0 0.0
      %534 = vmatprep.subr.mxu0 0.0
      %535 = vmatpush1.xpose.msra.mxu0 0.0
      %536 = vmatprep.subr.mxu0 0.0
      %537 = vmatpush1.xpose.msra.mxu0 0.0
      %538 = vmatprep.subr.mxu0 0.0
      %539 = vmatpush1.xpose.msra.mxu0 0.0
      %540 = vmatprep.subr.mxu0 0.0
      %541 = vmatpush1.xpose.msra.mxu0 0.0
      %542 = vmatprep.subr.mxu0 0.0
      %543 = vmatpush1.xpose.msra.mxu0 0.0
      %544 = vmatprep.subr.mxu0 0.0
      %545 = vmatpush1.xpose.msra.mxu0 0.0
      %546 = vmatprep.subr.mxu0 0.0
      %547 = vmatpush1.xpose.msra.mxu0 0.0
      %548 = vmatprep.subr.mxu0 0.0
      %549 = vmatpush1.xpose.msra.mxu0 0.0
      %550 = vmatprep.subr.mxu0 0.0
      %551 = vmatpush1.xpose.msra.mxu0 0.0
      %552 = vmatprep.subr.mxu0 0.0
      %553 = vmatpush1.xpose.msra.mxu0 0.0
      %554 = vmatprep.subr.mxu0 0.0
      %555 = vmatpush1.xpose.msra.mxu0 0.0
      %556 = vmatprep.subr.mxu0 0.0
      %557 = vmatpush1.xpose.msra.mxu0 0.0
      %558 = vmatprep.subr.mxu0 0.0
      %559 = vmatpush1.xpose.msra.mxu0 0.0
      %560 = vmatprep.subr.mxu0 0.0
      %561 = vmatpush1.xpose.msra.mxu0 0.0
      %562 = vmatprep.subr.mxu0 0.0
      %563 = vmatpush1.xpose.msra.mxu0 0.0
      %564 = vmatprep.subr.mxu0 0.0
      %565 = vmatpush1.xpose.msra.mxu0 0.0
      %566 = vmatprep.subr.mxu0 0.0
      %567 = vmatpush1.xpose.msra.mxu0 0.0
      %568 = vmatprep.subr.mxu0 0.0
      %569 = vmatpush1.xpose.msra.mxu0 0.0
      %570 = vmatprep.subr.mxu0 0.0
      %571 = vmatpush1.xpose.msra.mxu0 0.0
      %572 = vmatprep.subr.mxu0 0.0
      %573 = vmatpush1.xpose.msra.mxu0 0.0
      %574 = vmatprep.subr.mxu0 0.0
      %575 = vmatpush1.xpose.msra.mxu0 0.0
      %576 = vmatprep.subr.mxu0 0.0
      %577 = vmatpush1.xpose.msra.mxu0 0.0
      %578 = vmatprep.subr.mxu0 0.0
      %579 = vmatpush1.xpose.msra.mxu0 0.0
      %580 = vmatprep.subr.mxu0 0.0
      %581 = vmatpush1.xpose.msra.mxu0 0.0
      %582 = vmatprep.subr.mxu0 0.0
      %583 = vmatpush1.xpose.msra.mxu0 0.0
      %584 = vmatprep.subr.mxu0 0.0
      %585 = vmatpush1.xpose.msra.mxu0 0.0
      %586 = vmatprep.mubr.f32.mxu0 0.0
      %587 = vmatmul.mubr.f32.gmra.mrb[0].mxu0 %v520
      %v588 = vpop.f32.mrb[0].mxu0
      %v589 = vadd.f32 0.0, %v588
      %v590 = vpop.f32.mrb[0].mxu0
      %591 = vdwg.mxu0
      %593 = vset.pattern.permute.xlu0 0
      %594 = vperm.xlu0 %593, %v511
      %v595 = vpop.permute.xlu0 %594
      %598 = vset.pattern.permute.xlu0 0
      %599 = vperm.xlu0 %598, %v516
      %v600 = vpop.permute.xlu0 %599
      %v602 = vlaneseq
      %v603 = vshrl.u32 %v602, 7
      %v604 = vsub.s32 0, %v603
      %v605 = vrot.slane %v589, %v604
      %v606 = vadd.f32 %v595, %v605
      %v607 = vadd.f32 %v600, %v605
      %v608 = vmul.f32 %v606, 0.2
      %v609 = vmul.f32 %v607, 0.2
      %v610 = vmax.f32 %v606, %v608
      %v611 = vmax.f32 %v607, %v609
      %v612 = vadd.f32 %v610, %v436
      %v613 = vadd.f32 %v611, %v437
      %vm614 = vcmask 89088
      %v615 = vsel %vm614, %v612, -inf
      %616 = vmax.xlane.f32.xlu0 %v615
      %v617 = vpop.xlane.xlu0 %616
      %vm618 = vcmask 83968
      %v619 = vsel %vm618, %v613, -inf
      %620 = vmax.xlane.f32.xlu0 %v619
      %v621 = vpop.xlane.xlu0 %620
      %v622 = vsub.f32 %v612, %v617
      %v623 = vsub.f32 %v613, %v621
      %v624 = vmul.f32 %v622, 1.442695
      %v625 = vpow.pop %v624
      %v626 = vmul.f32 %v623, 1.442695
      %v627 = vpow.pop %v626
      %v628 = vsel %vm614, %v625, 0.0
      %629 = vadd.xlane.f32.xlu0 %v628
      %v630 = vpop.xlane.xlu0 %629
      %v631 = vsel %vm618, %v627, 0.0
      %632 = vadd.xlane.f32.xlu0 %v631
      %v633 = vpop.xlane.xlu0 %632
      %v634 = vrcp.pop %v630
      %v635 = vrcp.pop %v633
      %v636 = vmul.f32 %v625, %v634
      %v637 = vmul.f32 %v627, %v635
      %638 = vset.pattern.permute.xlu0 1
      %639 = vperm.xlu0 %638, %v511
      %v640 = vpop.permute.xlu0 %639
      %642 = vset.pattern.permute.xlu0 1
      %643 = vperm.xlu0 %642, %v516
      %v644 = vpop.permute.xlu0 %643
      %v646 = vlaneseq
      %v647 = vshrl.u32 %v646, 7
      %v648 = vsub.s32 1, %v647
      %v649 = vrot.slane %v589, %v648
      %v650 = vadd.f32 %v640, %v649
      %v651 = vadd.f32 %v644, %v649
      %v652 = vmul.f32 %v650, 0.2
      %v653 = vmul.f32 %v651, 0.2
      %v654 = vmax.f32 %v650, %v652
      %v655 = vmax.f32 %v651, %v653
      %v656 = vadd.f32 %v654, %v436
      %v657 = vadd.f32 %v655, %v437
      %v658 = vsel %vm614, %v656, -inf
      %659 = vmax.xlane.f32.xlu0 %v658
      %v660 = vpop.xlane.xlu0 %659
      %v661 = vsel %vm618, %v657, -inf
      %662 = vmax.xlane.f32.xlu0 %v661
      %v663 = vpop.xlane.xlu0 %662
      %v664 = vsub.f32 %v656, %v660
      %v665 = vsub.f32 %v657, %v663
      %v666 = vmul.f32 %v664, 1.442695
      %v667 = vpow.pop %v666
      %v668 = vmul.f32 %v665, 1.442695
      %v669 = vpow.pop %v668
      %v670 = vsel %vm614, %v667, 0.0
      %671 = vadd.xlane.f32.xlu0 %v670
      %v672 = vpop.xlane.xlu0 %671
      %v673 = vsel %vm618, %v669, 0.0
      %674 = vadd.xlane.f32.xlu0 %v673
      %v675 = vpop.xlane.xlu0 %674
      %v676 = vrcp.pop %v672
      %v677 = vrcp.pop %v675
      %v678 = vmul.f32 %v667, %v676
      %v679 = vmul.f32 %v669, %v677
      %680 = vset.pattern.permute.xlu0 2
      %681 = vperm.xlu0 %680, %v511
      %v682 = vpop.permute.xlu0 %681
      %684 = vset.pattern.permute.xlu0 2
      %685 = vperm.xlu0 %684, %v516
      %v686 = vpop.permute.xlu0 %685
      %v688 = vlaneseq
      %v689 = vshrl.u32 %v688, 7
      %v690 = vsub.s32 2, %v689
      %v691 = vrot.slane %v589, %v690
      %v692 = vadd.f32 %v682, %v691
      %v693 = vadd.f32 %v686, %v691
      %v694 = vmul.f32 %v692, 0.2
      %v695 = vmul.f32 %v693, 0.2
      %v696 = vmax.f32 %v692, %v694
      %v697 = vmax.f32 %v693, %v695
      %v698 = vadd.f32 %v696, %v436
      %v699 = vadd.f32 %v697, %v437
      %v700 = vsel %vm614, %v698, -inf
      %701 = vmax.xlane.f32.xlu0 %v700
      %v702 = vpop.xlane.xlu0 %701
      %v703 = vsel %vm618, %v699, -inf
      %704 = vmax.xlane.f32.xlu0 %v703
      %v705 = vpop.xlane.xlu0 %704
      %v706 = vsub.f32 %v698, %v702
      %v707 = vsub.f32 %v699, %v705
      %v708 = vmul.f32 %v706, 1.442695
      %v709 = vpow.pop %v708
      %v710 = vmul.f32 %v707, 1.442695
      %v711 = vpow.pop %v710
      %v712 = vsel %vm614, %v709, 0.0
      %713 = vadd.xlane.f32.xlu0 %v712
      %v714 = vpop.xlane.xlu0 %713
      %v715 = vsel %vm618, %v711, 0.0
      %716 = vadd.xlane.f32.xlu0 %v715
      %v717 = vpop.xlane.xlu0 %716
      %v718 = vrcp.pop %v714
      %v719 = vrcp.pop %v717
      %v720 = vmul.f32 %v709, %v718
      %v721 = vmul.f32 %v711, %v719
      %722 = vset.pattern.permute.xlu0 3
      %723 = vperm.xlu0 %722, %v511
      %v724 = vpop.permute.xlu0 %723
      %726 = vset.pattern.permute.xlu0 3
      %727 = vperm.xlu0 %726, %v516
      %v728 = vpop.permute.xlu0 %727
      %v730 = vlaneseq
      %v731 = vshrl.u32 %v730, 7
      %v732 = vsub.s32 3, %v731
      %v733 = vrot.slane %v589, %v732
      %v734 = vadd.f32 %v724, %v733
      %v735 = vadd.f32 %v728, %v733
      %v736 = vmul.f32 %v734, 0.2
      %v737 = vmul.f32 %v735, 0.2
      %v738 = vmax.f32 %v734, %v736
      %v739 = vmax.f32 %v735, %v737
      %v740 = vadd.f32 %v738, %v436
      %v741 = vadd.f32 %v739, %v437
      %v742 = vsel %vm614, %v740, -inf
      %743 = vmax.xlane.f32.xlu0 %v742
      %v744 = vpop.xlane.xlu0 %743
      %v745 = vsel %vm618, %v741, -inf
      %746 = vmax.xlane.f32.xlu0 %v745
      %v747 = vpop.xlane.xlu0 %746
      %v748 = vsub.f32 %v740, %v744
      %v749 = vsub.f32 %v741, %v747
      %v750 = vmul.f32 %v748, 1.442695
      %v751 = vpow.pop %v750
      %v752 = vmul.f32 %v749, 1.442695
      %v753 = vpow.pop %v752
      %v754 = vsel %vm614, %v751, 0.0
      %755 = vadd.xlane.f32.xlu0 %v754
      %v756 = vpop.xlane.xlu0 %755
      %v757 = vsel %vm618, %v753, 0.0
      %758 = vadd.xlane.f32.xlu0 %v757
      %v759 = vpop.xlane.xlu0 %758
      %v760 = vrcp.pop %v756
      %v761 = vrcp.pop %v759
      %v762 = vmul.f32 %v751, %v760
      %v763 = vmul.f32 %v753, %v761
      %764 = vset.pattern.permute.xlu0 4
      %765 = vperm.xlu0 %764, %v511
      %v766 = vpop.permute.xlu0 %765
      %768 = vset.pattern.permute.xlu0 4
      %769 = vperm.xlu0 %768, %v516
      %v770 = vpop.permute.xlu0 %769
      %v772 = vlaneseq
      %v773 = vshrl.u32 %v772, 7
      %v774 = vsub.s32 4, %v773
      %v775 = vrot.slane %v589, %v774
      %v776 = vadd.f32 %v766, %v775
      %v777 = vadd.f32 %v770, %v775
      %v778 = vmul.f32 %v776, 0.2
      %v779 = vmul.f32 %v777, 0.2
      %v780 = vmax.f32 %v776, %v778
      %v781 = vmax.f32 %v777, %v779
      %v782 = vadd.f32 %v780, %v436
      %v783 = vadd.f32 %v781, %v437
      %v784 = vsel %vm614, %v782, -inf
      %785 = vmax.xlane.f32.xlu0 %v784
      %v786 = vpop.xlane.xlu0 %785
      %v787 = vsel %vm618, %v783, -inf
      %788 = vmax.xlane.f32.xlu0 %v787
      %v789 = vpop.xlane.xlu0 %788
      %v790 = vsub.f32 %v782, %v786
      %v791 = vsub.f32 %v783, %v789
      %v792 = vmul.f32 %v790, 1.442695
      %v793 = vpow.pop %v792
      %v794 = vmul.f32 %v791, 1.442695
      %v795 = vpow.pop %v794
      %v796 = vsel %vm614, %v793, 0.0
      %797 = vadd.xlane.f32.xlu0 %v796
      %v798 = vpop.xlane.xlu0 %797
      %v799 = vsel %vm618, %v795, 0.0
      %800 = vadd.xlane.f32.xlu0 %v799
      %v801 = vpop.xlane.xlu0 %800
      %v802 = vrcp.pop %v798
      %v803 = vrcp.pop %v801
      %v804 = vmul.f32 %v793, %v802
      %v805 = vmul.f32 %v795, %v803
      %806 = vset.pattern.permute.xlu0 5
      %807 = vperm.xlu0 %806, %v511
      %v808 = vpop.permute.xlu0 %807
      %810 = vset.pattern.permute.xlu0 5
      %811 = vperm.xlu0 %810, %v516
      %v812 = vpop.permute.xlu0 %811
      %v814 = vlaneseq
      %v815 = vshrl.u32 %v814, 7
      %v816 = vsub.s32 5, %v815
      %v817 = vrot.slane %v589, %v816
      %v818 = vadd.f32 %v808, %v817
      %v819 = vadd.f32 %v812, %v817
      %v820 = vmul.f32 %v818, 0.2
      %v821 = vmul.f32 %v819, 0.2
      %v822 = vmax.f32 %v818, %v820
      %v823 = vmax.f32 %v819, %v821
      %v824 = vadd.f32 %v822, %v436
      %v825 = vadd.f32 %v823, %v437
      %v826 = vsel %vm614, %v824, -inf
      %827 = vmax.xlane.f32.xlu0 %v826
      %v828 = vpop.xlane.xlu0 %827
      %v829 = vsel %vm618, %v825, -inf
      %830 = vmax.xlane.f32.xlu0 %v829
      %v831 = vpop.xlane.xlu0 %830
      %v832 = vsub.f32 %v824, %v828
      %v833 = vsub.f32 %v825, %v831
      %v834 = vmul.f32 %v832, 1.442695
      %v835 = vpow.pop %v834
      %v836 = vmul.f32 %v833, 1.442695
      %v837 = vpow.pop %v836
      %v838 = vsel %vm614, %v835, 0.0
      %839 = vadd.xlane.f32.xlu0 %v838
      %v840 = vpop.xlane.xlu0 %839
      %v841 = vsel %vm618, %v837, 0.0
      %842 = vadd.xlane.f32.xlu0 %v841
      %v843 = vpop.xlane.xlu0 %842
      %v844 = vrcp.pop %v840
      %v845 = vrcp.pop %v843
      %v846 = vmul.f32 %v835, %v844
      %v847 = vmul.f32 %v837, %v845
      %848 = vset.pattern.permute.xlu0 6
      %849 = vperm.xlu0 %848, %v511
      %v850 = vpop.permute.xlu0 %849
      %852 = vset.pattern.permute.xlu0 6
      %853 = vperm.xlu0 %852, %v516
      %v854 = vpop.permute.xlu0 %853
      %v856 = vlaneseq
      %v857 = vshrl.u32 %v856, 7
      %v858 = vsub.s32 6, %v857
      %v859 = vrot.slane %v589, %v858
      %v860 = vadd.f32 %v850, %v859
      %v861 = vadd.f32 %v854, %v859
      %v862 = vmul.f32 %v860, 0.2
      %v863 = vmul.f32 %v861, 0.2
      %v864 = vmax.f32 %v860, %v862
      %v865 = vmax.f32 %v861, %v863
      %v866 = vadd.f32 %v864, %v436
      %v867 = vadd.f32 %v865, %v437
      %v868 = vsel %vm614, %v866, -inf
      %869 = vmax.xlane.f32.xlu0 %v868
      %v870 = vpop.xlane.xlu0 %869
      %v871 = vsel %vm618, %v867, -inf
      %872 = vmax.xlane.f32.xlu0 %v871
      %v873 = vpop.xlane.xlu0 %872
      %v874 = vsub.f32 %v866, %v870
      %v875 = vsub.f32 %v867, %v873
      %v876 = vmul.f32 %v874, 1.442695
      %v877 = vpow.pop %v876
      %v878 = vmul.f32 %v875, 1.442695
      %v879 = vpow.pop %v878
      %v880 = vsel %vm614, %v877, 0.0
      %881 = vadd.xlane.f32.xlu0 %v880
      %v882 = vpop.xlane.xlu0 %881
      %v883 = vsel %vm618, %v879, 0.0
      %884 = vadd.xlane.f32.xlu0 %v883
      %v885 = vpop.xlane.xlu0 %884
      %v886 = vrcp.pop %v882
      %v887 = vrcp.pop %v885
      %v888 = vmul.f32 %v877, %v886
      %v889 = vmul.f32 %v879, %v887
      %890 = vset.pattern.permute.xlu0 7
      %891 = vperm.xlu0 %890, %v511
      %v892 = vpop.permute.xlu0 %891
      %894 = vset.pattern.permute.xlu0 7
      %895 = vperm.xlu0 %894, %v516
      %v896 = vpop.permute.xlu0 %895
      %v898 = vlaneseq
      %v899 = vshrl.u32 %v898, 7
      %v900 = vsub.s32 7, %v899
      %v901 = vrot.slane %v589, %v900
      %v902 = vadd.f32 %v892, %v901
      %v903 = vadd.f32 %v896, %v901
      %v904 = vmul.f32 %v902, 0.2
      %v905 = vmul.f32 %v903, 0.2
      %v906 = vmax.f32 %v902, %v904
      %v907 = vmax.f32 %v903, %v905
      %v908 = vadd.f32 %v906, %v436
      %v909 = vadd.f32 %v907, %v437
      %v910 = vsel %vm614, %v908, -inf
      %911 = vmax.xlane.f32.xlu0 %v910
      %v912 = vpop.xlane.xlu0 %911
      %v913 = vsel %vm618, %v909, -inf
      %914 = vmax.xlane.f32.xlu0 %v913
      %v915 = vpop.xlane.xlu0 %914
      %v916 = vsub.f32 %v908, %v912
      %v917 = vsub.f32 %v909, %v915
      %v918 = vmul.f32 %v916, 1.442695
      %v919 = vpow.pop %v918
      %v920 = vmul.f32 %v917, 1.442695
      %v921 = vpow.pop %v920
      %v922 = vsel %vm614, %v919, 0.0
      %923 = vadd.xlane.f32.xlu0 %v922
      %v924 = vpop.xlane.xlu0 %923
      %v925 = vsel %vm618, %v921, 0.0
      %926 = vadd.xlane.f32.xlu0 %v925
      %v927 = vpop.xlane.xlu0 %926
      %v928 = vrcp.pop %v924
      %v929 = vrcp.pop %v927
      %v930 = vmul.f32 %v919, %v928
      %v931 = vmul.f32 %v921, %v929
      %v932 = vld [vmem:[%s337] sm:$0x1]
      %v934 = vlaneseq
      %v935 = vshrl.u32 %v934, 7
      %v936 = vsub.s32 0, %v935
      %v937 = vrot.slane %v932, %v936
      %v940 = vsel %vm614, %v636, 0
      %v943 = vsel %vm614, %v637, 0
      %vm945 = vcmask 1042432
      %v946 = vsel %vm945, %v428, 0
      %948 = vmatprep.subr.mxu0 0.0
      %949 = vmatpush1.msra.mxu0 %v423
      %950 = vmatprep.subr.mxu0 0.0
      %951 = vmatpush1.msra.mxu0 %v946
      %952 = vmatprep.subr.mxu0 0.0
      %953 = vmatpush1.msra.mxu0 0.0
      %954 = vmatprep.subr.mxu0 0.0
      %955 = vmatpush1.msra.mxu0 0.0
      %956 = vmatprep.subr.mxu0 0.0
      %957 = vmatpush1.msra.mxu0 0.0
      %958 = vmatprep.subr.mxu0 0.0
      %959 = vmatpush1.msra.mxu0 0.0
      %960 = vmatprep.subr.mxu0 0.0
      %961 = vmatpush1.msra.mxu0 0.0
      %962 = vmatprep.subr.mxu0 0.0
      %963 = vmatpush1.msra.mxu0 0.0
      %964 = vmatprep.subr.mxu0 0.0
      %965 = vmatpush1.msra.mxu0 0.0
      %966 = vmatprep.subr.mxu0 0.0
      %967 = vmatpush1.msra.mxu0 0.0
      %968 = vmatprep.subr.mxu0 0.0
      %969 = vmatpush1.msra.mxu0 0.0
      %970 = vmatprep.subr.mxu0 0.0
      %971 = vmatpush1.msra.mxu0 0.0
      %972 = vmatprep.subr.mxu0 0.0
      %973 = vmatpush1.msra.mxu0 0.0
      %974 = vmatprep.subr.mxu0 0.0
      %975 = vmatpush1.msra.mxu0 0.0
      %976 = vmatprep.subr.mxu0 0.0
      %977 = vmatpush1.msra.mxu0 0.0
      %978 = vmatprep.subr.mxu0 0.0
      %979 = vmatpush1.msra.mxu0 0.0
      %980 = vmatprep.subr.mxu0 0.0
      %981 = vmatpush1.msra.mxu0 0.0
      %982 = vmatprep.subr.mxu0 0.0
      %983 = vmatpush1.msra.mxu0 0.0
      %984 = vmatprep.subr.mxu0 0.0
      %985 = vmatpush1.msra.mxu0 0.0
      %986 = vmatprep.subr.mxu0 0.0
      %987 = vmatpush1.msra.mxu0 0.0
      %988 = vmatprep.subr.mxu0 0.0
      %989 = vmatpush1.msra.mxu0 0.0
      %990 = vmatprep.subr.mxu0 0.0
      %991 = vmatpush1.msra.mxu0 0.0
      %992 = vmatprep.subr.mxu0 0.0
      %993 = vmatpush1.msra.mxu0 0.0
      %994 = vmatprep.subr.mxu0 0.0
      %995 = vmatpush1.msra.mxu0 0.0
      %996 = vmatprep.subr.mxu0 0.0
      %997 = vmatpush1.msra.mxu0 0.0
      %998 = vmatprep.subr.mxu0 0.0
      %999 = vmatpush1.msra.mxu0 0.0
      %1000 = vmatprep.subr.mxu0 0.0
      %1001 = vmatpush1.msra.mxu0 0.0
      %1002 = vmatprep.subr.mxu0 0.0
      %1003 = vmatpush1.msra.mxu0 0.0
      %1004 = vmatprep.subr.mxu0 0.0
      %1005 = vmatpush1.msra.mxu0 0.0
      %1006 = vmatprep.subr.mxu0 0.0
      %1007 = vmatpush1.msra.mxu0 0.0
      %1008 = vmatprep.subr.mxu0 0.0
      %1009 = vmatpush1.msra.mxu0 0.0
      %1010 = vmatprep.subr.mxu0 0.0
      %1011 = vmatpush1.msra.mxu0 0.0
      %1012 = vmatprep.mubr.f32.mxu0 0.0
      %1013 = vmatmul.mubr.f32.gmra.mrb[0].mxu0 %v940
      %v1014 = vpop.f32.mrb[0].mxu0
      %v1015 = vadd.f32 %v937, %v1014
      %v1016 = vpop.f32.mrb[0].mxu0
      %1017 = vmatprep.mubr.f32.mxu0 0.0
      %1018 = vmatmul.mubr.f32.gmra.mrb[0].mxu0 %v943
      %v1019 = vpop.f32.mrb[0].mxu0
      %v1020 = vadd.f32 %v937, %v1019
      %v1021 = vpop.f32.mrb[0].mxu0
      %1022 = vdwg.mxu0
      %vm1023 = vcmask 31744
      %1024 = vst.msk [vmem:[%s342] sm:$0xff] %vm1023, %v1015
      %vm1025 = vcmask 26624
      %1026 = vst.msk [vmem:[%s342 + $0x8] sm:$0x7] %vm1025, %v1020
      %1027 = vrot.lane.b32.xlu0 %v423, 124
      %v1028 = vpop.permute.xlu0 %1027
      %1029 = vrot.lane.b32.xlu0 %v428, 124
      %v1030 = vpop.permute.xlu0 %1029
      %1032 = vrot.lane.b32.xlu0 %v937, 124
      %v1033 = vpop.permute.xlu0 %1032
      %v1036 = vsel %vm614, %v678, 0
      %v1039 = vsel %vm614, %v679, 0
      %v1041 = vsel %vm945, %v1030, 0
      %1043 = vmatprep.subr.mxu0 0.0
      %1044 = vmatpush1.msra.mxu0 %v1028
      %1045 = vmatprep.subr.mxu0 0.0
      %1046 = vmatpush1.msra.mxu0 %v1041
      %1047 = vmatprep.subr.mxu0 0.0
      %1048 = vmatpush1.msra.mxu0 0.0
      %1049 = vmatprep.subr.mxu0 0.0
      %1050 = vmatpush1.msra.mxu0 0.0
      %1051 = vmatprep.subr.mxu0 0.0
      %1052 = vmatpush1.msra.mxu0 0.0
      %1053 = vmatprep.subr.mxu0 0.0
      %1054 = vmatpush1.msra.mxu0 0.0
      %1055 = vmatprep.subr.mxu0 0.0
      %1056 = vmatpush1.msra.mxu0 0.0
      %1057 = vmatprep.subr.mxu0 0.0
      %1058 = vmatpush1.msra.mxu0 0.0
      %1059 = vmatprep.subr.mxu0 0.0
      %1060 = vmatpush1.msra.mxu0 0.0
      %1061 = vmatprep.subr.mxu0 0.0
      %1062 = vmatpush1.msra.mxu0 0.0
      %1063 = vmatprep.subr.mxu0 0.0
      %1064 = vmatpush1.msra.mxu0 0.0
      %1065 = vmatprep.subr.mxu0 0.0
      %1066 = vmatpush1.msra.mxu0 0.0
      %1067 = vmatprep.subr.mxu0 0.0
      %1068 = vmatpush1.msra.mxu0 0.0
      %1069 = vmatprep.subr.mxu0 0.0
      %1070 = vmatpush1.msra.mxu0 0.0
      %1071 = vmatprep.subr.mxu0 0.0
      %1072 = vmatpush1.msra.mxu0 0.0
      %1073 = vmatprep.subr.mxu0 0.0
      %1074 = vmatpush1.msra.mxu0 0.0
      %1075 = vmatprep.subr.mxu0 0.0
      %1076 = vmatpush1.msra.mxu0 0.0
      %1077 = vmatprep.subr.mxu0 0.0
      %1078 = vmatpush1.msra.mxu0 0.0
      %1079 = vmatprep.subr.mxu0 0.0
      %1080 = vmatpush1.msra.mxu0 0.0
      %1081 = vmatprep.subr.mxu0 0.0
      %1082 = vmatpush1.msra.mxu0 0.0
      %1083 = vmatprep.subr.mxu0 0.0
      %1084 = vmatpush1.msra.mxu0 0.0
      %1085 = vmatprep.subr.mxu0 0.0
      %1086 = vmatpush1.msra.mxu0 0.0
      %1087 = vmatprep.subr.mxu0 0.0
      %1088 = vmatpush1.msra.mxu0 0.0
      %1089 = vmatprep.subr.mxu0 0.0
      %1090 = vmatpush1.msra.mxu0 0.0
      %1091 = vmatprep.subr.mxu0 0.0
      %1092 = vmatpush1.msra.mxu0 0.0
      %1093 = vmatprep.subr.mxu0 0.0
      %1094 = vmatpush1.msra.mxu0 0.0
      %1095 = vmatprep.subr.mxu0 0.0
      %1096 = vmatpush1.msra.mxu0 0.0
      %1097 = vmatprep.subr.mxu0 0.0
      %1098 = vmatpush1.msra.mxu0 0.0
      %1099 = vmatprep.subr.mxu0 0.0
      %1100 = vmatpush1.msra.mxu0 0.0
      %1101 = vmatprep.subr.mxu0 0.0
      %1102 = vmatpush1.msra.mxu0 0.0
      %1103 = vmatprep.subr.mxu0 0.0
      %1104 = vmatpush1.msra.mxu0 0.0
      %1105 = vmatprep.subr.mxu0 0.0
      %1106 = vmatpush1.msra.mxu0 0.0
      %1107 = vmatprep.mubr.f32.mxu0 0.0
      %1108 = vmatmul.mubr.f32.gmra.mrb[0].mxu0 %v1036
      %v1109 = vpop.f32.mrb[0].mxu0
      %v1110 = vadd.f32 %v1033, %v1109
      %v1111 = vpop.f32.mrb[0].mxu0
      %1112 = vmatprep.mubr.f32.mxu0 0.0
      %1113 = vmatmul.mubr.f32.gmra.mrb[0].mxu0 %v1039
      %v1114 = vpop.f32.mrb[0].mxu0
      %v1115 = vadd.f32 %v1033, %v1114
      %v1116 = vpop.f32.mrb[0].mxu0
      %1117 = vdwg.mxu0
      %1120 = vrot.lane.b32.xlu0 %v1110, 4
      %v1121 = vpop.permute.xlu0 %1120
      %1122 = vrot.lane.b32.xlu0 %v1115, 4
      %v1123 = vpop.permute.xlu0 %1122
      %vm1126 = vcmask 64544
      %1127 = vst.msk [vmem:[%s342] sm:$0xff] %vm1126, %v1121
      %vm1128 = vcmask 59424
      %1129 = vst.msk [vmem:[%s342 + $0x8] sm:$0x7] %vm1128, %v1123
      %1130 = vrot.lane.b32.xlu0 %v423, 120
      %v1131 = vpop.permute.xlu0 %1130
      %1132 = vrot.lane.b32.xlu0 %v428, 120
      %v1133 = vpop.permute.xlu0 %1132
      %1135 = vrot.lane.b32.xlu0 %v937, 120
      %v1136 = vpop.permute.xlu0 %1135
      %v1139 = vsel %vm614, %v720, 0
      %v1142 = vsel %vm614, %v721, 0
      %v1144 = vsel %vm945, %v1133, 0
      %1146 = vmatprep.subr.mxu0 0.0
      %1147 = vmatpush1.msra.mxu0 %v1131
      %1148 = vmatprep.subr.mxu0 0.0
      %1149 = vmatpush1.msra.mxu0 %v1144
      %1150 = vmatprep.subr.mxu0 0.0
      %1151 = vmatpush1.msra.mxu0 0.0
      %1152 = vmatprep.subr.mxu0 0.0
      %1153 = vmatpush1.msra.mxu0 0.0
      %1154 = vmatprep.subr.mxu0 0.0
      %1155 = vmatpush1.msra.mxu0 0.0
      %1156 = vmatprep.subr.mxu0 0.0
      %1157 = vmatpush1.msra.mxu0 0.0
      %1158 = vmatprep.subr.mxu0 0.0
      %1159 = vmatpush1.msra.mxu0 0.0
      %1160 = vmatprep.subr.mxu0 0.0
      %1161 = vmatpush1.msra.mxu0 0.0
      %1162 = vmatprep.subr.mxu0 0.0
      %1163 = vmatpush1.msra.mxu0 0.0
      %1164 = vmatprep.subr.mxu0 0.0
      %1165 = vmatpush1.msra.mxu0 0.0
      %1166 = vmatprep.subr.mxu0 0.0
      %1167 = vmatpush1.msra.mxu0 0.0
      %1168 = vmatprep.subr.mxu0 0.0
      %1169 = vmatpush1.msra.mxu0 0.0
      %1170 = vmatprep.subr.mxu0 0.0
      %1171 = vmatpush1.msra.mxu0 0.0
      %1172 = vmatprep.subr.mxu0 0.0
      %1173 = vmatpush1.msra.mxu0 0.0
      %1174 = vmatprep.subr.mxu0 0.0
      %1175 = vmatpush1.msra.mxu0 0.0
      %1176 = vmatprep.subr.mxu0 0.0
      %1177 = vmatpush1.msra.mxu0 0.0
      %1178 = vmatprep.subr.mxu0 0.0
      %1179 = vmatpush1.msra.mxu0 0.0
      %1180 = vmatprep.subr.mxu0 0.0
      %1181 = vmatpush1.msra.mxu0 0.0
      %1182 = vmatprep.subr.mxu0 0.0
      %1183 = vmatpush1.msra.mxu0 0.0
      %1184 = vmatprep.subr.mxu0 0.0
      %1185 = vmatpush1.msra.mxu0 0.0
      %1186 = vmatprep.subr.mxu0 0.0
      %1187 = vmatpush1.msra.mxu0 0.0
      %1188 = vmatprep.subr.mxu0 0.0
      %1189 = vmatpush1.msra.mxu0 0.0
      %1190 = vmatprep.subr.mxu0 0.0
      %1191 = vmatpush1.msra.mxu0 0.0
      %1192 = vmatprep.subr.mxu0 0.0
      %1193 = vmatpush1.msra.mxu0 0.0
      %1194 = vmatprep.subr.mxu0 0.0
      %1195 = vmatpush1.msra.mxu0 0.0
      %1196 = vmatprep.subr.mxu0 0.0
      %1197 = vmatpush1.msra.mxu0 0.0
      %1198 = vmatprep.subr.mxu0 0.0
      %1199 = vmatpush1.msra.mxu0 0.0
      %1200 = vmatprep.subr.mxu0 0.0
      %1201 = vmatpush1.msra.mxu0 0.0
      %1202 = vmatprep.subr.mxu0 0.0
      %1203 = vmatpush1.msra.mxu0 0.0
      %1204 = vmatprep.subr.mxu0 0.0
      %1205 = vmatpush1.msra.mxu0 0.0
      %1206 = vmatprep.subr.mxu0 0.0
      %1207 = vmatpush1.msra.mxu0 0.0
      %1208 = vmatprep.subr.mxu0 0.0
      %1209 = vmatpush1.msra.mxu0 0.0
      %1210 = vmatprep.mubr.f32.mxu0 0.0
      %1211 = vmatmul.mubr.f32.gmra.mrb[0].mxu0 %v1139
      %v1212 = vpop.f32.mrb[0].mxu0
      %v1213 = vadd.f32 %v1136, %v1212
      %v1214 = vpop.f32.mrb[0].mxu0
      %1215 = vmatprep.mubr.f32.mxu0 0.0
      %1216 = vmatmul.mubr.f32.gmra.mrb[0].mxu0 %v1142
      %v1217 = vpop.f32.mrb[0].mxu0
      %v1218 = vadd.f32 %v1136, %v1217
      %v1219 = vpop.f32.mrb[0].mxu0
      %1220 = vdwg.mxu0
      %1223 = vrot.lane.b32.xlu0 %v1213, 8
      %v1224 = vpop.permute.xlu0 %1223
      %1225 = vrot.lane.b32.xlu0 %v1218, 8
      %v1226 = vpop.permute.xlu0 %1225
      %vm1229 = vcmask 97344
      %1230 = vst.msk [vmem:[%s342] sm:$0xff] %vm1229, %v1224
      %vm1231 = vcmask 92224
      %1232 = vst.msk [vmem:[%s342 + $0x8] sm:$0x7] %vm1231, %v1226
      %1233 = vrot.lane.b32.xlu0 %v423, 116
      %v1234 = vpop.permute.xlu0 %1233
      %1235 = vrot.lane.b32.xlu0 %v428, 116
      %v1236 = vpop.permute.xlu0 %1235
      %1238 = vrot.lane.b32.xlu0 %v937, 116
      %v1239 = vpop.permute.xlu0 %1238
      %v1242 = vsel %vm614, %v762, 0
      %v1245 = vsel %vm614, %v763, 0
      %v1247 = vsel %vm945, %v1236, 0
      %1249 = vmatprep.subr.mxu0 0.0
      %1250 = vmatpush1.msra.mxu0 %v1234
      %1251 = vmatprep.subr.mxu0 0.0
      %1252 = vmatpush1.msra.mxu0 %v1247
      %1253 = vmatprep.subr.mxu0 0.0
      %1254 = vmatpush1.msra.mxu0 0.0
      %1255 = vmatprep.subr.mxu0 0.0
      %1256 = vmatpush1.msra.mxu0 0.0
      %1257 = vmatprep.subr.mxu0 0.0
      %1258 = vmatpush1.msra.mxu0 0.0
      %1259 = vmatprep.subr.mxu0 0.0
      %1260 = vmatpush1.msra.mxu0 0.0
      %1261 = vmatprep.subr.mxu0 0.0
      %1262 = vmatpush1.msra.mxu0 0.0
      %1263 = vmatprep.subr.mxu0 0.0
      %1264 = vmatpush1.msra.mxu0 0.0
      %1265 = vmatprep.subr.mxu0 0.0
      %1266 = vmatpush1.msra.mxu0 0.0
      %1267 = vmatprep.subr.mxu0 0.0
      %1268 = vmatpush1.msra.mxu0 0.0
      %1269 = vmatprep.subr.mxu0 0.0
      %1270 = vmatpush1.msra.mxu0 0.0
      %1271 = vmatprep.subr.mxu0 0.0
      %1272 = vmatpush1.msra.mxu0 0.0
      %1273 = vmatprep.subr.mxu0 0.0
      %1274 = vmatpush1.msra.mxu0 0.0
      %1275 = vmatprep.subr.mxu0 0.0
      %1276 = vmatpush1.msra.mxu0 0.0
      %1277 = vmatprep.subr.mxu0 0.0
      %1278 = vmatpush1.msra.mxu0 0.0
      %1279 = vmatprep.subr.mxu0 0.0
      %1280 = vmatpush1.msra.mxu0 0.0
      %1281 = vmatprep.subr.mxu0 0.0
      %1282 = vmatpush1.msra.mxu0 0.0
      %1283 = vmatprep.subr.mxu0 0.0
      %1284 = vmatpush1.msra.mxu0 0.0
      %1285 = vmatprep.subr.mxu0 0.0
      %1286 = vmatpush1.msra.mxu0 0.0
      %1287 = vmatprep.subr.mxu0 0.0
      %1288 = vmatpush1.msra.mxu0 0.0
      %1289 = vmatprep.subr.mxu0 0.0
      %1290 = vmatpush1.msra.mxu0 0.0
      %1291 = vmatprep.subr.mxu0 0.0
      %1292 = vmatpush1.msra.mxu0 0.0
      %1293 = vmatprep.subr.mxu0 0.0
      %1294 = vmatpush1.msra.mxu0 0.0
      %1295 = vmatprep.subr.mxu0 0.0
      %1296 = vmatpush1.msra.mxu0 0.0
      %1297 = vmatprep.subr.mxu0 0.0
      %1298 = vmatpush1.msra.mxu0 0.0
      %1299 = vmatprep.subr.mxu0 0.0
      %1300 = vmatpush1.msra.mxu0 0.0
      %1301 = vmatprep.subr.mxu0 0.0
      %1302 = vmatpush1.msra.mxu0 0.0
      %1303 = vmatprep.subr.mxu0 0.0
      %1304 = vmatpush1.msra.mxu0 0.0
      %1305 = vmatprep.subr.mxu0 0.0
      %1306 = vmatpush1.msra.mxu0 0.0
      %1307 = vmatprep.subr.mxu0 0.0
      %1308 = vmatpush1.msra.mxu0 0.0
      %1309 = vmatprep.subr.mxu0 0.0
      %1310 = vmatpush1.msra.mxu0 0.0
      %1311 = vmatprep.subr.mxu0 0.0
      %1312 = vmatpush1.msra.mxu0 0.0
      %1313 = vmatprep.mubr.f32.mxu0 0.0
      %1314 = vmatmul.mubr.f32.gmra.mrb[0].mxu0 %v1242
      %v1315 = vpop.f32.mrb[0].mxu0
      %v1316 = vadd.f32 %v1239, %v1315
      %v1317 = vpop.f32.mrb[0].mxu0
      %1318 = vmatprep.mubr.f32.mxu0 0.0
      %1319 = vmatmul.mubr.f32.gmra.mrb[0].mxu0 %v1245
      %v1320 = vpop.f32.mrb[0].mxu0
      %v1321 = vadd.f32 %v1239, %v1320
      %v1322 = vpop.f32.mrb[0].mxu0
      %1323 = vdwg.mxu0
      %1326 = vrot.lane.b32.xlu0 %v1316, 12
      %v1327 = vpop.permute.xlu0 %1326
      %1328 = vrot.lane.b32.xlu0 %v1321, 12
      %v1329 = vpop.permute.xlu0 %1328
      %vm1332 = vcmask 130144
      %1333 = vst.msk [vmem:[%s342] sm:$0xff] %vm1332, %v1327
      %vm1334 = vcmask 125024
      %1335 = vst.msk [vmem:[%s342 + $0x8] sm:$0x7] %vm1334, %v1329
      %1336 = vrot.lane.b32.xlu0 %v423, 112
      %v1337 = vpop.permute.xlu0 %1336
      %1338 = vrot.lane.b32.xlu0 %v428, 112
      %v1339 = vpop.permute.xlu0 %1338
      %1341 = vrot.lane.b32.xlu0 %v937, 112
      %v1342 = vpop.permute.xlu0 %1341
      %v1345 = vsel %vm614, %v804, 0
      %v1348 = vsel %vm614, %v805, 0
      %v1350 = vsel %vm945, %v1339, 0
      %1352 = vmatprep.subr.mxu0 0.0
      %1353 = vmatpush1.msra.mxu0 %v1337
      %1354 = vmatprep.subr.mxu0 0.0
      %1355 = vmatpush1.msra.mxu0 %v1350
      %1356 = vmatprep.subr.mxu0 0.0
      %1357 = vmatpush1.msra.mxu0 0.0
      %1358 = vmatprep.subr.mxu0 0.0
      %1359 = vmatpush1.msra.mxu0 0.0
      %1360 = vmatprep.subr.mxu0 0.0
      %1361 = vmatpush1.msra.mxu0 0.0
      %1362 = vmatprep.subr.mxu0 0.0
      %1363 = vmatpush1.msra.mxu0 0.0
      %1364 = vmatprep.subr.mxu0 0.0
      %1365 = vmatpush1.msra.mxu0 0.0
      %1366 = vmatprep.subr.mxu0 0.0
      %1367 = vmatpush1.msra.mxu0 0.0
      %1368 = vmatprep.subr.mxu0 0.0
      %1369 = vmatpush1.msra.mxu0 0.0
      %1370 = vmatprep.subr.mxu0 0.0
      %1371 = vmatpush1.msra.mxu0 0.0
      %1372 = vmatprep.subr.mxu0 0.0
      %1373 = vmatpush1.msra.mxu0 0.0
      %1374 = vmatprep.subr.mxu0 0.0
      %1375 = vmatpush1.msra.mxu0 0.0
      %1376 = vmatprep.subr.mxu0 0.0
      %1377 = vmatpush1.msra.mxu0 0.0
      %1378 = vmatprep.subr.mxu0 0.0
      %1379 = vmatpush1.msra.mxu0 0.0
      %1380 = vmatprep.subr.mxu0 0.0
      %1381 = vmatpush1.msra.mxu0 0.0
      %1382 = vmatprep.subr.mxu0 0.0
      %1383 = vmatpush1.msra.mxu0 0.0
      %1384 = vmatprep.subr.mxu0 0.0
      %1385 = vmatpush1.msra.mxu0 0.0
      %1386 = vmatprep.subr.mxu0 0.0
      %1387 = vmatpush1.msra.mxu0 0.0
      %1388 = vmatprep.subr.mxu0 0.0
      %1389 = vmatpush1.msra.mxu0 0.0
      %1390 = vmatprep.subr.mxu0 0.0
      %1391 = vmatpush1.msra.mxu0 0.0
      %1392 = vmatprep.subr.mxu0 0.0
      %1393 = vmatpush1.msra.mxu0 0.0
      %1394 = vmatprep.subr.mxu0 0.0
      %1395 = vmatpush1.msra.mxu0 0.0
      %1396 = vmatprep.subr.mxu0 0.0
      %1397 = vmatpush1.msra.mxu0 0.0
      %1398 = vmatprep.subr.mxu0 0.0
      %1399 = vmatpush1.msra.mxu0 0.0
      %1400 = vmatprep.subr.mxu0 0.0
      %1401 = vmatpush1.msra.mxu0 0.0
      %1402 = vmatprep.subr.mxu0 0.0
      %1403 = vmatpush1.msra.mxu0 0.0
      %1404 = vmatprep.subr.mxu0 0.0
      %1405 = vmatpush1.msra.mxu0 0.0
      %1406 = vmatprep.subr.mxu0 0.0
      %1407 = vmatpush1.msra.mxu0 0.0
      %1408 = vmatprep.subr.mxu0 0.0
      %1409 = vmatpush1.msra.mxu0 0.0
      %1410 = vmatprep.subr.mxu0 0.0
      %1411 = vmatpush1.msra.mxu0 0.0
      %1412 = vmatprep.subr.mxu0 0.0
      %1413 = vmatpush1.msra.mxu0 0.0
      %1414 = vmatprep.subr.mxu0 0.0
      %1415 = vmatpush1.msra.mxu0 0.0
      %1416 = vmatprep.mubr.f32.mxu0 0.0
      %1417 = vmatmul.mubr.f32.gmra.mrb[0].mxu0 %v1345
      %v1418 = vpop.f32.mrb[0].mxu0
      %v1419 = vadd.f32 %v1342, %v1418
      %v1420 = vpop.f32.mrb[0].mxu0
      %1421 = vmatprep.mubr.f32.mxu0 0.0
      %1422 = vmatmul.mubr.f32.gmra.mrb[0].mxu0 %v1348
      %v1423 = vpop.f32.mrb[0].mxu0
      %v1424 = vadd.f32 %v1342, %v1423
      %v1425 = vpop.f32.mrb[0].mxu0
      %1426 = vdwg.mxu0
      %1429 = vrot.lane.b32.xlu0 %v1419, 16
      %v1430 = vpop.permute.xlu0 %1429
      %1431 = vrot.lane.b32.xlu0 %v1424, 16
      %v1432 = vpop.permute.xlu0 %1431
      %vm1435 = vcmask 162944
      %1436 = vst.msk [vmem:[%s342] sm:$0xff] %vm1435, %v1430
      %vm1437 = vcmask 157824
      %1438 = vst.msk [vmem:[%s342 + $0x8] sm:$0x7] %vm1437, %v1432
      %1439 = vrot.lane.b32.xlu0 %v423, 108
      %v1440 = vpop.permute.xlu0 %1439
      %1441 = vrot.lane.b32.xlu0 %v428, 108
      %v1442 = vpop.permute.xlu0 %1441
      %1444 = vrot.lane.b32.xlu0 %v937, 108
      %v1445 = vpop.permute.xlu0 %1444
      %v1448 = vsel %vm614, %v846, 0
      %v1451 = vsel %vm614, %v847, 0
      %v1453 = vsel %vm945, %v1442, 0
      %1455 = vmatprep.subr.mxu0 0.0
      %1456 = vmatpush1.msra.mxu0 %v1440
      %1457 = vmatprep.subr.mxu0 0.0
      %1458 = vmatpush1.msra.mxu0 %v1453
      %1459 = vmatprep.subr.mxu0 0.0
      %1460 = vmatpush1.msra.mxu0 0.0
      %1461 = vmatprep.subr.mxu0 0.0
      %1462 = vmatpush1.msra.mxu0 0.0
      %1463 = vmatprep.subr.mxu0 0.0
      %1464 = vmatpush1.msra.mxu0 0.0
      %1465 = vmatprep.subr.mxu0 0.0
      %1466 = vmatpush1.msra.mxu0 0.0
      %1467 = vmatprep.subr.mxu0 0.0
      %1468 = vmatpush1.msra.mxu0 0.0
      %1469 = vmatprep.subr.mxu0 0.0
      %1470 = vmatpush1.msra.mxu0 0.0
      %1471 = vmatprep.subr.mxu0 0.0
      %1472 = vmatpush1.msra.mxu0 0.0
      %1473 = vmatprep.subr.mxu0 0.0
      %1474 = vmatpush1.msra.mxu0 0.0
      %1475 = vmatprep.subr.mxu0 0.0
      %1476 = vmatpush1.msra.mxu0 0.0
      %1477 = vmatprep.subr.mxu0 0.0
      %1478 = vmatpush1.msra.mxu0 0.0
      %1479 = vmatprep.subr.mxu0 0.0
      %1480 = vmatpush1.msra.mxu0 0.0
      %1481 = vmatprep.subr.mxu0 0.0
      %1482 = vmatpush1.msra.mxu0 0.0
      %1483 = vmatprep.subr.mxu0 0.0
      %1484 = vmatpush1.msra.mxu0 0.0
      %1485 = vmatprep.subr.mxu0 0.0
      %1486 = vmatpush1.msra.mxu0 0.0
      %1487 = vmatprep.subr.mxu0 0.0
      %1488 = vmatpush1.msra.mxu0 0.0
      %1489 = vmatprep.subr.mxu0 0.0
      %1490 = vmatpush1.msra.mxu0 0.0
      %1491 = vmatprep.subr.mxu0 0.0
      %1492 = vmatpush1.msra.mxu0 0.0
      %1493 = vmatprep.subr.mxu0 0.0
      %1494 = vmatpush1.msra.mxu0 0.0
      %1495 = vmatprep.subr.mxu0 0.0
      %1496 = vmatpush1.msra.mxu0 0.0
      %1497 = vmatprep.subr.mxu0 0.0
      %1498 = vmatpush1.msra.mxu0 0.0
      %1499 = vmatprep.subr.mxu0 0.0
      %1500 = vmatpush1.msra.mxu0 0.0
      %1501 = vmatprep.subr.mxu0 0.0
      %1502 = vmatpush1.msra.mxu0 0.0
      %1503 = vmatprep.subr.mxu0 0.0
      %1504 = vmatpush1.msra.mxu0 0.0
      %1505 = vmatprep.subr.mxu0 0.0
      %1506 = vmatpush1.msra.mxu0 0.0
      %1507 = vmatprep.subr.mxu0 0.0
      %1508 = vmatpush1.msra.mxu0 0.0
      %1509 = vmatprep.subr.mxu0 0.0
      %1510 = vmatpush1.msra.mxu0 0.0
      %1511 = vmatprep.subr.mxu0 0.0
      %1512 = vmatpush1.msra.mxu0 0.0
      %1513 = vmatprep.subr.mxu0 0.0
      %1514 = vmatpush1.msra.mxu0 0.0
      %1515 = vmatprep.subr.mxu0 0.0
      %1516 = vmatpush1.msra.mxu0 0.0
      %1517 = vmatprep.subr.mxu0 0.0
      %1518 = vmatpush1.msra.mxu0 0.0
      %1519 = vmatprep.mubr.f32.mxu0 0.0
      %1520 = vmatmul.mubr.f32.gmra.mrb[0].mxu0 %v1448
      %v1521 = vpop.f32.mrb[0].mxu0
      %v1522 = vadd.f32 %v1445, %v1521
      %v1523 = vpop.f32.mrb[0].mxu0
      %1524 = vmatprep.mubr.f32.mxu0 0.0
      %1525 = vmatmul.mubr.f32.gmra.mrb[0].mxu0 %v1451
      %v1526 = vpop.f32.mrb[0].mxu0
      %v1527 = vadd.f32 %v1445, %v1526
      %v1528 = vpop.f32.mrb[0].mxu0
      %1529 = vdwg.mxu0
      %1532 = vrot.lane.b32.xlu0 %v1522, 20
      %v1533 = vpop.permute.xlu0 %1532
      %1534 = vrot.lane.b32.xlu0 %v1527, 20
      %v1535 = vpop.permute.xlu0 %1534
      %vm1538 = vcmask 195744
      %1539 = vst.msk [vmem:[%s342] sm:$0xff] %vm1538, %v1533
      %vm1540 = vcmask 190624
      %1541 = vst.msk [vmem:[%s342 + $0x8] sm:$0x7] %vm1540, %v1535
      %1542 = vrot.lane.b32.xlu0 %v423, 104
      %v1543 = vpop.permute.xlu0 %1542
      %1544 = vrot.lane.b32.xlu0 %v428, 104
      %v1545 = vpop.permute.xlu0 %1544
      %1547 = vrot.lane.b32.xlu0 %v937, 104
      %v1548 = vpop.permute.xlu0 %1547
      %v1551 = vsel %vm614, %v888, 0
      %v1554 = vsel %vm614, %v889, 0
      %v1556 = vsel %vm945, %v1545, 0
      %1558 = vmatprep.subr.mxu0 0.0
      %1559 = vmatpush1.msra.mxu0 %v1543
      %1560 = vmatprep.subr.mxu0 0.0
      %1561 = vmatpush1.msra.mxu0 %v1556
      %1562 = vmatprep.subr.mxu0 0.0
      %1563 = vmatpush1.msra.mxu0 0.0
      %1564 = vmatprep.subr.mxu0 0.0
      %1565 = vmatpush1.msra.mxu0 0.0
      %1566 = vmatprep.subr.mxu0 0.0
      %1567 = vmatpush1.msra.mxu0 0.0
      %1568 = vmatprep.subr.mxu0 0.0
      %1569 = vmatpush1.msra.mxu0 0.0
      %1570 = vmatprep.subr.mxu0 0.0
      %1571 = vmatpush1.msra.mxu0 0.0
      %1572 = vmatprep.subr.mxu0 0.0
      %1573 = vmatpush1.msra.mxu0 0.0
      %1574 = vmatprep.subr.mxu0 0.0
      %1575 = vmatpush1.msra.mxu0 0.0
      %1576 = vmatprep.subr.mxu0 0.0
      %1577 = vmatpush1.msra.mxu0 0.0
      %1578 = vmatprep.subr.mxu0 0.0
      %1579 = vmatpush1.msra.mxu0 0.0
      %1580 = vmatprep.subr.mxu0 0.0
      %1581 = vmatpush1.msra.mxu0 0.0
      %1582 = vmatprep.subr.mxu0 0.0
      %1583 = vmatpush1.msra.mxu0 0.0
      %1584 = vmatprep.subr.mxu0 0.0
      %1585 = vmatpush1.msra.mxu0 0.0
      %1586 = vmatprep.subr.mxu0 0.0
      %1587 = vmatpush1.msra.mxu0 0.0
      %1588 = vmatprep.subr.mxu0 0.0
      %1589 = vmatpush1.msra.mxu0 0.0
      %1590 = vmatprep.subr.mxu0 0.0
      %1591 = vmatpush1.msra.mxu0 0.0
      %1592 = vmatprep.subr.mxu0 0.0
      %1593 = vmatpush1.msra.mxu0 0.0
      %1594 = vmatprep.subr.mxu0 0.0
      %1595 = vmatpush1.msra.mxu0 0.0
      %1596 = vmatprep.subr.mxu0 0.0
      %1597 = vmatpush1.msra.mxu0 0.0
      %1598 = vmatprep.subr.mxu0 0.0
      %1599 = vmatpush1.msra.mxu0 0.0
      %1600 = vmatprep.subr.mxu0 0.0
      %1601 = vmatpush1.msra.mxu0 0.0
      %1602 = vmatprep.subr.mxu0 0.0
      %1603 = vmatpush1.msra.mxu0 0.0
      %1604 = vmatprep.subr.mxu0 0.0
      %1605 = vmatpush1.msra.mxu0 0.0
      %1606 = vmatprep.subr.mxu0 0.0
      %1607 = vmatpush1.msra.mxu0 0.0
      %1608 = vmatprep.subr.mxu0 0.0
      %1609 = vmatpush1.msra.mxu0 0.0
      %1610 = vmatprep.subr.mxu0 0.0
      %1611 = vmatpush1.msra.mxu0 0.0
      %1612 = vmatprep.subr.mxu0 0.0
      %1613 = vmatpush1.msra.mxu0 0.0
      %1614 = vmatprep.subr.mxu0 0.0
      %1615 = vmatpush1.msra.mxu0 0.0
      %1616 = vmatprep.subr.mxu0 0.0
      %1617 = vmatpush1.msra.mxu0 0.0
      %1618 = vmatprep.subr.mxu0 0.0
      %1619 = vmatpush1.msra.mxu0 0.0
      %1620 = vmatprep.subr.mxu0 0.0
      %1621 = vmatpush1.msra.mxu0 0.0
      %1622 = vmatprep.mubr.f32.mxu0 0.0
      %1623 = vmatmul.mubr.f32.gmra.mrb[0].mxu0 %v1551
      %v1624 = vpop.f32.mrb[0].mxu0
      %v1625 = vadd.f32 %v1548, %v1624
      %v1626 = vpop.f32.mrb[0].mxu0
      %1627 = vmatprep.mubr.f32.mxu0 0.0
      %1628 = vmatmul.mubr.f32.gmra.mrb[0].mxu0 %v1554
      %v1629 = vpop.f32.mrb[0].mxu0
      %v1630 = vadd.f32 %v1548, %v1629
      %v1631 = vpop.f32.mrb[0].mxu0
      %1632 = vdwg.mxu0
      %1635 = vrot.lane.b32.xlu0 %v1625, 24
      %v1636 = vpop.permute.xlu0 %1635
      %1637 = vrot.lane.b32.xlu0 %v1630, 24
      %v1638 = vpop.permute.xlu0 %1637
      %vm1641 = vcmask 228544
      %1642 = vst.msk [vmem:[%s342] sm:$0xff] %vm1641, %v1636
      %vm1643 = vcmask 223424
      %1644 = vst.msk [vmem:[%s342 + $0x8] sm:$0x7] %vm1643, %v1638
      %1645 = vrot.lane.b32.xlu0 %v423, 100
      %v1646 = vpop.permute.xlu0 %1645
      %1647 = vrot.lane.b32.xlu0 %v428, 100
      %v1648 = vpop.permute.xlu0 %1647
      %1650 = vrot.lane.b32.xlu0 %v937, 100
      %v1651 = vpop.permute.xlu0 %1650
      %v1654 = vsel %vm614, %v930, 0
      %v1657 = vsel %vm614, %v931, 0
      %v1659 = vsel %vm945, %v1648, 0
      %1661 = vmatprep.subr.mxu0 0.0
      %1662 = vmatpush1.msra.mxu0 %v1646
      %1663 = vmatprep.subr.mxu0 0.0
      %1664 = vmatpush1.msra.mxu0 %v1659
      %1665 = vmatprep.subr.mxu0 0.0
      %1666 = vmatpush1.msra.mxu0 0.0
      %1667 = vmatprep.subr.mxu0 0.0
      %1668 = vmatpush1.msra.mxu0 0.0
      %1669 = vmatprep.subr.mxu0 0.0
      %1670 = vmatpush1.msra.mxu0 0.0
      %1671 = vmatprep.subr.mxu0 0.0
      %1672 = vmatpush1.msra.mxu0 0.0
      %1673 = vmatprep.subr.mxu0 0.0
      %1674 = vmatpush1.msra.mxu0 0.0
      %1675 = vmatprep.subr.mxu0 0.0
      %1676 = vmatpush1.msra.mxu0 0.0
      %1677 = vmatprep.subr.mxu0 0.0
      %1678 = vmatpush1.msra.mxu0 0.0
      %1679 = vmatprep.subr.mxu0 0.0
      %1680 = vmatpush1.msra.mxu0 0.0
      %1681 = vmatprep.subr.mxu0 0.0
      %1682 = vmatpush1.msra.mxu0 0.0
      %1683 = vmatprep.subr.mxu0 0.0
      %1684 = vmatpush1.msra.mxu0 0.0
      %1685 = vmatprep.subr.mxu0 0.0
      %1686 = vmatpush1.msra.mxu0 0.0
      %1687 = vmatprep.subr.mxu0 0.0
      %1688 = vmatpush1.msra.mxu0 0.0
      %1689 = vmatprep.subr.mxu0 0.0
      %1690 = vmatpush1.msra.mxu0 0.0
      %1691 = vmatprep.subr.mxu0 0.0
      %1692 = vmatpush1.msra.mxu0 0.0
      %1693 = vmatprep.subr.mxu0 0.0
      %1694 = vmatpush1.msra.mxu0 0.0
      %1695 = vmatprep.subr.mxu0 0.0
      %1696 = vmatpush1.msra.mxu0 0.0
      %1697 = vmatprep.subr.mxu0 0.0
      %1698 = vmatpush1.msra.mxu0 0.0
      %1699 = vmatprep.subr.mxu0 0.0
      %1700 = vmatpush1.msra.mxu0 0.0
      %1701 = vmatprep.subr.mxu0 0.0
      %1702 = vmatpush1.msra.mxu0 0.0
      %1703 = vmatprep.subr.mxu0 0.0
      %1704 = vmatpush1.msra.mxu0 0.0
      %1705 = vmatprep.subr.mxu0 0.0
      %1706 = vmatpush1.msra.mxu0 0.0
      %1707 = vmatprep.subr.mxu0 0.0
      %1708 = vmatpush1.msra.mxu0 0.0
      %1709 = vmatprep.subr.mxu0 0.0
      %1710 = vmatpush1.msra.mxu0 0.0
      %1711 = vmatprep.subr.mxu0 0.0
      %1712 = vmatpush1.msra.mxu0 0.0
      %1713 = vmatprep.subr.mxu0 0.0
      %1714 = vmatpush1.msra.mxu0 0.0
      %1715 = vmatprep.subr.mxu0 0.0
      %1716 = vmatpush1.msra.mxu0 0.0
      %1717 = vmatprep.subr.mxu0 0.0
      %1718 = vmatpush1.msra.mxu0 0.0
      %1719 = vmatprep.subr.mxu0 0.0
      %1720 = vmatpush1.msra.mxu0 0.0
      %1721 = vmatprep.subr.mxu0 0.0
      %1722 = vmatpush1.msra.mxu0 0.0
      %1723 = vmatprep.subr.mxu0 0.0
      %1724 = vmatpush1.msra.mxu0 0.0
      %1725 = vmatprep.mubr.f32.mxu0 0.0
      %1726 = vmatmul.mubr.f32.gmra.mrb[0].mxu0 %v1654
      %v1727 = vpop.f32.mrb[0].mxu0
      %v1728 = vadd.f32 %v1651, %v1727
      %v1729 = vpop.f32.mrb[0].mxu0
      %1730 = vmatprep.mubr.f32.mxu0 0.0
      %1731 = vmatmul.mubr.f32.gmra.mrb[0].mxu0 %v1657
      %v1732 = vpop.f32.mrb[0].mxu0
      %v1733 = vadd.f32 %v1651, %v1732
      %v1734 = vpop.f32.mrb[0].mxu0
      %1735 = vdwg.mxu0
      %1738 = vrot.lane.b32.xlu0 %v1728, 28
      %v1739 = vpop.permute.xlu0 %1738
      %1740 = vrot.lane.b32.xlu0 %v1733, 28
      %v1741 = vpop.permute.xlu0 %1740
      %vm1744 = vcmask 261344
      %1745 = vst.msk [vmem:[%s342] sm:$0xff] %vm1744, %v1739
      %vm1746 = vcmask 256224
      %1747 = vst.msk [vmem:[%s342 + $0x8] sm:$0x7] %vm1746, %v1741
      %p1748 = scmp.lt.s32.totalorder %s17, 2
      %s1749 = scalar_select %p1748, %s17, 2
      %s1750 = smul.addr %s1749, 2
      %s1751 = smul.addr %s1750, 8
      %s1752 = scalar_lea.vmem %s6, %s1751
      // Predicated region
      $region45: #{_device_forward_rel.5} parent=43 // pred_check
        %p1753 = pneg %p191
      $region46: #{_device_forward_rel.5} parent=43 // pred_check_branch
        %1755 = sbr.rel (%p1753) target = $region48
      $region47: #{_device_forward_rel.5} parent=43 // pred_region
        _
      $region48: #{_device_forward_rel.5} parent=43 // pred_fallthru
        _
    $region44: #{_device_forward_rel.5} parent=5 // pred_fallthru
      _
    %p1756 = scmp.le.s32.totalorder 2, %s12
    // Predicated region
    $region49: #{_device_forward_rel.5} parent=5 // pred_check
      %p1757 = pneg %p1756
    $region50: #{_device_forward_rel.5} parent=5 // pred_check_branch
      %1759 = sbr.rel (%p1757) target = $region52
    $region51: #{_device_forward_rel.5} parent=5 // pred_region
      %s1760 = ssub.s32 %s12, 2
      // Predicated region
      $region53: #{_device_forward_rel.5} parent=51 // pred_check
        %p1761 = pneg %p197
      $region54: #{_device_forward_rel.5} parent=51 // pred_check_branch
        %1763 = sbr.rel (%p1761) target = $region56
      $region55: #{_device_forward_rel.5} parent=51 // pred_region
        %p1764 = scmp.lt.s32.totalorder %s18, 2
        %s1765 = scalar_select %p1764, %s18, 2
        %s1766 = smul.addr %s1765, 2
        %s1767 = smul.addr %s1766, 8
        %s1768 = scalar_lea.vmem %s6, %s1767
      $region56: #{_device_forward_rel.5} parent=51 // pred_fallthru
        _
    $region52: #{_device_forward_rel.5} parent=5 // pred_fallthru
      _
  $region6: #{_device_forward_rel.5} parent=0 // loop_footer
    %s16 = sadd.s32 1, %s12
  $region7: #{_device_forward_rel.5} parent=0 // loop_footer_branch
    %11 = sbr.rel target = $region3
  $region8: #{_device_forward_rel.5} parent=0 // loop_exit
    _

// kernel: _device_forward_rel.7
$region0: #{_device_forward_rel.7}
  #allocation0 [shape = 'u32[]', space=smem, size = 0x4, offset = 0x4, fixed_abs, tag = 'smem constant byte address 0x4 - core index']
  #allocation1 [shape = 'u32[144,128]{1,0:T(1,128)}', space=vmem, size = 0x12000, scoped, tag = 'internal scratch']
  %s0 = inlined_call_operand.vmem [shape: f32[30,32], index: 0, kind: input, shape index: {}]
  %s1 = inlined_call_operand.vmem [shape: f32[8,32], index: 1, kind: input, shape index: {}]
  %s2 = inlined_call_operand.vmem [shape: f32[32,8], index: 2, kind: input, shape index: {}]
  %s3 = inlined_call_operand.vmem [shape: f32[30,30], index: 3, kind: input, shape index: {}]
  %s4 = inlined_call_operand.vmem [shape: f32[1,32], index: 4, kind: input, shape index: {}]
  %s5 = inlined_call_operand.vmem [shape: f32[30,32], index: 5, kind: output, shape index: {}]
  %s6 = sld [smem:[#allocation0]]
  $region30: #{_device_forward_rel.7} parent=0
    _
  %s8 = ssub.s32 1, %s6
  %s9 = scalar_select 0, %s8, %s6
  // Predicated region
  $region2: #{_device_forward_rel.7} parent=0 // pred_check
    _
  $region3: #{_device_forward_rel.7} parent=0 // pred_check_branch
    %11 = sbr.rel (0) target = $region5
  $region4: #{_device_forward_rel.7} parent=0 // pred_region
    _
  $region5: #{_device_forward_rel.7} parent=0 // pred_fallthru
    _
  // Predicated region
  $region6: #{_device_forward_rel.7} parent=0 // pred_check
    _
  $region7: #{_device_forward_rel.7} parent=0 // pred_check_branch
    %13 = sbr.rel (0) target = $region9
  $region8: #{_device_forward_rel.7} parent=0 // pred_region
    _
  $region9: #{_device_forward_rel.7} parent=0 // pred_fallthru
    _
  // Predicated region
  $region10: #{_device_forward_rel.7} parent=0 // pred_check
    _
  $region11: #{_device_forward_rel.7} parent=0 // pred_check_branch
    %15 = sbr.rel (0) target = $region13
  $region12: #{_device_forward_rel.7} parent=0 // pred_region
    _
  $region13: #{_device_forward_rel.7} parent=0 // pred_fallthru
    _
  // Predicated region
  $region14: #{_device_forward_rel.7} parent=0 // pred_check
    _
  $region15: #{_device_forward_rel.7} parent=0 // pred_check_branch
    %17 = sbr.rel (0) target = $region17
  $region16: #{_device_forward_rel.7} parent=0 // pred_region
    _
  $region17: #{_device_forward_rel.7} parent=0 // pred_fallthru
    _
  // Predicated region
  $region18: #{_device_forward_rel.7} parent=0 // pred_check
    _
  $region19: #{_device_forward_rel.7} parent=0 // pred_check_branch
    %19 = sbr.rel (0) target = $region21
  $region20: #{_device_forward_rel.7} parent=0 // pred_region
    _
  $region21: #{_device_forward_rel.7} parent=0 // pred_fallthru
    _
  %v20 = vld [vmem:[%s0] sm:$0xff]
  %v21 = vld [vmem:[%s0 + $0x8] sm:$0xff]
  %v22 = vld [vmem:[%s0 + $0x10] sm:$0xff]
  %v23 = vld [vmem:[%s0 + $0x18] sm:$0x3f]
  %v24 = vld [vmem:[%s1] sm:$0xff]
  %v25 = vld [vmem:[%s2] sm:$0xff]
  %v26 = vld [vmem:[%s2 + $0x8] sm:$0xff]
  %v27 = vld [vmem:[%s2 + $0x10] sm:$0xff]
  %v28 = vld [vmem:[%s2 + $0x18] sm:$0xff]
  %v29 = vld [vmem:[%s3] sm:$0xff]
  %v30 = vld [vmem:[%s3 + $0x8] sm:$0xff]
  %v31 = vld [vmem:[%s3 + $0x10] sm:$0xff]
  %v32 = vld [vmem:[%s3 + $0x18] sm:$0x3f]
  %vm33 = vcmask 261120
  %v35 = vsel %vm33, %v20, 0
  %v38 = vsel %vm33, %v21, 0
  %v41 = vsel %vm33, %v22, 0
  %v44 = vsel %vm33, %v23, 0
  %46 = vmatprep.subr.mxu0 0.0
  %47 = vmatpush1.msra.mxu0 %v25
  %48 = vmatprep.subr.mxu0 0.0
  %49 = vmatpush1.msra.mxu0 %v26
  %50 = vmatprep.subr.mxu0 0.0
  %51 = vmatpush1.msra.mxu0 %v27
  %52 = vmatprep.subr.mxu0 0.0
  %53 = vmatpush1.msra.mxu0 %v28
  %54 = vmatprep.subr.mxu0 0.0
  %55 = vmatpush1.msra.mxu0 0.0
  %56 = vmatprep.subr.mxu0 0.0
  %57 = vmatpush1.msra.mxu0 0.0
  %58 = vmatprep.subr.mxu0 0.0
  %59 = vmatpush1.msra.mxu0 0.0
  %60 = vmatprep.subr.mxu0 0.0
  %61 = vmatpush1.msra.mxu0 0.0
  %62 = vmatprep.subr.mxu0 0.0
  %63 = vmatpush1.msra.mxu0 0.0
  %64 = vmatprep.subr.mxu0 0.0
  %65 = vmatpush1.msra.mxu0 0.0
  %66 = vmatprep.subr.mxu0 0.0
  %67 = vmatpush1.msra.mxu0 0.0
  %68 = vmatprep.subr.mxu0 0.0
  %69 = vmatpush1.msra.mxu0 0.0
  %70 = vmatprep.subr.mxu0 0.0
  %71 = vmatpush1.msra.mxu0 0.0
  %72 = vmatprep.subr.mxu0 0.0
  %73 = vmatpush1.msra.mxu0 0.0
  %74 = vmatprep.subr.mxu0 0.0
  %75 = vmatpush1.msra.mxu0 0.0
  %76 = vmatprep.subr.mxu0 0.0
  %77 = vmatpush1.msra.mxu0 0.0
  %78 = vmatprep.subr.mxu0 0.0
  %79 = vmatpush1.msra.mxu0 0.0
  %80 = vmatprep.subr.mxu0 0.0
  %81 = vmatpush1.msra.mxu0 0.0
  %82 = vmatprep.subr.mxu0 0.0
  %83 = vmatpush1.msra.mxu0 0.0
  %84 = vmatprep.subr.mxu0 0.0
  %85 = vmatpush1.msra.mxu0 0.0
  %86 = vmatprep.subr.mxu0 0.0
  %87 = vmatpush1.msra.mxu0 0.0
  %88 = vmatprep.subr.mxu0 0.0
  %89 = vmatpush1.msra.mxu0 0.0
  %90 = vmatprep.subr.mxu0 0.0
  %91 = vmatpush1.msra.mxu0 0.0
  %92 = vmatprep.subr.mxu0 0.0
  %93 = vmatpush1.msra.mxu0 0.0
  %94 = vmatprep.subr.mxu0 0.0
  %95 = vmatpush1.msra.mxu0 0.0
  %96 = vmatprep.subr.mxu0 0.0
  %97 = vmatpush1.msra.mxu0 0.0
  %98 = vmatprep.subr.mxu0 0.0
  %99 = vmatpush1.msra.mxu0 0.0
  %100 = vmatprep.subr.mxu0 0.0
  %101 = vmatpush1.msra.mxu0 0.0
  %102 = vmatprep.subr.mxu0 0.0
  %103 = vmatpush1.msra.mxu0 0.0
  %104 = vmatprep.subr.mxu0 0.0
  %105 = vmatpush1.msra.mxu0 0.0
  %106 = vmatprep.subr.mxu0 0.0
  %107 = vmatpush1.msra.mxu0 0.0
  %108 = vmatprep.subr.mxu0 0.0
  %109 = vmatpush1.msra.mxu0 0.0
  %110 = vmatprep.mubr.f32.mxu0 0.0
  %111 = vmatmul.mubr.f32.gmra.mrb[0].mxu0 %v35
  %v112 = vpop.f32.mrb[0].mxu0
  %v113 = vadd.f32 0.0, %v112
  %v114 = vpop.f32.mrb[0].mxu0
  %115 = vmatprep.mubr.f32.mxu0 0.0
  %116 = vmatmul.mubr.f32.gmra.mrb[0].mxu0 %v38
  %v117 = vpop.f32.mrb[0].mxu0
  %v118 = vadd.f32 0.0, %v117
  %v119 = vpop.f32.mrb[0].mxu0
  %120 = vmatprep.mubr.f32.mxu0 0.0
  %121 = vmatmul.mubr.f32.gmra.mrb[0].mxu0 %v41
  %v122 = vpop.f32.mrb[0].mxu0
  %v123 = vadd.f32 0.0, %v122
  %v124 = vpop.f32.mrb[0].mxu0
  %125 = vmatprep.mubr.f32.mxu0 0.0
  %126 = vmatmul.mubr.f32.gmra.mrb[0].mxu0 %v44
  %v127 = vpop.f32.mrb[0].mxu0
  %v128 = vadd.f32 0.0, %v127
  %v129 = vpop.f32.mrb[0].mxu0
  %130 = vdwg.mxu0
  %v132 = vsel %vm33, %v24, 0
  %134 = vmatprep.subr.mxu0 0.0
  %135 = vmatpush1.xpose.msra.mxu0 %v35
  %136 = vmatprep.subr.mxu0 0.0
  %137 = vmatpush1.xpose.msra.mxu0 %v38
  %138 = vmatprep.subr.mxu0 0.0
  %139 = vmatpush1.xpose.msra.mxu0 %v41
  %140 = vmatprep.subr.mxu0 0.0
  %141 = vmatpush1.xpose.msra.mxu0 %v44
  %142 = vmatprep.subr.mxu0 0.0
  %143 = vmatpush1.xpose.msra.mxu0 0.0
  %144 = vmatprep.subr.mxu0 0.0
  %145 = vmatpush1.xpose.msra.mxu0 0.0
  %146 = vmatprep.subr.mxu0 0.0
  %147 = vmatpush1.xpose.msra.mxu0 0.0
  %148 = vmatprep.subr.mxu0 0.0
  %149 = vmatpush1.xpose.msra.mxu0 0.0
  %150 = vmatprep.subr.mxu0 0.0
  %151 = vmatpush1.xpose.msra.mxu0 0.0
  %152 = vmatprep.subr.mxu0 0.0
  %153 = vmatpush1.xpose.msra.mxu0 0.0
  %154 = vmatprep.subr.mxu0 0.0
  %155 = vmatpush1.xpose.msra.mxu0 0.0
  %156 = vmatprep.subr.mxu0 0.0
  %157 = vmatpush1.xpose.msra.mxu0 0.0
  %158 = vmatprep.subr.mxu0 0.0
  %159 = vmatpush1.xpose.msra.mxu0 0.0
  %160 = vmatprep.subr.mxu0 0.0
  %161 = vmatpush1.xpose.msra.mxu0 0.0
  %162 = vmatprep.subr.mxu0 0.0
  %163 = vmatpush1.xpose.msra.mxu0 0.0
  %164 = vmatprep.subr.mxu0 0.0
  %165 = vmatpush1.xpose.msra.mxu0 0.0
  %166 = vmatprep.subr.mxu0 0.0
  %167 = vmatpush1.xpose.msra.mxu0 0.0
  %168 = vmatprep.subr.mxu0 0.0
  %169 = vmatpush1.xpose.msra.mxu0 0.0
  %170 = vmatprep.subr.mxu0 0.0
  %171 = vmatpush1.xpose.msra.mxu0 0.0
  %172 = vmatprep.subr.mxu0 0.0
  %173 = vmatpush1.xpose.msra.mxu0 0.0
  %174 = vmatprep.subr.mxu0 0.0
  %175 = vmatpush1.xpose.msra.mxu0 0.0
  %176 = vmatprep.subr.mxu0 0.0
  %177 = vmatpush1.xpose.msra.mxu0 0.0
  %178 = vmatprep.subr.mxu0 0.0
  %179 = vmatpush1.xpose.msra.mxu0 0.0
  %180 = vmatprep.subr.mxu0 0.0
  %181 = vmatpush1.xpose.msra.mxu0 0.0
  %182 = vmatprep.subr.mxu0 0.0
  %183 = vmatpush1.xpose.msra.mxu0 0.0
  %184 = vmatprep.subr.mxu0 0.0
  %185 = vmatpush1.xpose.msra.mxu0 0.0
  %186 = vmatprep.subr.mxu0 0.0
  %187 = vmatpush1.xpose.msra.mxu0 0.0
  %188 = vmatprep.subr.mxu0 0.0
  %189 = vmatpush1.xpose.msra.mxu0 0.0
  %190 = vmatprep.subr.mxu0 0.0
  %191 = vmatpush1.xpose.msra.mxu0 0.0
  %192 = vmatprep.subr.mxu0 0.0
  %193 = vmatpush1.xpose.msra.mxu0 0.0
  %194 = vmatprep.subr.mxu0 0.0
  %195 = vmatpush1.xpose.msra.mxu0 0.0
  %196 = vmatprep.subr.mxu0 0.0
  %197 = vmatpush1.xpose.msra.mxu0 0.0
  %198 = vmatprep.mubr.f32.mxu0 0.0
  %199 = vmatmul.mubr.f32.gmra.mrb[0].mxu0 %v132
  %v200 = vpop.f32.mrb[0].mxu0
  %v201 = vadd.f32 0.0, %v200
  %v202 = vpop.f32.mrb[0].mxu0
  %203 = vdwg.mxu0
  %205 = vset.pattern.permute.xlu0 0
  %206 = vperm.xlu0 %205, %v113
  %v207 = vpop.permute.xlu0 %206
  %210 = vset.pattern.permute.xlu0 0
  %211 = vperm.xlu0 %210, %v118
  %v212 = vpop.permute.xlu0 %211
  %215 = vset.pattern.permute.xlu0 0
  %216 = vperm.xlu0 %215, %v123
  %v217 = vpop.permute.xlu0 %216
  %220 = vset.pattern.permute.xlu0 0
  %221 = vperm.xlu0 %220, %v128
  %v222 = vpop.permute.xlu0 %221
  %v224 = vlaneseq
  %v225 = vshrl.u32 %v224, 7
  %v226 = vsub.s32 0, %v225
  %v227 = vrot.slane %v201, %v226
  %v228 = vadd.f32 %v207, %v227
  %v229 = vadd.f32 %v212, %v227
  %v230 = vadd.f32 %v217, %v227
  %v231 = vadd.f32 %v222, %v227
  %v232 = vmul.f32 %v228, 0.2
  %v233 = vmul.f32 %v229, 0.2
  %v234 = vmul.f32 %v230, 0.2
  %v235 = vmul.f32 %v231, 0.2
  %v236 = vmax.f32 %v228, %v232
  %v237 = vmax.f32 %v229, %v233
  %v238 = vmax.f32 %v230, %v234
  %v239 = vmax.f32 %v231, %v235
  %v240 = vadd.f32 %v236, %v29
  %v241 = vadd.f32 %v237, %v30
  %v242 = vadd.f32 %v238, %v31
  %v243 = vadd.f32 %v239, %v32
  %vm244 = vcmask 244736
  %v245 = vsel %vm244, %v240, -inf
  %246 = vmax.xlane.f32.xlu0 %v245
  %v247 = vpop.xlane.xlu0 %246
  %v248 = vsel %vm244, %v241, -inf
  %249 = vmax.xlane.f32.xlu0 %v248
  %v250 = vpop.xlane.xlu0 %249
  %v251 = vsel %vm244, %v242, -inf
  %252 = vmax.xlane.f32.xlu0 %v251
  %v253 = vpop.xlane.xlu0 %252
  %vm254 = vcmask 242688
  %v255 = vsel %vm254, %v243, -inf
  %256 = vmax.xlane.f32.xlu0 %v255
  %v257 = vpop.xlane.xlu0 %256
  %v258 = vsub.f32 %v240, %v247
  %v259 = vsub.f32 %v241, %v250
  %v260 = vsub.f32 %v242, %v253
  %v261 = vsub.f32 %v243, %v257
  %v262 = vmul.f32 %v258, 1.442695
  %v263 = vpow.pop %v262
  %v264 = vmul.f32 %v259, 1.442695
  %v265 = vpow.pop %v264
  %v266 = vmul.f32 %v260, 1.442695
  %v267 = vpow.pop %v266
  %v268 = vmul.f32 %v261, 1.442695
  %v269 = vpow.pop %v268
  %v270 = vsel %vm244, %v263, 0.0
  %271 = vadd.xlane.f32.xlu0 %v270
  %v272 = vpop.xlane.xlu0 %271
  %v273 = vsel %vm244, %v265, 0.0
  %274 = vadd.xlane.f32.xlu0 %v273
  %v275 = vpop.xlane.xlu0 %274
  %v276 = vsel %vm244, %v267, 0.0
  %277 = vadd.xlane.f32.xlu0 %v276
  %v278 = vpop.xlane.xlu0 %277
  %v279 = vsel %vm254, %v269, 0.0
  %280 = vadd.xlane.f32.xlu0 %v279
  %v281 = vpop.xlane.xlu0 %280
  %v282 = vrcp.pop %v272
  %v283 = vrcp.pop %v275
  %v284 = vrcp.pop %v278
  %v285 = vrcp.pop %v281
  %v286 = vmul.f32 %v263, %v282
  %v287 = vmul.f32 %v265, %v283
  %v288 = vmul.f32 %v267, %v284
  %v289 = vmul.f32 %v269, %v285
  %290 = vset.pattern.permute.xlu0 1
  %291 = vperm.xlu0 %290, %v113
  %v292 = vpop.permute.xlu0 %291
  %294 = vset.pattern.permute.xlu0 1
  %295 = vperm.xlu0 %294, %v118
  %v296 = vpop.permute.xlu0 %295
  %298 = vset.pattern.permute.xlu0 1
  %299 = vperm.xlu0 %298, %v123
  %v300 = vpop.permute.xlu0 %299
  %302 = vset.pattern.permute.xlu0 1
  %303 = vperm.xlu0 %302, %v128
  %v304 = vpop.permute.xlu0 %303
  %v306 = vlaneseq
  %v307 = vshrl.u32 %v306, 7
  %v308 = vsub.s32 1, %v307
  %v309 = vrot.slane %v201, %v308
  %v310 = vadd.f32 %v292, %v309
  %v311 = vadd.f32 %v296, %v309
  %v312 = vadd.f32 %v300, %v309
  %v313 = vadd.f32 %v304, %v309
  %v314 = vmul.f32 %v310, 0.2
  %v315 = vmul.f32 %v311, 0.2
  %v316 = vmul.f32 %v312, 0.2
  %v317 = vmul.f32 %v313, 0.2
  %v318 = vmax.f32 %v310, %v314
  %v319 = vmax.f32 %v311, %v315
  %v320 = vmax.f32 %v312, %v316
  %v321 = vmax.f32 %v313, %v317
  %v322 = vadd.f32 %v318, %v29
  %v323 = vadd.f32 %v319, %v30
  %v324 = vadd.f32 %v320, %v31
  %v325 = vadd.f32 %v321, %v32
  %v326 = vsel %vm244, %v322, -inf
  %327 = vmax.xlane.f32.xlu0 %v326
  %v328 = vpop.xlane.xlu0 %327
  %v329 = vsel %vm244, %v323, -inf
  %330 = vmax.xlane.f32.xlu0 %v329
  %v331 = vpop.xlane.xlu0 %330
  %v332 = vsel %vm244, %v324, -inf
  %333 = vmax.xlane.f32.xlu0 %v332
  %v334 = vpop.xlane.xlu0 %333
  %v335 = vsel %vm254, %v325, -inf
  %336 = vmax.xlane.f32.xlu0 %v335
  %v337 = vpop.xlane.xlu0 %336
  %v338 = vsub.f32 %v322, %v328
  %v339 = vsub.f32 %v323, %v331
  %v340 = vsub.f32 %v324, %v334
  %v341 = vsub.f32 %v325, %v337
  %v342 = vmul.f32 %v338, 1.442695
  %v343 = vpow.pop %v342
  %v344 = vmul.f32 %v339, 1.442695
  %v345 = vpow.pop %v344
  %v346 = vmul.f32 %v340, 1.442695
  %v347 = vpow.pop %v346
  %v348 = vmul.f32 %v341, 1.442695
  %v349 = vpow.pop %v348
  %v350 = vsel %vm244, %v343, 0.0
  %351 = vadd.xlane.f32.xlu0 %v350
  %v352 = vpop.xlane.xlu0 %351
  %v353 = vsel %vm244, %v345, 0.0
  %354 = vadd.xlane.f32.xlu0 %v353
  %v355 = vpop.xlane.xlu0 %354
  %v356 = vsel %vm244, %v347, 0.0
  %357 = vadd.xlane.f32.xlu0 %v356
  %v358 = vpop.xlane.xlu0 %357
  %v359 = vsel %vm254, %v349, 0.0
  %360 = vadd.xlane.f32.xlu0 %v359
  %v361 = vpop.xlane.xlu0 %360
  %v362 = vrcp.pop %v352
  %v363 = vrcp.pop %v355
  %v364 = vrcp.pop %v358
  %v365 = vrcp.pop %v361
  %v366 = vmul.f32 %v343, %v362
  %v367 = vmul.f32 %v345, %v363
  %v368 = vmul.f32 %v347, %v364
  %v369 = vmul.f32 %v349, %v365
  %370 = vset.pattern.permute.xlu0 2
  %371 = vperm.xlu0 %370, %v113
  %v372 = vpop.permute.xlu0 %371
  %374 = vset.pattern.permute.xlu0 2
  %375 = vperm.xlu0 %374, %v118
  %v376 = vpop.permute.xlu0 %375
  %378 = vset.pattern.permute.xlu0 2
  %379 = vperm.xlu0 %378, %v123
  %v380 = vpop.permute.xlu0 %379
  %382 = vset.pattern.permute.xlu0 2
  %383 = vperm.xlu0 %382, %v128
  %v384 = vpop.permute.xlu0 %383
  %v386 = vlaneseq
  %v387 = vshrl.u32 %v386, 7
  %v388 = vsub.s32 2, %v387
  %v389 = vrot.slane %v201, %v388
  %v390 = vadd.f32 %v372, %v389
  %v391 = vadd.f32 %v376, %v389
  %v392 = vadd.f32 %v380, %v389
  %v393 = vadd.f32 %v384, %v389
  %v394 = vmul.f32 %v390, 0.2
  %v395 = vmul.f32 %v391, 0.2
  %v396 = vmul.f32 %v392, 0.2
  %v397 = vmul.f32 %v393, 0.2
  %v398 = vmax.f32 %v390, %v394
  %v399 = vmax.f32 %v391, %v395
  %v400 = vmax.f32 %v392, %v396
  %v401 = vmax.f32 %v393, %v397
  %v402 = vadd.f32 %v398, %v29
  %v403 = vadd.f32 %v399, %v30
  %v404 = vadd.f32 %v400, %v31
  %v405 = vadd.f32 %v401, %v32
  %v406 = vsel %vm244, %v402, -inf
  %407 = vmax.xlane.f32.xlu0 %v406
  %v408 = vpop.xlane.xlu0 %407
  %v409 = vsel %vm244, %v403, -inf
  %410 = vmax.xlane.f32.xlu0 %v409
  %v411 = vpop.xlane.xlu0 %410
  %v412 = vsel %vm244, %v404, -inf
  %413 = vmax.xlane.f32.xlu0 %v412
  %v414 = vpop.xlane.xlu0 %413
  %v415 = vsel %vm254, %v405, -inf
  %416 = vmax.xlane.f32.xlu0 %v415
  %v417 = vpop.xlane.xlu0 %416
  %v418 = vsub.f32 %v402, %v408
  %v419 = vsub.f32 %v403, %v411
  %v420 = vsub.f32 %v404, %v414
  %v421 = vsub.f32 %v405, %v417
  %v422 = vmul.f32 %v418, 1.442695
  %v423 = vpow.pop %v422
  %v424 = vmul.f32 %v419, 1.442695
  %v425 = vpow.pop %v424
  %v426 = vmul.f32 %v420, 1.442695
  %v427 = vpow.pop %v426
  %v428 = vmul.f32 %v421, 1.442695
  %v429 = vpow.pop %v428
  %v430 = vsel %vm244, %v423, 0.0
  %431 = vadd.xlane.f32.xlu0 %v430
  %v432 = vpop.xlane.xlu0 %431
  %v433 = vsel %vm244, %v425, 0.0
  %434 = vadd.xlane.f32.xlu0 %v433
  %v435 = vpop.xlane.xlu0 %434
  %v436 = vsel %vm244, %v427, 0.0
  %437 = vadd.xlane.f32.xlu0 %v436
  %v438 = vpop.xlane.xlu0 %437
  %v439 = vsel %vm254, %v429, 0.0
  %440 = vadd.xlane.f32.xlu0 %v439
  %v441 = vpop.xlane.xlu0 %440
  %v442 = vrcp.pop %v432
  %v443 = vrcp.pop %v435
  %v444 = vrcp.pop %v438
  %v445 = vrcp.pop %v441
  %v446 = vmul.f32 %v423, %v442
  %v447 = vmul.f32 %v425, %v443
  %v448 = vmul.f32 %v427, %v444
  %v449 = vmul.f32 %v429, %v445
  %450 = vset.pattern.permute.xlu0 3
  %451 = vperm.xlu0 %450, %v113
  %v452 = vpop.permute.xlu0 %451
  %454 = vset.pattern.permute.xlu0 3
  %455 = vperm.xlu0 %454, %v118
  %v456 = vpop.permute.xlu0 %455
  %458 = vset.pattern.permute.xlu0 3
  %459 = vperm.xlu0 %458, %v123
  %v460 = vpop.permute.xlu0 %459
  %462 = vset.pattern.permute.xlu0 3
  %463 = vperm.xlu0 %462, %v128
  %v464 = vpop.permute.xlu0 %463
  %v466 = vlaneseq
  %v467 = vshrl.u32 %v466, 7
  %v468 = vsub.s32 3, %v467
  %v469 = vrot.slane %v201, %v468
  %v470 = vadd.f32 %v452, %v469
  %v471 = vadd.f32 %v456, %v469
  %v472 = vadd.f32 %v460, %v469
  %v473 = vadd.f32 %v464, %v469
  %v474 = vmul.f32 %v470, 0.2
  %v475 = vmul.f32 %v471, 0.2
  %v476 = vmul.f32 %v472, 0.2
  %v477 = vmul.f32 %v473, 0.2
  %v478 = vmax.f32 %v470, %v474
  %v479 = vmax.f32 %v471, %v475
  %v480 = vmax.f32 %v472, %v476
  %v481 = vmax.f32 %v473, %v477
  %v482 = vadd.f32 %v478, %v29
  %v483 = vadd.f32 %v479, %v30
  %v484 = vadd.f32 %v480, %v31
  %v485 = vadd.f32 %v481, %v32
  %v486 = vsel %vm244, %v482, -inf
  %487 = vmax.xlane.f32.xlu0 %v486
  %v488 = vpop.xlane.xlu0 %487
  %v489 = vsel %vm244, %v483, -inf
  %490 = vmax.xlane.f32.xlu0 %v489
  %v491 = vpop.xlane.xlu0 %490
  %v492 = vsel %vm244, %v484, -inf
  %493 = vmax.xlane.f32.xlu0 %v492
  %v494 = vpop.xlane.xlu0 %493
  %v495 = vsel %vm254, %v485, -inf
  %496 = vmax.xlane.f32.xlu0 %v495
  %v497 = vpop.xlane.xlu0 %496
  %v498 = vsub.f32 %v482, %v488
  %v499 = vsub.f32 %v483, %v491
  %v500 = vsub.f32 %v484, %v494
  %v501 = vsub.f32 %v485, %v497
  %v502 = vmul.f32 %v498, 1.442695
  %v503 = vpow.pop %v502
  %v504 = vmul.f32 %v499, 1.442695
  %v505 = vpow.pop %v504
  %v506 = vmul.f32 %v500, 1.442695
  %v507 = vpow.pop %v506
  %v508 = vmul.f32 %v501, 1.442695
  %v509 = vpow.pop %v508
  %v510 = vsel %vm244, %v503, 0.0
  %511 = vadd.xlane.f32.xlu0 %v510
  %v512 = vpop.xlane.xlu0 %511
  %v513 = vsel %vm244, %v505, 0.0
  %514 = vadd.xlane.f32.xlu0 %v513
  %v515 = vpop.xlane.xlu0 %514
  %v516 = vsel %vm244, %v507, 0.0
  %517 = vadd.xlane.f32.xlu0 %v516
  %v518 = vpop.xlane.xlu0 %517
  %v519 = vsel %vm254, %v509, 0.0
  %520 = vadd.xlane.f32.xlu0 %v519
  %v521 = vpop.xlane.xlu0 %520
  %v522 = vrcp.pop %v512
  %v523 = vrcp.pop %v515
  %v524 = vrcp.pop %v518
  %v525 = vrcp.pop %v521
  %v526 = vmul.f32 %v503, %v522
  %v527 = vmul.f32 %v505, %v523
  %v528 = vmul.f32 %v507, %v524
  %v529 = vmul.f32 %v509, %v525
  %530 = vset.pattern.permute.xlu0 4
  %531 = vperm.xlu0 %530, %v113
  %v532 = vpop.permute.xlu0 %531
  %534 = vset.pattern.permute.xlu0 4
  %535 = vperm.xlu0 %534, %v118
  %v536 = vpop.permute.xlu0 %535
  %538 = vset.pattern.permute.xlu0 4
  %539 = vperm.xlu0 %538, %v123
  %v540 = vpop.permute.xlu0 %539
  %542 = vset.pattern.permute.xlu0 4
  %543 = vperm.xlu0 %542, %v128
  %v544 = vpop.permute.xlu0 %543
  %v546 = vlaneseq
  %v547 = vshrl.u32 %v546, 7
  %v548 = vsub.s32 4, %v547
  %v549 = vrot.slane %v201, %v548
  %v550 = vadd.f32 %v532, %v549
  %v551 = vadd.f32 %v536, %v549
  %v552 = vadd.f32 %v540, %v549
  %v553 = vadd.f32 %v544, %v549
  %v554 = vmul.f32 %v550, 0.2
  %v555 = vmul.f32 %v551, 0.2
  %v556 = vmul.f32 %v552, 0.2
  %v557 = vmul.f32 %v553, 0.2
  %v558 = vmax.f32 %v550, %v554
  %v559 = vmax.f32 %v551, %v555
  %v560 = vmax.f32 %v552, %v556
  %v561 = vmax.f32 %v553, %v557
  %v562 = vadd.f32 %v558, %v29
  %v563 = vadd.f32 %v559, %v30
  %v564 = vadd.f32 %v560, %v31
  %v565 = vadd.f32 %v561, %v32
  %v566 = vsel %vm244, %v562, -inf
  %567 = vmax.xlane.f32.xlu0 %v566
  %v568 = vpop.xlane.xlu0 %567
  %v569 = vsel %vm244, %v563, -inf
  %570 = vmax.xlane.f32.xlu0 %v569
  %v571 = vpop.xlane.xlu0 %570
  %v572 = vsel %vm244, %v564, -inf
  %573 = vmax.xlane.f32.xlu0 %v572
  %v574 = vpop.xlane.xlu0 %573
  %v575 = vsel %vm254, %v565, -inf
  %576 = vmax.xlane.f32.xlu0 %v575
  %v577 = vpop.xlane.xlu0 %576
  %v578 = vsub.f32 %v562, %v568
  %v579 = vsub.f32 %v563, %v571
  %v580 = vsub.f32 %v564, %v574
  %v581 = vsub.f32 %v565, %v577
  %v582 = vmul.f32 %v578, 1.442695
  %v583 = vpow.pop %v582
  %v584 = vmul.f32 %v579, 1.442695
  %v585 = vpow.pop %v584
  %v586 = vmul.f32 %v580, 1.442695
  %v587 = vpow.pop %v586
  %v588 = vmul.f32 %v581, 1.442695
  %v589 = vpow.pop %v588
  %v590 = vsel %vm244, %v583, 0.0
  %591 = vadd.xlane.f32.xlu0 %v590
  %v592 = vpop.xlane.xlu0 %591
  %v593 = vsel %vm244, %v585, 0.0
  %594 = vadd.xlane.f32.xlu0 %v593
  %v595 = vpop.xlane.xlu0 %594
  %v596 = vsel %vm244, %v587, 0.0
  %597 = vadd.xlane.f32.xlu0 %v596
  %v598 = vpop.xlane.xlu0 %597
  %v599 = vsel %vm254, %v589, 0.0
  %600 = vadd.xlane.f32.xlu0 %v599
  %v601 = vpop.xlane.xlu0 %600
  %v602 = vrcp.pop %v592
  %v603 = vrcp.pop %v595
  %v604 = vrcp.pop %v598
  %v605 = vrcp.pop %v601
  %v606 = vmul.f32 %v583, %v602
  %v607 = vmul.f32 %v585, %v603
  %v608 = vmul.f32 %v587, %v604
  %v609 = vmul.f32 %v589, %v605
  %610 = vset.pattern.permute.xlu0 5
  %611 = vperm.xlu0 %610, %v113
  %v612 = vpop.permute.xlu0 %611
  %614 = vset.pattern.permute.xlu0 5
  %615 = vperm.xlu0 %614, %v118
  %v616 = vpop.permute.xlu0 %615
  %618 = vset.pattern.permute.xlu0 5
  %619 = vperm.xlu0 %618, %v123
  %v620 = vpop.permute.xlu0 %619
  %622 = vset.pattern.permute.xlu0 5
  %623 = vperm.xlu0 %622, %v128
  %v624 = vpop.permute.xlu0 %623
  %v626 = vlaneseq
  %v627 = vshrl.u32 %v626, 7
  %v628 = vsub.s32 5, %v627
  %v629 = vrot.slane %v201, %v628
  %v630 = vadd.f32 %v612, %v629
  %v631 = vadd.f32 %v616, %v629
  %v632 = vadd.f32 %v620, %v629
  %v633 = vadd.f32 %v624, %v629
  %v634 = vmul.f32 %v630, 0.2
  %v635 = vmul.f32 %v631, 0.2
  %v636 = vmul.f32 %v632, 0.2
  %v637 = vmul.f32 %v633, 0.2
  %v638 = vmax.f32 %v630, %v634
  %v639 = vmax.f32 %v631, %v635
  %v640 = vmax.f32 %v632, %v636
  %v641 = vmax.f32 %v633, %v637
  %v642 = vadd.f32 %v638, %v29
  %v643 = vadd.f32 %v639, %v30
  %v644 = vadd.f32 %v640, %v31
  %v645 = vadd.f32 %v641, %v32
  %v646 = vsel %vm244, %v642, -inf
  %647 = vmax.xlane.f32.xlu0 %v646
  %v648 = vpop.xlane.xlu0 %647
  %v649 = vsel %vm244, %v643, -inf
  %650 = vmax.xlane.f32.xlu0 %v649
  %v651 = vpop.xlane.xlu0 %650
  %v652 = vsel %vm244, %v644, -inf
  %653 = vmax.xlane.f32.xlu0 %v652
  %v654 = vpop.xlane.xlu0 %653
  %v655 = vsel %vm254, %v645, -inf
  %656 = vmax.xlane.f32.xlu0 %v655
  %v657 = vpop.xlane.xlu0 %656
  %v658 = vsub.f32 %v642, %v648
  %v659 = vsub.f32 %v643, %v651
  %v660 = vsub.f32 %v644, %v654
  %v661 = vsub.f32 %v645, %v657
  %v662 = vmul.f32 %v658, 1.442695
  %v663 = vpow.pop %v662
  %v664 = vmul.f32 %v659, 1.442695
  %v665 = vpow.pop %v664
  %v666 = vmul.f32 %v660, 1.442695
  %v667 = vpow.pop %v666
  %v668 = vmul.f32 %v661, 1.442695
  %v669 = vpow.pop %v668
  %v670 = vsel %vm244, %v663, 0.0
  %671 = vadd.xlane.f32.xlu0 %v670
  %v672 = vpop.xlane.xlu0 %671
  %v673 = vsel %vm244, %v665, 0.0
  %674 = vadd.xlane.f32.xlu0 %v673
  %v675 = vpop.xlane.xlu0 %674
  %v676 = vsel %vm244, %v667, 0.0
  %677 = vadd.xlane.f32.xlu0 %v676
  %v678 = vpop.xlane.xlu0 %677
  %v679 = vsel %vm254, %v669, 0.0
  %680 = vadd.xlane.f32.xlu0 %v679
  %v681 = vpop.xlane.xlu0 %680
  %v682 = vrcp.pop %v672
  %v683 = vrcp.pop %v675
  %v684 = vrcp.pop %v678
  %v685 = vrcp.pop %v681
  %v686 = vmul.f32 %v663, %v682
  %v687 = vmul.f32 %v665, %v683
  %v688 = vmul.f32 %v667, %v684
  %v689 = vmul.f32 %v669, %v685
  %690 = vset.pattern.permute.xlu0 6
  %691 = vperm.xlu0 %690, %v113
  %v692 = vpop.permute.xlu0 %691
  %694 = vset.pattern.permute.xlu0 6
  %695 = vperm.xlu0 %694, %v118
  %v696 = vpop.permute.xlu0 %695
  %698 = vset.pattern.permute.xlu0 6
  %699 = vperm.xlu0 %698, %v123
  %v700 = vpop.permute.xlu0 %699
  %702 = vset.pattern.permute.xlu0 6
  %703 = vperm.xlu0 %702, %v128
  %v704 = vpop.permute.xlu0 %703
  %v706 = vlaneseq
  %v707 = vshrl.u32 %v706, 7
  %v708 = vsub.s32 6, %v707
  %v709 = vrot.slane %v201, %v708
  %v710 = vadd.f32 %v692, %v709
  %v711 = vadd.f32 %v696, %v709
  %v712 = vadd.f32 %v700, %v709
  %v713 = vadd.f32 %v704, %v709
  %v714 = vmul.f32 %v710, 0.2
  %v715 = vmul.f32 %v711, 0.2
  %v716 = vmul.f32 %v712, 0.2
  %v717 = vmul.f32 %v713, 0.2
  %v718 = vmax.f32 %v710, %v714
  %v719 = vmax.f32 %v711, %v715
  %v720 = vmax.f32 %v712, %v716
  %v721 = vmax.f32 %v713, %v717
  %v722 = vadd.f32 %v718, %v29
  %v723 = vadd.f32 %v719, %v30
  %v724 = vadd.f32 %v720, %v31
  %v725 = vadd.f32 %v721, %v32
  %v726 = vsel %vm244, %v722, -inf
  %727 = vmax.xlane.f32.xlu0 %v726
  %v728 = vpop.xlane.xlu0 %727
  %v729 = vsel %vm244, %v723, -inf
  %730 = vmax.xlane.f32.xlu0 %v729
  %v731 = vpop.xlane.xlu0 %730
  %v732 = vsel %vm244, %v724, -inf
  %733 = vmax.xlane.f32.xlu0 %v732
  %v734 = vpop.xlane.xlu0 %733
  %v735 = vsel %vm254, %v725, -inf
  %736 = vmax.xlane.f32.xlu0 %v735
  %v737 = vpop.xlane.xlu0 %736
  %v738 = vsub.f32 %v722, %v728
  %v739 = vsub.f32 %v723, %v731
  %v740 = vsub.f32 %v724, %v734
  %v741 = vsub.f32 %v725, %v737
  %v742 = vmul.f32 %v738, 1.442695
  %v743 = vpow.pop %v742
  %v744 = vmul.f32 %v739, 1.442695
  %v745 = vpow.pop %v744
  %v746 = vmul.f32 %v740, 1.442695
  %v747 = vpow.pop %v746
  %v748 = vmul.f32 %v741, 1.442695
  %v749 = vpow.pop %v748
  %v750 = vsel %vm244, %v743, 0.0
  %751 = vadd.xlane.f32.xlu0 %v750
  %v752 = vpop.xlane.xlu0 %751
  %v753 = vsel %vm244, %v745, 0.0
  %754 = vadd.xlane.f32.xlu0 %v753
  %v755 = vpop.xlane.xlu0 %754
  %v756 = vsel %vm244, %v747, 0.0
  %757 = vadd.xlane.f32.xlu0 %v756
  %v758 = vpop.xlane.xlu0 %757
  %v759 = vsel %vm254, %v749, 0.0
  %760 = vadd.xlane.f32.xlu0 %v759
  %v761 = vpop.xlane.xlu0 %760
  %v762 = vrcp.pop %v752
  %v763 = vrcp.pop %v755
  %v764 = vrcp.pop %v758
  %v765 = vrcp.pop %v761
  %v766 = vmul.f32 %v743, %v762
  %v767 = vmul.f32 %v745, %v763
  %v768 = vmul.f32 %v747, %v764
  %v769 = vmul.f32 %v749, %v765
  %770 = vset.pattern.permute.xlu0 7
  %771 = vperm.xlu0 %770, %v113
  %v772 = vpop.permute.xlu0 %771
  %774 = vset.pattern.permute.xlu0 7
  %775 = vperm.xlu0 %774, %v118
  %v776 = vpop.permute.xlu0 %775
  %778 = vset.pattern.permute.xlu0 7
  %779 = vperm.xlu0 %778, %v123
  %v780 = vpop.permute.xlu0 %779
  %782 = vset.pattern.permute.xlu0 7
  %783 = vperm.xlu0 %782, %v128
  %v784 = vpop.permute.xlu0 %783
  %v786 = vlaneseq
  %v787 = vshrl.u32 %v786, 7
  %v788 = vsub.s32 7, %v787
  %v789 = vrot.slane %v201, %v788
  %v790 = vadd.f32 %v772, %v789
  %v791 = vadd.f32 %v776, %v789
  %v792 = vadd.f32 %v780, %v789
  %v793 = vadd.f32 %v784, %v789
  %v794 = vmul.f32 %v790, 0.2
  %v795 = vmul.f32 %v791, 0.2
  %v796 = vmul.f32 %v792, 0.2
  %v797 = vmul.f32 %v793, 0.2
  %v798 = vmax.f32 %v790, %v794
  %v799 = vmax.f32 %v791, %v795
  %v800 = vmax.f32 %v792, %v796
  %v801 = vmax.f32 %v793, %v797
  %v802 = vadd.f32 %v798, %v29
  %v803 = vadd.f32 %v799, %v30
  %v804 = vadd.f32 %v800, %v31
  %v805 = vadd.f32 %v801, %v32
  %v806 = vsel %vm244, %v802, -inf
  %807 = vmax.xlane.f32.xlu0 %v806
  %v808 = vpop.xlane.xlu0 %807
  %v809 = vsel %vm244, %v803, -inf
  %810 = vmax.xlane.f32.xlu0 %v809
  %v811 = vpop.xlane.xlu0 %810
  %v812 = vsel %vm244, %v804, -inf
  %813 = vmax.xlane.f32.xlu0 %v812
  %v814 = vpop.xlane.xlu0 %813
  %v815 = vsel %vm254, %v805, -inf
  %816 = vmax.xlane.f32.xlu0 %v815
  %v817 = vpop.xlane.xlu0 %816
  %v818 = vsub.f32 %v802, %v808
  %v819 = vsub.f32 %v803, %v811
  %v820 = vsub.f32 %v804, %v814
  %v821 = vsub.f32 %v805, %v817
  %v822 = vmul.f32 %v818, 1.442695
  %v823 = vpow.pop %v822
  %v824 = vmul.f32 %v819, 1.442695
  %v825 = vpow.pop %v824
  %v826 = vmul.f32 %v820, 1.442695
  %v827 = vpow.pop %v826
  %v828 = vmul.f32 %v821, 1.442695
  %v829 = vpow.pop %v828
  %v830 = vsel %vm244, %v823, 0.0
  %831 = vadd.xlane.f32.xlu0 %v830
  %v832 = vpop.xlane.xlu0 %831
  %v833 = vsel %vm244, %v825, 0.0
  %834 = vadd.xlane.f32.xlu0 %v833
  %v835 = vpop.xlane.xlu0 %834
  %v836 = vsel %vm244, %v827, 0.0
  %837 = vadd.xlane.f32.xlu0 %v836
  %v838 = vpop.xlane.xlu0 %837
  %v839 = vsel %vm254, %v829, 0.0
  %840 = vadd.xlane.f32.xlu0 %v839
  %v841 = vpop.xlane.xlu0 %840
  %v842 = vrcp.pop %v832
  %v843 = vrcp.pop %v835
  %v844 = vrcp.pop %v838
  %v845 = vrcp.pop %v841
  %v846 = vmul.f32 %v823, %v842
  %v847 = vmul.f32 %v825, %v843
  %v848 = vmul.f32 %v827, %v844
  %v849 = vmul.f32 %v829, %v845
  %v850 = vld [vmem:[%s4] sm:$0x1]
  %v852 = vlaneseq
  %v853 = vshrl.u32 %v852, 7
  %v854 = vsub.s32 0, %v853
  %v855 = vrot.slane %v850, %v854
  %v858 = vsel %vm244, %v286, 0
  %v861 = vsel %vm244, %v287, 0
  %v864 = vsel %vm244, %v288, 0
  %v867 = vsel %vm244, %v289, 0
  %vm869 = vcmask 1045504
  %v870 = vsel %vm869, %v23, 0
  %872 = vmatprep.subr.mxu0 0.0
  %873 = vmatpush1.msra.mxu0 %v20
  %874 = vmatprep.subr.mxu0 0.0
  %875 = vmatpush1.msra.mxu0 %v21
  %876 = vmatprep.subr.mxu0 0.0
  %877 = vmatpush1.msra.mxu0 %v22
  %878 = vmatprep.subr.mxu0 0.0
  %879 = vmatpush1.msra.mxu0 %v870
  %880 = vmatprep.subr.mxu0 0.0
  %881 = vmatpush1.msra.mxu0 0.0
  %882 = vmatprep.subr.mxu0 0.0
  %883 = vmatpush1.msra.mxu0 0.0
  %884 = vmatprep.subr.mxu0 0.0
  %885 = vmatpush1.msra.mxu0 0.0
  %886 = vmatprep.subr.mxu0 0.0
  %887 = vmatpush1.msra.mxu0 0.0
  %888 = vmatprep.subr.mxu0 0.0
  %889 = vmatpush1.msra.mxu0 0.0
  %890 = vmatprep.subr.mxu0 0.0
  %891 = vmatpush1.msra.mxu0 0.0
  %892 = vmatprep.subr.mxu0 0.0
  %893 = vmatpush1.msra.mxu0 0.0
  %894 = vmatprep.subr.mxu0 0.0
  %895 = vmatpush1.msra.mxu0 0.0
  %896 = vmatprep.subr.mxu0 0.0
  %897 = vmatpush1.msra.mxu0 0.0
  %898 = vmatprep.subr.mxu0 0.0
  %899 = vmatpush1.msra.mxu0 0.0
  %900 = vmatprep.subr.mxu0 0.0
  %901 = vmatpush1.msra.mxu0 0.0
  %902 = vmatprep.subr.mxu0 0.0
  %903 = vmatpush1.msra.mxu0 0.0
  %904 = vmatprep.subr.mxu0 0.0
  %905 = vmatpush1.msra.mxu0 0.0
  %906 = vmatprep.subr.mxu0 0.0
  %907 = vmatpush1.msra.mxu0 0.0
  %908 = vmatprep.subr.mxu0 0.0
  %909 = vmatpush1.msra.mxu0 0.0
  %910 = vmatprep.subr.mxu0 0.0
  %911 = vmatpush1.msra.mxu0 0.0
  %912 = vmatprep.subr.mxu0 0.0
  %913 = vmatpush1.msra.mxu0 0.0
  %914 = vmatprep.subr.mxu0 0.0
  %915 = vmatpush1.msra.mxu0 0.0
  %916 = vmatprep.subr.mxu0 0.0
  %917 = vmatpush1.msra.mxu0 0.0
  %918 = vmatprep.subr.mxu0 0.0
  %919 = vmatpush1.msra.mxu0 0.0
  %920 = vmatprep.subr.mxu0 0.0
  %921 = vmatpush1.msra.mxu0 0.0
  %922 = vmatprep.subr.mxu0 0.0
  %923 = vmatpush1.msra.mxu0 0.0
  %924 = vmatprep.subr.mxu0 0.0
  %925 = vmatpush1.msra.mxu0 0.0
  %926 = vmatprep.subr.mxu0 0.0
  %927 = vmatpush1.msra.mxu0 0.0
  %928 = vmatprep.subr.mxu0 0.0
  %929 = vmatpush1.msra.mxu0 0.0
  %930 = vmatprep.subr.mxu0 0.0
  %931 = vmatpush1.msra.mxu0 0.0
  %932 = vmatprep.subr.mxu0 0.0
  %933 = vmatpush1.msra.mxu0 0.0
  %934 = vmatprep.subr.mxu0 0.0
  %935 = vmatpush1.msra.mxu0 0.0
  %936 = vmatprep.mubr.f32.mxu0 0.0
  %937 = vmatmul.mubr.f32.gmra.mrb[0].mxu0 %v858
  %v938 = vpop.f32.mrb[0].mxu0
  %v939 = vadd.f32 %v855, %v938
  %v940 = vpop.f32.mrb[0].mxu0
  %941 = vmatprep.mubr.f32.mxu0 0.0
  %942 = vmatmul.mubr.f32.gmra.mrb[0].mxu0 %v861
  %v943 = vpop.f32.mrb[0].mxu0
  %v944 = vadd.f32 %v855, %v943
  %v945 = vpop.f32.mrb[0].mxu0
  %946 = vmatprep.mubr.f32.mxu0 0.0
  %947 = vmatmul.mubr.f32.gmra.mrb[0].mxu0 %v864
  %v948 = vpop.f32.mrb[0].mxu0
  %v949 = vadd.f32 %v855, %v948
  %v950 = vpop.f32.mrb[0].mxu0
  %951 = vmatprep.mubr.f32.mxu0 0.0
  %952 = vmatmul.mubr.f32.gmra.mrb[0].mxu0 %v867
  %v953 = vpop.f32.mrb[0].mxu0
  %v954 = vadd.f32 %v855, %v953
  %v955 = vpop.f32.mrb[0].mxu0
  %956 = vdwg.mxu0
  %vm957 = vcmask 31744
  %958 = vst.msk [vmem:[%s5] sm:$0xff] %vm957, %v939
  %959 = vst.msk [vmem:[%s5 + $0x8] sm:$0xff] %vm957, %v944
  %960 = vst.msk [vmem:[%s5 + $0x10] sm:$0xff] %vm957, %v949
  %vm961 = vcmask 29696
  %962 = vst.msk [vmem:[%s5 + $0x18] sm:$0x3f] %vm961, %v954
  %963 = vrot.lane.b32.xlu0 %v20, 124
  %v964 = vpop.permute.xlu0 %963
  %965 = vrot.lane.b32.xlu0 %v21, 124
  %v966 = vpop.permute.xlu0 %965
  %967 = vrot.lane.b32.xlu0 %v22, 124
  %v968 = vpop.permute.xlu0 %967
  %969 = vrot.lane.b32.xlu0 %v23, 124
  %v970 = vpop.permute.xlu0 %969
  %974 = vrot.lane.b32.xlu0 %v855, 124
  %v975 = vpop.permute.xlu0 %974
  %v978 = vsel %vm244, %v366, 0
  %v981 = vsel %vm244, %v367, 0
  %v984 = vsel %vm244, %v368, 0
  %v987 = vsel %vm244, %v369, 0
  %v989 = vsel %vm869, %v970, 0
  %991 = vmatprep.subr.mxu0 0.0
  %992 = vmatpush1.msra.mxu0 %v964
  %993 = vmatprep.subr.mxu0 0.0
  %994 = vmatpush1.msra.mxu0 %v966
  %995 = vmatprep.subr.mxu0 0.0
  %996 = vmatpush1.msra.mxu0 %v968
  %997 = vmatprep.subr.mxu0 0.0
  %998 = vmatpush1.msra.mxu0 %v989
  %999 = vmatprep.subr.mxu0 0.0
  %1000 = vmatpush1.msra.mxu0 0.0
  %1001 = vmatprep.subr.mxu0 0.0
  %1002 = vmatpush1.msra.mxu0 0.0
  %1003 = vmatprep.subr.mxu0 0.0
  %1004 = vmatpush1.msra.mxu0 0.0
  %1005 = vmatprep.subr.mxu0 0.0
  %1006 = vmatpush1.msra.mxu0 0.0
  %1007 = vmatprep.subr.mxu0 0.0
  %1008 = vmatpush1.msra.mxu0 0.0
  %1009 = vmatprep.subr.mxu0 0.0
  %1010 = vmatpush1.msra.mxu0 0.0
  %1011 = vmatprep.subr.mxu0 0.0
  %1012 = vmatpush1.msra.mxu0 0.0
  %1013 = vmatprep.subr.mxu0 0.0
  %1014 = vmatpush1.msra.mxu0 0.0
  %1015 = vmatprep.subr.mxu0 0.0
  %1016 = vmatpush1.msra.mxu0 0.0
  %1017 = vmatprep.subr.mxu0 0.0
  %1018 = vmatpush1.msra.mxu0 0.0
  %1019 = vmatprep.subr.mxu0 0.0
  %1020 = vmatpush1.msra.mxu0 0.0
  %1021 = vmatprep.subr.mxu0 0.0
  %1022 = vmatpush1.msra.mxu0 0.0
  %1023 = vmatprep.subr.mxu0 0.0
  %1024 = vmatpush1.msra.mxu0 0.0
  %1025 = vmatprep.subr.mxu0 0.0
  %1026 = vmatpush1.msra.mxu0 0.0
  %1027 = vmatprep.subr.mxu0 0.0
  %1028 = vmatpush1.msra.mxu0 0.0
  %1029 = vmatprep.subr.mxu0 0.0
  %1030 = vmatpush1.msra.mxu0 0.0
  %1031 = vmatprep.subr.mxu0 0.0
  %1032 = vmatpush1.msra.mxu0 0.0
  %1033 = vmatprep.subr.mxu0 0.0
  %1034 = vmatpush1.msra.mxu0 0.0
  %1035 = vmatprep.subr.mxu0 0.0
  %1036 = vmatpush1.msra.mxu0 0.0
  %1037 = vmatprep.subr.mxu0 0.0
  %1038 = vmatpush1.msra.mxu0 0.0
  %1039 = vmatprep.subr.mxu0 0.0
  %1040 = vmatpush1.msra.mxu0 0.0
  %1041 = vmatprep.subr.mxu0 0.0
  %1042 = vmatpush1.msra.mxu0 0.0
  %1043 = vmatprep.subr.mxu0 0.0
  %1044 = vmatpush1.msra.mxu0 0.0
  %1045 = vmatprep.subr.mxu0 0.0
  %1046 = vmatpush1.msra.mxu0 0.0
  %1047 = vmatprep.subr.mxu0 0.0
  %1048 = vmatpush1.msra.mxu0 0.0
  %1049 = vmatprep.subr.mxu0 0.0
  %1050 = vmatpush1.msra.mxu0 0.0
  %1051 = vmatprep.subr.mxu0 0.0
  %1052 = vmatpush1.msra.mxu0 0.0
  %1053 = vmatprep.subr.mxu0 0.0
  %1054 = vmatpush1.msra.mxu0 0.0
  %1055 = vmatprep.mubr.f32.mxu0 0.0
  %1056 = vmatmul.mubr.f32.gmra.mrb[0].mxu0 %v978
  %v1057 = vpop.f32.mrb[0].mxu0
  %v1058 = vadd.f32 %v975, %v1057
  %v1059 = vpop.f32.mrb[0].mxu0
  %1060 = vmatprep.mubr.f32.mxu0 0.0
  %1061 = vmatmul.mubr.f32.gmra.mrb[0].mxu0 %v981
  %v1062 = vpop.f32.mrb[0].mxu0
  %v1063 = vadd.f32 %v975, %v1062
  %v1064 = vpop.f32.mrb[0].mxu0
  %1065 = vmatprep.mubr.f32.mxu0 0.0
  %1066 = vmatmul.mubr.f32.gmra.mrb[0].mxu0 %v984
  %v1067 = vpop.f32.mrb[0].mxu0
  %v1068 = vadd.f32 %v975, %v1067
  %v1069 = vpop.f32.mrb[0].mxu0
  %1070 = vmatprep.mubr.f32.mxu0 0.0
  %1071 = vmatmul.mubr.f32.gmra.mrb[0].mxu0 %v987
  %v1072 = vpop.f32.mrb[0].mxu0
  %v1073 = vadd.f32 %v975, %v1072
  %v1074 = vpop.f32.mrb[0].mxu0
  %1075 = vdwg.mxu0
  %1080 = vrot.lane.b32.xlu0 %v1058, 4
  %v1081 = vpop.permute.xlu0 %1080
  %1082 = vrot.lane.b32.xlu0 %v1063, 4
  %v1083 = vpop.permute.xlu0 %1082
  %1084 = vrot.lane.b32.xlu0 %v1068, 4
  %v1085 = vpop.permute.xlu0 %1084
  %1086 = vrot.lane.b32.xlu0 %v1073, 4
  %v1087 = vpop.permute.xlu0 %1086
  %vm1092 = vcmask 64544
  %1093 = vst.msk [vmem:[%s5] sm:$0xff] %vm1092, %v1081
  %1094 = vst.msk [vmem:[%s5 + $0x8] sm:$0xff] %vm1092, %v1083
  %1095 = vst.msk [vmem:[%s5 + $0x10] sm:$0xff] %vm1092, %v1085
  %vm1096 = vcmask 62496
  %1097 = vst.msk [vmem:[%s5 + $0x18] sm:$0x3f] %vm1096, %v1087
  %1098 = vrot.lane.b32.xlu0 %v20, 120
  %v1099 = vpop.permute.xlu0 %1098
  %1100 = vrot.lane.b32.xlu0 %v21, 120
  %v1101 = vpop.permute.xlu0 %1100
  %1102 = vrot.lane.b32.xlu0 %v22, 120
  %v1103 = vpop.permute.xlu0 %1102
  %1104 = vrot.lane.b32.xlu0 %v23, 120
  %v1105 = vpop.permute.xlu0 %1104
  %1109 = vrot.lane.b32.xlu0 %v855, 120
  %v1110 = vpop.permute.xlu0 %1109
  %v1113 = vsel %vm244, %v446, 0
  %v1116 = vsel %vm244, %v447, 0
  %v1119 = vsel %vm244, %v448, 0
  %v1122 = vsel %vm244, %v449, 0
  %v1124 = vsel %vm869, %v1105, 0
  %1126 = vmatprep.subr.mxu0 0.0
  %1127 = vmatpush1.msra.mxu0 %v1099
  %1128 = vmatprep.subr.mxu0 0.0
  %1129 = vmatpush1.msra.mxu0 %v1101
  %1130 = vmatprep.subr.mxu0 0.0
  %1131 = vmatpush1.msra.mxu0 %v1103
  %1132 = vmatprep.subr.mxu0 0.0
  %1133 = vmatpush1.msra.mxu0 %v1124
  %1134 = vmatprep.subr.mxu0 0.0
  %1135 = vmatpush1.msra.mxu0 0.0
  %1136 = vmatprep.subr.mxu0 0.0
  %1137 = vmatpush1.msra.mxu0 0.0
  %1138 = vmatprep.subr.mxu0 0.0
  %1139 = vmatpush1.msra.mxu0 0.0
  %1140 = vmatprep.subr.mxu0 0.0
  %1141 = vmatpush1.msra.mxu0 0.0
  %1142 = vmatprep.subr.mxu0 0.0
  %1143 = vmatpush1.msra.mxu0 0.0
  %1144 = vmatprep.subr.mxu0 0.0
  %1145 = vmatpush1.msra.mxu0 0.0
  %1146 = vmatprep.subr.mxu0 0.0
  %1147 = vmatpush1.msra.mxu0 0.0
  %1148 = vmatprep.subr.mxu0 0.0
  %1149 = vmatpush1.msra.mxu0 0.0
  %1150 = vmatprep.subr.mxu0 0.0
  %1151 = vmatpush1.msra.mxu0 0.0
  %1152 = vmatprep.subr.mxu0 0.0
  %1153 = vmatpush1.msra.mxu0 0.0
  %1154 = vmatprep.subr.mxu0 0.0
  %1155 = vmatpush1.msra.mxu0 0.0
  %1156 = vmatprep.subr.mxu0 0.0
  %1157 = vmatpush1.msra.mxu0 0.0
  %1158 = vmatprep.subr.mxu0 0.0
  %1159 = vmatpush1.msra.mxu0 0.0
  %1160 = vmatprep.subr.mxu0 0.0
  %1161 = vmatpush1.msra.mxu0 0.0
  %1162 = vmatprep.subr.mxu0 0.0
  %1163 = vmatpush1.msra.mxu0 0.0
  %1164 = vmatprep.subr.mxu0 0.0
  %1165 = vmatpush1.msra.mxu0 0.0
  %1166 = vmatprep.subr.mxu0 0.0
  %1167 = vmatpush1.msra.mxu0 0.0
  %1168 = vmatprep.subr.mxu0 0.0
  %1169 = vmatpush1.msra.mxu0 0.0
  %1170 = vmatprep.subr.mxu0 0.0
  %1171 = vmatpush1.msra.mxu0 0.0
  %1172 = vmatprep.subr.mxu0 0.0
  %1173 = vmatpush1.msra.mxu0 0.0
  %1174 = vmatprep.subr.mxu0 0.0
  %1175 = vmatpush1.msra.mxu0 0.0
  %1176 = vmatprep.subr.mxu0 0.0
  %1177 = vmatpush1.msra.mxu0 0.0
  %1178 = vmatprep.subr.mxu0 0.0
  %1179 = vmatpush1.msra.mxu0 0.0
  %1180 = vmatprep.subr.mxu0 0.0
  %1181 = vmatpush1.msra.mxu0 0.0
  %1182 = vmatprep.subr.mxu0 0.0
  %1183 = vmatpush1.msra.mxu0 0.0
  %1184 = vmatprep.subr.mxu0 0.0
  %1185 = vmatpush1.msra.mxu0 0.0
  %1186 = vmatprep.subr.mxu0 0.0
  %1187 = vmatpush1.msra.mxu0 0.0
  %1188 = vmatprep.subr.mxu0 0.0
  %1189 = vmatpush1.msra.mxu0 0.0
  %1190 = vmatprep.mubr.f32.mxu0 0.0
  %1191 = vmatmul.mubr.f32.gmra.mrb[0].mxu0 %v1113
  %v1192 = vpop.f32.mrb[0].mxu0
  %v1193 = vadd.f32 %v1110, %v1192
  %v1194 = vpop.f32.mrb[0].mxu0
  %1195 = vmatprep.mubr.f32.mxu0 0.0
  %1196 = vmatmul.mubr.f32.gmra.mrb[0].mxu0 %v1116
  %v1197 = vpop.f32.mrb[0].mxu0
  %v1198 = vadd.f32 %v1110, %v1197
  %v1199 = vpop.f32.mrb[0].mxu0
  %1200 = vmatprep.mubr.f32.mxu0 0.0
  %1201 = vmatmul.mubr.f32.gmra.mrb[0].mxu0 %v1119
  %v1202 = vpop.f32.mrb[0].mxu0
  %v1203 = vadd.f32 %v1110, %v1202
  %v1204 = vpop.f32.mrb[0].mxu0
  %1205 = vmatprep.mubr.f32.mxu0 0.0
  %1206 = vmatmul.mubr.f32.gmra.mrb[0].mxu0 %v1122
  %v1207 = vpop.f32.mrb[0].mxu0
  %v1208 = vadd.f32 %v1110, %v1207
  %v1209 = vpop.f32.mrb[0].mxu0
  %1210 = vdwg.mxu0
  %1215 = vrot.lane.b32.xlu0 %v1193, 8
  %v1216 = vpop.permute.xlu0 %1215
  %1217 = vrot.lane.b32.xlu0 %v1198, 8
  %v1218 = vpop.permute.xlu0 %1217
  %1219 = vrot.lane.b32.xlu0 %v1203, 8
  %v1220 = vpop.permute.xlu0 %1219
  %1221 = vrot.lane.b32.xlu0 %v1208, 8
  %v1222 = vpop.permute.xlu0 %1221
  %vm1227 = vcmask 97344
  %1228 = vst.msk [vmem:[%s5] sm:$0xff] %vm1227, %v1216
  %1229 = vst.msk [vmem:[%s5 + $0x8] sm:$0xff] %vm1227, %v1218
  %1230 = vst.msk [vmem:[%s5 + $0x10] sm:$0xff] %vm1227, %v1220
  %vm1231 = vcmask 95296
  %1232 = vst.msk [vmem:[%s5 + $0x18] sm:$0x3f] %vm1231, %v1222
  %1233 = vrot.lane.b32.xlu0 %v20, 116
  %v1234 = vpop.permute.xlu0 %1233
  %1235 = vrot.lane.b32.xlu0 %v21, 116
  %v1236 = vpop.permute.xlu0 %1235
  %1237 = vrot.lane.b32.xlu0 %v22, 116
  %v1238 = vpop.permute.xlu0 %1237
  %1239 = vrot.lane.b32.xlu0 %v23, 116
  %v1240 = vpop.permute.xlu0 %1239
  %1244 = vrot.lane.b32.xlu0 %v855, 116
  %v1245 = vpop.permute.xlu0 %1244
  %v1248 = vsel %vm244, %v526, 0
  %v1251 = vsel %vm244, %v527, 0
  %v1254 = vsel %vm244, %v528, 0
  %v1257 = vsel %vm244, %v529, 0
  %v1259 = vsel %vm869, %v1240, 0
  %1261 = vmatprep.subr.mxu0 0.0
  %1262 = vmatpush1.msra.mxu0 %v1234
  %1263 = vmatprep.subr.mxu0 0.0
  %1264 = vmatpush1.msra.mxu0 %v1236
  %1265 = vmatprep.subr.mxu0 0.0
  %1266 = vmatpush1.msra.mxu0 %v1238
  %1267 = vmatprep.subr.mxu0 0.0
  %1268 = vmatpush1.msra.mxu0 %v1259
  %1269 = vmatprep.subr.mxu0 0.0
  %1270 = vmatpush1.msra.mxu0 0.0
  %1271 = vmatprep.subr.mxu0 0.0
  %1272 = vmatpush1.msra.mxu0 0.0
  %1273 = vmatprep.subr.mxu0 0.0
  %1274 = vmatpush1.msra.mxu0 0.0
  %1275 = vmatprep.subr.mxu0 0.0
  %1276 = vmatpush1.msra.mxu0 0.0
  %1277 = vmatprep.subr.mxu0 0.0
  %1278 = vmatpush1.msra.mxu0 0.0
  %1279 = vmatprep.subr.mxu0 0.0
  %1280 = vmatpush1.msra.mxu0 0.0
  %1281 = vmatprep.subr.mxu0 0.0
  %1282 = vmatpush1.msra.mxu0 0.0
  %1283 = vmatprep.subr.mxu0 0.0
  %1284 = vmatpush1.msra.mxu0 0.0
  %1285 = vmatprep.subr.mxu0 0.0
  %1286 = vmatpush1.msra.mxu0 0.0
  %1287 = vmatprep.subr.mxu0 0.0
  %1288 = vmatpush1.msra.mxu0 0.0
  %1289 = vmatprep.subr.mxu0 0.0
  %1290 = vmatpush1.msra.mxu0 0.0
  %1291 = vmatprep.subr.mxu0 0.0
  %1292 = vmatpush1.msra.mxu0 0.0
  %1293 = vmatprep.subr.mxu0 0.0
  %1294 = vmatpush1.msra.mxu0 0.0
  %1295 = vmatprep.subr.mxu0 0.0
  %1296 = vmatpush1.msra.mxu0 0.0
  %1297 = vmatprep.subr.mxu0 0.0
  %1298 = vmatpush1.msra.mxu0 0.0
  %1299 = vmatprep.subr.mxu0 0.0
  %1300 = vmatpush1.msra.mxu0 0.0
  %1301 = vmatprep.subr.mxu0 0.0
  %1302 = vmatpush1.msra.mxu0 0.0
  %1303 = vmatprep.subr.mxu0 0.0
  %1304 = vmatpush1.msra.mxu0 0.0
  %1305 = vmatprep.subr.mxu0 0.0
  %1306 = vmatpush1.msra.mxu0 0.0
  %1307 = vmatprep.subr.mxu0 0.0
  %1308 = vmatpush1.msra.mxu0 0.0
  %1309 = vmatprep.subr.mxu0 0.0
  %1310 = vmatpush1.msra.mxu0 0.0
  %1311 = vmatprep.subr.mxu0 0.0
  %1312 = vmatpush1.msra.mxu0 0.0
  %1313 = vmatprep.subr.mxu0 0.0
  %1314 = vmatpush1.msra.mxu0 0.0
  %1315 = vmatprep.subr.mxu0 0.0
  %1316 = vmatpush1.msra.mxu0 0.0
  %1317 = vmatprep.subr.mxu0 0.0
  %1318 = vmatpush1.msra.mxu0 0.0
  %1319 = vmatprep.subr.mxu0 0.0
  %1320 = vmatpush1.msra.mxu0 0.0
  %1321 = vmatprep.subr.mxu0 0.0
  %1322 = vmatpush1.msra.mxu0 0.0
  %1323 = vmatprep.subr.mxu0 0.0
  %1324 = vmatpush1.msra.mxu0 0.0
  %1325 = vmatprep.mubr.f32.mxu0 0.0
  %1326 = vmatmul.mubr.f32.gmra.mrb[0].mxu0 %v1248
  %v1327 = vpop.f32.mrb[0].mxu0
  %v1328 = vadd.f32 %v1245, %v1327
  %v1329 = vpop.f32.mrb[0].mxu0
  %1330 = vmatprep.mubr.f32.mxu0 0.0
  %1331 = vmatmul.mubr.f32.gmra.mrb[0].mxu0 %v1251
  %v1332 = vpop.f32.mrb[0].mxu0
  %v1333 = vadd.f32 %v1245, %v1332
  %v1334 = vpop.f32.mrb[0].mxu0
  %1335 = vmatprep.mubr.f32.mxu0 0.0
  %1336 = vmatmul.mubr.f32.gmra.mrb[0].mxu0 %v1254
  %v1337 = vpop.f32.mrb[0].mxu0
  %v1338 = vadd.f32 %v1245, %v1337
  %v1339 = vpop.f32.mrb[0].mxu0
  %1340 = vmatprep.mubr.f32.mxu0 0.0
  %1341 = vmatmul.mubr.f32.gmra.mrb[0].mxu0 %v1257
  %v1342 = vpop.f32.mrb[0].mxu0
  %v1343 = vadd.f32 %v1245, %v1342
  %v1344 = vpop.f32.mrb[0].mxu0
  %1345 = vdwg.mxu0
  %1350 = vrot.lane.b32.xlu0 %v1328, 12
  %v1351 = vpop.permute.xlu0 %1350
  %1352 = vrot.lane.b32.xlu0 %v1333, 12
  %v1353 = vpop.permute.xlu0 %1352
  %1354 = vrot.lane.b32.xlu0 %v1338, 12
  %v1355 = vpop.permute.xlu0 %1354
  %1356 = vrot.lane.b32.xlu0 %v1343, 12
  %v1357 = vpop.permute.xlu0 %1356
  %vm1362 = vcmask 130144
  %1363 = vst.msk [vmem:[%s5] sm:$0xff] %vm1362, %v1351
  %1364 = vst.msk [vmem:[%s5 + $0x8] sm:$0xff] %vm1362, %v1353
  %1365 = vst.msk [vmem:[%s5 + $0x10] sm:$0xff] %vm1362, %v1355
  %vm1366 = vcmask 128096
  %1367 = vst.msk [vmem:[%s5 + $0x18] sm:$0x3f] %vm1366, %v1357
  %1368 = vrot.lane.b32.xlu0 %v20, 112
  %v1369 = vpop.permute.xlu0 %1368
  %1370 = vrot.lane.b32.xlu0 %v21, 112
  %v1371 = vpop.permute.xlu0 %1370
  %1372 = vrot.lane.b32.xlu0 %v22, 112
  %v1373 = vpop.permute.xlu0 %1372
  %1374 = vrot.lane.b32.xlu0 %v23, 112
  %v1375 = vpop.permute.xlu0 %1374
  %1379 = vrot.lane.b32.xlu0 %v855, 112
  %v1380 = vpop.permute.xlu0 %1379
  %v1383 = vsel %vm244, %v606, 0
  %v1386 = vsel %vm244, %v607, 0
  %v1389 = vsel %vm244, %v608, 0
  %v1392 = vsel %vm244, %v609, 0
  %v1394 = vsel %vm869, %v1375, 0
  %1396 = vmatprep.subr.mxu0 0.0
  %1397 = vmatpush1.msra.mxu0 %v1369
  %1398 = vmatprep.subr.mxu0 0.0
  %1399 = vmatpush1.msra.mxu0 %v1371
  %1400 = vmatprep.subr.mxu0 0.0
  %1401 = vmatpush1.msra.mxu0 %v1373
  %1402 = vmatprep.subr.mxu0 0.0
  %1403 = vmatpush1.msra.mxu0 %v1394
  %1404 = vmatprep.subr.mxu0 0.0
  %1405 = vmatpush1.msra.mxu0 0.0
  %1406 = vmatprep.subr.mxu0 0.0
  %1407 = vmatpush1.msra.mxu0 0.0
  %1408 = vmatprep.subr.mxu0 0.0
  %1409 = vmatpush1.msra.mxu0 0.0
  %1410 = vmatprep.subr.mxu0 0.0
  %1411 = vmatpush1.msra.mxu0 0.0
  %1412 = vmatprep.subr.mxu0 0.0
  %1413 = vmatpush1.msra.mxu0 0.0
  %1414 = vmatprep.subr.mxu0 0.0
  %1415 = vmatpush1.msra.mxu0 0.0
  %1416 = vmatprep.subr.mxu0 0.0
  %1417 = vmatpush1.msra.mxu0 0.0
  %1418 = vmatprep.subr.mxu0 0.0
  %1419 = vmatpush1.msra.mxu0 0.0
  %1420 = vmatprep.subr.mxu0 0.0
  %1421 = vmatpush1.msra.mxu0 0.0
  %1422 = vmatprep.subr.mxu0 0.0
  %1423 = vmatpush1.msra.mxu0 0.0
  %1424 = vmatprep.subr.mxu0 0.0
  %1425 = vmatpush1.msra.mxu0 0.0
  %1426 = vmatprep.subr.mxu0 0.0
  %1427 = vmatpush1.msra.mxu0 0.0
  %1428 = vmatprep.subr.mxu0 0.0
  %1429 = vmatpush1.msra.mxu0 0.0
  %1430 = vmatprep.subr.mxu0 0.0
  %1431 = vmatpush1.msra.mxu0 0.0
  %1432 = vmatprep.subr.mxu0 0.0
  %1433 = vmatpush1.msra.mxu0 0.0
  %1434 = vmatprep.subr.mxu0 0.0
  %1435 = vmatpush1.msra.mxu0 0.0
  %1436 = vmatprep.subr.mxu0 0.0
  %1437 = vmatpush1.msra.mxu0 0.0
  %1438 = vmatprep.subr.mxu0 0.0
  %1439 = vmatpush1.msra.mxu0 0.0
  %1440 = vmatprep.subr.mxu0 0.0
  %1441 = vmatpush1.msra.mxu0 0.0
  %1442 = vmatprep.subr.mxu0 0.0
  %1443 = vmatpush1.msra.mxu0 0.0
  %1444 = vmatprep.subr.mxu0 0.0
  %1445 = vmatpush1.msra.mxu0 0.0
  %1446 = vmatprep.subr.mxu0 0.0
  %1447 = vmatpush1.msra.mxu0 0.0
  %1448 = vmatprep.subr.mxu0 0.0
  %1449 = vmatpush1.msra.mxu0 0.0
  %1450 = vmatprep.subr.mxu0 0.0
  %1451 = vmatpush1.msra.mxu0 0.0
  %1452 = vmatprep.subr.mxu0 0.0
  %1453 = vmatpush1.msra.mxu0 0.0
  %1454 = vmatprep.subr.mxu0 0.0
  %1455 = vmatpush1.msra.mxu0 0.0
  %1456 = vmatprep.subr.mxu0 0.0
  %1457 = vmatpush1.msra.mxu0 0.0
  %1458 = vmatprep.subr.mxu0 0.0
  %1459 = vmatpush1.msra.mxu0 0.0
  %1460 = vmatprep.mubr.f32.mxu0 0.0
  %1461 = vmatmul.mubr.f32.gmra.mrb[0].mxu0 %v1383
  %v1462 = vpop.f32.mrb[0].mxu0
  %v1463 = vadd.f32 %v1380, %v1462
  %v1464 = vpop.f32.mrb[0].mxu0
  %1465 = vmatprep.mubr.f32.mxu0 0.0
  %1466 = vmatmul.mubr.f32.gmra.mrb[0].mxu0 %v1386
  %v1467 = vpop.f32.mrb[0].mxu0
  %v1468 = vadd.f32 %v1380, %v1467
  %v1469 = vpop.f32.mrb[0].mxu0
  %1470 = vmatprep.mubr.f32.mxu0 0.0
  %1471 = vmatmul.mubr.f32.gmra.mrb[0].mxu0 %v1389
  %v1472 = vpop.f32.mrb[0].mxu0
  %v1473 = vadd.f32 %v1380, %v1472
  %v1474 = vpop.f32.mrb[0].mxu0
  %1475 = vmatprep.mubr.f32.mxu0 0.0
  %1476 = vmatmul.mubr.f32.gmra.mrb[0].mxu0 %v1392
  %v1477 = vpop.f32.mrb[0].mxu0
  %v1478 = vadd.f32 %v1380, %v1477
  %v1479 = vpop.f32.mrb[0].mxu0
  %1480 = vdwg.mxu0
  %1485 = vrot.lane.b32.xlu0 %v1463, 16
  %v1486 = vpop.permute.xlu0 %1485
  %1487 = vrot.lane.b32.xlu0 %v1468, 16
  %v1488 = vpop.permute.xlu0 %1487
  %1489 = vrot.lane.b32.xlu0 %v1473, 16
  %v1490 = vpop.permute.xlu0 %1489
  %1491 = vrot.lane.b32.xlu0 %v1478, 16
  %v1492 = vpop.permute.xlu0 %1491
  %vm1497 = vcmask 162944
  %1498 = vst.msk [vmem:[%s5] sm:$0xff] %vm1497, %v1486
  %1499 = vst.msk [vmem:[%s5 + $0x8] sm:$0xff] %vm1497, %v1488
  %1500 = vst.msk [vmem:[%s5 + $0x10] sm:$0xff] %vm1497, %v1490
  %vm1501 = vcmask 160896
  %1502 = vst.msk [vmem:[%s5 + $0x18] sm:$0x3f] %vm1501, %v1492
  %1503 = vrot.lane.b32.xlu0 %v20, 108
  %v1504 = vpop.permute.xlu0 %1503
  %1505 = vrot.lane.b32.xlu0 %v21, 108
  %v1506 = vpop.permute.xlu0 %1505
  %1507 = vrot.lane.b32.xlu0 %v22, 108
  %v1508 = vpop.permute.xlu0 %1507
  %1509 = vrot.lane.b32.xlu0 %v23, 108
  %v1510 = vpop.permute.xlu0 %1509
  %1514 = vrot.lane.b32.xlu0 %v855, 108
  %v1515 = vpop.permute.xlu0 %1514
  %v1518 = vsel %vm244, %v686, 0
  %v1521 = vsel %vm244, %v687, 0
  %v1524 = vsel %vm244, %v688, 0
  %v1527 = vsel %vm244, %v689, 0
  %v1529 = vsel %vm869, %v1510, 0
  %1531 = vmatprep.subr.mxu0 0.0
  %1532 = vmatpush1.msra.mxu0 %v1504
  %1533 = vmatprep.subr.mxu0 0.0
  %1534 = vmatpush1.msra.mxu0 %v1506
  %1535 = vmatprep.subr.mxu0 0.0
  %1536 = vmatpush1.msra.mxu0 %v1508
  %1537 = vmatprep.subr.mxu0 0.0
  %1538 = vmatpush1.msra.mxu0 %v1529
  %1539 = vmatprep.subr.mxu0 0.0
  %1540 = vmatpush1.msra.mxu0 0.0
  %1541 = vmatprep.subr.mxu0 0.0
  %1542 = vmatpush1.msra.mxu0 0.0
  %1543 = vmatprep.subr.mxu0 0.0
  %1544 = vmatpush1.msra.mxu0 0.0
  %1545 = vmatprep.subr.mxu0 0.0
  %1546 = vmatpush1.msra.mxu0 0.0
  %1547 = vmatprep.subr.mxu0 0.0
  %1548 = vmatpush1.msra.mxu0 0.0
  %1549 = vmatprep.subr.mxu0 0.0
  %1550 = vmatpush1.msra.mxu0 0.0
  %1551 = vmatprep.subr.mxu0 0.0
  %1552 = vmatpush1.msra.mxu0 0.0
  %1553 = vmatprep.subr.mxu0 0.0
  %1554 = vmatpush1.msra.mxu0 0.0
  %1555 = vmatprep.subr.mxu0 0.0
  %1556 = vmatpush1.msra.mxu0 0.0
  %1557 = vmatprep.subr.mxu0 0.0
  %1558 = vmatpush1.msra.mxu0 0.0
  %1559 = vmatprep.subr.mxu0 0.0
  %1560 = vmatpush1.msra.mxu0 0.0
  %1561 = vmatprep.subr.mxu0 0.0
  %1562 = vmatpush1.msra.mxu0 0.0
  %1563 = vmatprep.subr.mxu0 0.0
  %1564 = vmatpush1.msra.mxu0 0.0
  %1565 = vmatprep.subr.mxu0 0.0
  %1566 = vmatpush1.msra.mxu0 0.0
  %1567 = vmatprep.subr.mxu0 0.0
  %1568 = vmatpush1.msra.mxu0 0.0
  %1569 = vmatprep.subr.mxu0 0.0
  %1570 = vmatpush1.msra.mxu0 0.0
  %1571 = vmatprep.subr.mxu0 0.0
  %1572 = vmatpush1.msra.mxu0 0.0
  %1573 = vmatprep.subr.mxu0 0.0
  %1574 = vmatpush1.msra.mxu0 0.0
  %1575 = vmatprep.subr.mxu0 0.0
  %1576 = vmatpush1.msra.mxu0 0.0
  %1577 = vmatprep.subr.mxu0 0.0
  %1578 = vmatpush1.msra.mxu0 0.0
  %1579 = vmatprep.subr.mxu0 0.0
  %1580 = vmatpush1.msra.mxu0 0.0
  %1581 = vmatprep.subr.mxu0 0.0
  %1582 = vmatpush1.msra.mxu0 0.0
  %1583 = vmatprep.subr.mxu0 0.0
  %1584 = vmatpush1.msra.mxu0 0.0
  %1585 = vmatprep.subr.mxu0 0.0
  %1586 = vmatpush1.msra.mxu0 0.0
  %1587 = vmatprep.subr.mxu0 0.0
  %1588 = vmatpush1.msra.mxu0 0.0
  %1589 = vmatprep.subr.mxu0 0.0
  %1590 = vmatpush1.msra.mxu0 0.0
  %1591 = vmatprep.subr.mxu0 0.0
  %1592 = vmatpush1.msra.mxu0 0.0
  %1593 = vmatprep.subr.mxu0 0.0
  %1594 = vmatpush1.msra.mxu0 0.0
  %1595 = vmatprep.mubr.f32.mxu0 0.0
  %1596 = vmatmul.mubr.f32.gmra.mrb[0].mxu0 %v1518
  %v1597 = vpop.f32.mrb[0].mxu0
  %v1598 = vadd.f32 %v1515, %v1597
  %v1599 = vpop.f32.mrb[0].mxu0
  %1600 = vmatprep.mubr.f32.mxu0 0.0
  %1601 = vmatmul.mubr.f32.gmra.mrb[0].mxu0 %v1521
  %v1602 = vpop.f32.mrb[0].mxu0
  %v1603 = vadd.f32 %v1515, %v1602
  %v1604 = vpop.f32.mrb[0].mxu0
  %1605 = vmatprep.mubr.f32.mxu0 0.0
  %1606 = vmatmul.mubr.f32.gmra.mrb[0].mxu0 %v1524
  %v1607 = vpop.f32.mrb[0].mxu0
  %v1608 = vadd.f32 %v1515, %v1607
  %v1609 = vpop.f32.mrb[0].mxu0
  %1610 = vmatprep.mubr.f32.mxu0 0.0
  %1611 = vmatmul.mubr.f32.gmra.mrb[0].mxu0 %v1527
  %v1612 = vpop.f32.mrb[0].mxu0
  %v1613 = vadd.f32 %v1515, %v1612
  %v1614 = vpop.f32.mrb[0].mxu0
  %1615 = vdwg.mxu0
  %1620 = vrot.lane.b32.xlu0 %v1598, 20
  %v1621 = vpop.permute.xlu0 %1620
  %1622 = vrot.lane.b32.xlu0 %v1603, 20
  %v1623 = vpop.permute.xlu0 %1622
  %1624 = vrot.lane.b32.xlu0 %v1608, 20
  %v1625 = vpop.permute.xlu0 %1624
  %1626 = vrot.lane.b32.xlu0 %v1613, 20
  %v1627 = vpop.permute.xlu0 %1626
  %vm1632 = vcmask 195744
  %1633 = vst.msk [vmem:[%s5] sm:$0xff] %vm1632, %v1621
  %1634 = vst.msk [vmem:[%s5 + $0x8] sm:$0xff] %vm1632, %v1623
  %1635 = vst.msk [vmem:[%s5 + $0x10] sm:$0xff] %vm1632, %v1625
  %vm1636 = vcmask 193696
  %1637 = vst.msk [vmem:[%s5 + $0x18] sm:$0x3f] %vm1636, %v1627
  %1638 = vrot.lane.b32.xlu0 %v20, 104
  %v1639 = vpop.permute.xlu0 %1638
  %1640 = vrot.lane.b32.xlu0 %v21, 104
  %v1641 = vpop.permute.xlu0 %1640
  %1642 = vrot.lane.b32.xlu0 %v22, 104
  %v1643 = vpop.permute.xlu0 %1642
  %1644 = vrot.lane.b32.xlu0 %v23, 104
  %v1645 = vpop.permute.xlu0 %1644
  %1649 = vrot.lane.b32.xlu0 %v855, 104
  %v1650 = vpop.permute.xlu0 %1649
  %v1653 = vsel %vm244, %v766, 0
  %v1656 = vsel %vm244, %v767, 0
  %v1659 = vsel %vm244, %v768, 0
  %v1662 = vsel %vm244, %v769, 0
  %v1664 = vsel %vm869, %v1645, 0
  %1666 = vmatprep.subr.mxu0 0.0
  %1667 = vmatpush1.msra.mxu0 %v1639
  %1668 = vmatprep.subr.mxu0 0.0
  %1669 = vmatpush1.msra.mxu0 %v1641
  %1670 = vmatprep.subr.mxu0 0.0
  %1671 = vmatpush1.msra.mxu0 %v1643
  %1672 = vmatprep.subr.mxu0 0.0
  %1673 = vmatpush1.msra.mxu0 %v1664
  %1674 = vmatprep.subr.mxu0 0.0
  %1675 = vmatpush1.msra.mxu0 0.0
  %1676 = vmatprep.subr.mxu0 0.0
  %1677 = vmatpush1.msra.mxu0 0.0
  %1678 = vmatprep.subr.mxu0 0.0
  %1679 = vmatpush1.msra.mxu0 0.0
  %1680 = vmatprep.subr.mxu0 0.0
  %1681 = vmatpush1.msra.mxu0 0.0
  %1682 = vmatprep.subr.mxu0 0.0
  %1683 = vmatpush1.msra.mxu0 0.0
  %1684 = vmatprep.subr.mxu0 0.0
  %1685 = vmatpush1.msra.mxu0 0.0
  %1686 = vmatprep.subr.mxu0 0.0
  %1687 = vmatpush1.msra.mxu0 0.0
  %1688 = vmatprep.subr.mxu0 0.0
  %1689 = vmatpush1.msra.mxu0 0.0
  %1690 = vmatprep.subr.mxu0 0.0
  %1691 = vmatpush1.msra.mxu0 0.0
  %1692 = vmatprep.subr.mxu0 0.0
  %1693 = vmatpush1.msra.mxu0 0.0
  %1694 = vmatprep.subr.mxu0 0.0
  %1695 = vmatpush1.msra.mxu0 0.0
  %1696 = vmatprep.subr.mxu0 0.0
  %1697 = vmatpush1.msra.mxu0 0.0
  %1698 = vmatprep.subr.mxu0 0.0
  %1699 = vmatpush1.msra.mxu0 0.0
  %1700 = vmatprep.subr.mxu0 0.0
  %1701 = vmatpush1.msra.mxu0 0.0
  %1702 = vmatprep.subr.mxu0 0.0
  %1703 = vmatpush1.msra.mxu0 0.0
  %1704 = vmatprep.subr.mxu0 0.0
  %1705 = vmatpush1.msra.mxu0 0.0
  %1706 = vmatprep.subr.mxu0 0.0
  %1707 = vmatpush1.msra.mxu0 0.0
  %1708 = vmatprep.subr.mxu0 0.0
  %1709 = vmatpush1.msra.mxu0 0.0
  %1710 = vmatprep.subr.mxu0 0.0
  %1711 = vmatpush1.msra.mxu0 0.0
  %1712 = vmatprep.subr.mxu0 0.0
  %1713 = vmatpush1.msra.mxu0 0.0
  %1714 = vmatprep.subr.mxu0 0.0
  %1715 = vmatpush1.msra.mxu0 0.0
  %1716 = vmatprep.subr.mxu0 0.0
  %1717 = vmatpush1.msra.mxu0 0.0
  %1718 = vmatprep.subr.mxu0 0.0
  %1719 = vmatpush1.msra.mxu0 0.0
  %1720 = vmatprep.subr.mxu0 0.0
  %1721 = vmatpush1.msra.mxu0 0.0
  %1722 = vmatprep.subr.mxu0 0.0
  %1723 = vmatpush1.msra.mxu0 0.0
  %1724 = vmatprep.subr.mxu0 0.0
  %1725 = vmatpush1.msra.mxu0 0.0
  %1726 = vmatprep.subr.mxu0 0.0
  %1727 = vmatpush1.msra.mxu0 0.0
  %1728 = vmatprep.subr.mxu0 0.0
  %1729 = vmatpush1.msra.mxu0 0.0
  %1730 = vmatprep.mubr.f32.mxu0 0.0
  %1731 = vmatmul.mubr.f32.gmra.mrb[0].mxu0 %v1653
  %v1732 = vpop.f32.mrb[0].mxu0
  %v1733 = vadd.f32 %v1650, %v1732
  %v1734 = vpop.f32.mrb[0].mxu0
  %1735 = vmatprep.mubr.f32.mxu0 0.0
  %1736 = vmatmul.mubr.f32.gmra.mrb[0].mxu0 %v1656
  %v1737 = vpop.f32.mrb[0].mxu0
  %v1738 = vadd.f32 %v1650, %v1737
  %v1739 = vpop.f32.mrb[0].mxu0
  %1740 = vmatprep.mubr.f32.mxu0 0.0
  %1741 = vmatmul.mubr.f32.gmra.mrb[0].mxu0 %v1659
  %v1742 = vpop.f32.mrb[0].mxu0
  %v1743 = vadd.f32 %v1650, %v1742
  %v1744 = vpop.f32.mrb[0].mxu0
  %1745 = vmatprep.mubr.f32.mxu0 0.0
  %1746 = vmatmul.mubr.f32.gmra.mrb[0].mxu0 %v1662
  %v1747 = vpop.f32.mrb[0].mxu0
  %v1748 = vadd.f32 %v1650, %v1747
  %v1749 = vpop.f32.mrb[0].mxu0
  %1750 = vdwg.mxu0
  %1755 = vrot.lane.b32.xlu0 %v1733, 24
  %v1756 = vpop.permute.xlu0 %1755
  %1757 = vrot.lane.b32.xlu0 %v1738, 24
  %v1758 = vpop.permute.xlu0 %1757
  %1759 = vrot.lane.b32.xlu0 %v1743, 24
  %v1760 = vpop.permute.xlu0 %1759
  %1761 = vrot.lane.b32.xlu0 %v1748, 24
  %v1762 = vpop.permute.xlu0 %1761
  %vm1767 = vcmask 228544
  %1768 = vst.msk [vmem:[%s5] sm:$0xff] %vm1767, %v1756
  %1769 = vst.msk [vmem:[%s5 + $0x8] sm:$0xff] %vm1767, %v1758
  %1770 = vst.msk [vmem:[%s5 + $0x10] sm:$0xff] %vm1767, %v1760
  %vm1771 = vcmask 226496
  %1772 = vst.msk [vmem:[%s5 + $0x18] sm:$0x3f] %vm1771, %v1762
  %1773 = vrot.lane.b32.xlu0 %v20, 100
  %v1774 = vpop.permute.xlu0 %1773
  %1775 = vrot.lane.b32.xlu0 %v21, 100
  %v1776 = vpop.permute.xlu0 %1775
  %1777 = vrot.lane.b32.xlu0 %v22, 100
  %v1778 = vpop.permute.xlu0 %1777
  %1779 = vrot.lane.b32.xlu0 %v23, 100
  %v1780 = vpop.permute.xlu0 %1779
  %1784 = vrot.lane.b32.xlu0 %v855, 100
  %v1785 = vpop.permute.xlu0 %1784
  %v1788 = vsel %vm244, %v846, 0
  %v1791 = vsel %vm244, %v847, 0
  %v1794 = vsel %vm244, %v848, 0
  %v1797 = vsel %vm244, %v849, 0
  %v1799 = vsel %vm869, %v1780, 0
  %1801 = vmatprep.subr.mxu0 0.0
  %1802 = vmatpush1.msra.mxu0 %v1774
  %1803 = vmatprep.subr.mxu0 0.0
  %1804 = vmatpush1.msra.mxu0 %v1776
  %1805 = vmatprep.subr.mxu0 0.0
  %1806 = vmatpush1.msra.mxu0 %v1778
  %1807 = vmatprep.subr.mxu0 0.0
  %1808 = vmatpush1.msra.mxu0 %v1799
  %1809 = vmatprep.subr.mxu0 0.0
  %1810 = vmatpush1.msra.mxu0 0.0
  %1811 = vmatprep.subr.mxu0 0.0
  %1812 = vmatpush1.msra.mxu0 0.0
  %1813 = vmatprep.subr.mxu0 0.0
  %1814 = vmatpush1.msra.mxu0 0.0
  %1815 = vmatprep.subr.mxu0 0.0
  %1816 = vmatpush1.msra.mxu0 0.0
  %1817 = vmatprep.subr.mxu0 0.0
  %1818 = vmatpush1.msra.mxu0 0.0
  %1819 = vmatprep.subr.mxu0 0.0
  %1820 = vmatpush1.msra.mxu0 0.0
  %1821 = vmatprep.subr.mxu0 0.0
  %1822 = vmatpush1.msra.mxu0 0.0
  %1823 = vmatprep.subr.mxu0 0.0
  %1824 = vmatpush1.msra.mxu0 0.0
  %1825 = vmatprep.subr.mxu0 0.0
  %1826 = vmatpush1.msra.mxu0 0.0
  %1827 = vmatprep.subr.mxu0 0.0
  %1828 = vmatpush1.msra.mxu0 0.0
  %1829 = vmatprep.subr.mxu0 0.0
  %1830 = vmatpush1.msra.mxu0 0.0
  %1831 = vmatprep.subr.mxu0 0.0
  %1832 = vmatpush1.msra.mxu0 0.0
  %1833 = vmatprep.subr.mxu0 0.0
  %1834 = vmatpush1.msra.mxu0 0.0
  %1835 = vmatprep.subr.mxu0 0.0
  %1836 = vmatpush1.msra.mxu0 0.0
  %1837 = vmatprep.subr.mxu0 0.0
  %1838 = vmatpush1.msra.mxu0 0.0
  %1839 = vmatprep.subr.mxu0 0.0
  %1840 = vmatpush1.msra.mxu0 0.0
  %1841 = vmatprep.subr.mxu0 0.0
  %1842 = vmatpush1.msra.mxu0 0.0
  %1843 = vmatprep.subr.mxu0 0.0
  %1844 = vmatpush1.msra.mxu0 0.0
  %1845 = vmatprep.subr.mxu0 0.0
  %1846 = vmatpush1.msra.mxu0 0.0
  %1847 = vmatprep.subr.mxu0 0.0
  %1848 = vmatpush1.msra.mxu0 0.0
  %1849 = vmatprep.subr.mxu0 0.0
  %1850 = vmatpush1.msra.mxu0 0.0
  %1851 = vmatprep.subr.mxu0 0.0
  %1852 = vmatpush1.msra.mxu0 0.0
  %1853 = vmatprep.subr.mxu0 0.0
  %1854 = vmatpush1.msra.mxu0 0.0
  %1855 = vmatprep.subr.mxu0 0.0
  %1856 = vmatpush1.msra.mxu0 0.0
  %1857 = vmatprep.subr.mxu0 0.0
  %1858 = vmatpush1.msra.mxu0 0.0
  %1859 = vmatprep.subr.mxu0 0.0
  %1860 = vmatpush1.msra.mxu0 0.0
  %1861 = vmatprep.subr.mxu0 0.0
  %1862 = vmatpush1.msra.mxu0 0.0
  %1863 = vmatprep.subr.mxu0 0.0
  %1864 = vmatpush1.msra.mxu0 0.0
  %1865 = vmatprep.mubr.f32.mxu0 0.0
  %1866 = vmatmul.mubr.f32.gmra.mrb[0].mxu0 %v1788
  %v1867 = vpop.f32.mrb[0].mxu0
  %v1868 = vadd.f32 %v1785, %v1867
  %v1869 = vpop.f32.mrb[0].mxu0
  %1870 = vmatprep.mubr.f32.mxu0 0.0
  %1871 = vmatmul.mubr.f32.gmra.mrb[0].mxu0 %v1791
  %v1872 = vpop.f32.mrb[0].mxu0
  %v1873 = vadd.f32 %v1785, %v1872
  %v1874 = vpop.f32.mrb[0].mxu0
  %1875 = vmatprep.mubr.f32.mxu0 0.0
  %1876 = vmatmul.mubr.f32.gmra.mrb[0].mxu0 %v1794
  %v1877 = vpop.f32.mrb[0].mxu0
  %v1878 = vadd.f32 %v1785, %v1877
  %v1879 = vpop.f32.mrb[0].mxu0
  %1880 = vmatprep.mubr.f32.mxu0 0.0
  %1881 = vmatmul.mubr.f32.gmra.mrb[0].mxu0 %v1797
  %v1882 = vpop.f32.mrb[0].mxu0
  %v1883 = vadd.f32 %v1785, %v1882
  %v1884 = vpop.f32.mrb[0].mxu0
  %1885 = vdwg.mxu0
  %1890 = vrot.lane.b32.xlu0 %v1868, 28
  %v1891 = vpop.permute.xlu0 %1890
  %1892 = vrot.lane.b32.xlu0 %v1873, 28
  %v1893 = vpop.permute.xlu0 %1892
  %1894 = vrot.lane.b32.xlu0 %v1878, 28
  %v1895 = vpop.permute.xlu0 %1894
  %1896 = vrot.lane.b32.xlu0 %v1883, 28
  %v1897 = vpop.permute.xlu0 %1896
  %vm1902 = vcmask 261344
  %1903 = vst.msk [vmem:[%s5] sm:$0xff] %vm1902, %v1891
  %1904 = vst.msk [vmem:[%s5 + $0x8] sm:$0xff] %vm1902, %v1893
  %1905 = vst.msk [vmem:[%s5 + $0x10] sm:$0xff] %vm1902, %v1895
  %vm1906 = vcmask 259296
  %1907 = vst.msk [vmem:[%s5 + $0x18] sm:$0x3f] %vm1906, %v1897
  // Predicated region
  $region22: #{_device_forward_rel.7} parent=0 // pred_check
    _
  $region23: #{_device_forward_rel.7} parent=0 // pred_check_branch
    %1909 = sbr.rel (0) target = $region25
  $region24: #{_device_forward_rel.7} parent=0 // pred_region
    _
  $region25: #{_device_forward_rel.7} parent=0 // pred_fallthru
    _
  // Predicated region
  $region26: #{_device_forward_rel.7} parent=0 // pred_check
    _
  $region27: #{_device_forward_rel.7} parent=0 // pred_check_branch
    %1911 = sbr.rel (0) target = $region29
  $region28: #{_device_forward_rel.7} parent=0 // pred_region
    _
  $region29: #{_device_forward_rel.7} parent=0 // pred_fallthru
    _

</llo_original>
